<compile_context>
chip_gen: v5e
topology: v5e:2x2
jax: 0.10.0
libtpu: 0.0.40
codegen_flags: <defaults>
</compile_context>

<pallas_src>
import jax
import jax.numpy as jnp
from jax.experimental import pallas as pl
from jax.experimental.pallas import tpu as pltpu

C_MID = 32                       # hidden channels
K_COL = 9 * C_MID                # fused im2col K for conv2 (288)
_TAPS = tuple((dy, dx) for dy in (-1, 0, 1) for dx in (-1, 0, 1))


def _cdiv(a, b):
    return -(-a // b)


def _plan(num_images, hw):
    """Static tiling plan -> (images_per_chunk, images_per_grid_step, grid_steps)."""
    ipc = max(1, 512 // hw)                         # ~512-lane in-kernel chunks
    nb = max(ipc, _cdiv(2048, hw))                  # ~2048+ lanes per grid step
    nb = _cdiv(nb, ipc) * ipc
    nb = min(nb, _cdiv(num_images, ipc) * ipc)      # do not over-pad the batch
    if num_images < 2 * nb and num_images >= 2 * ipc:
        # keep >= 2 (roughly balanced) grid steps: v7x has two TensorCores
        nb = max(ipc, _cdiv(_cdiv(num_images, 2), ipc) * ipc)
    return ipc, nb, _cdiv(num_images, nb)


def make_primal_kernel(img_w, chunk, n_chunks):
    """Fused 3-conv PrimalNet kernel; one grid step = n_chunks lane-chunks."""

    def kernel(mask_ref, x_ref, w1_ref, b1_ref, a1_ref,
               w2_ref, b2_ref, a2_ref, w3_ref, b3_ref,
               out_ref, upd_ref, act_ref, xcol_ref, col_ref):

        # conv1 tap-stack pad rows (9..15) must be zero (0*NaN of stale VMEM
        # would poison the matmul).  Done every step (cheap: 7 rows) so it also
        # holds on whichever core a "parallel" step lands on.
        xcol_ref[9:, :] = jnp.zeros((16 - 9, chunk), jnp.float32)

        def tap(v, t):
            """Shifted window: tap[i] = v[i + dy*W + dx], zero outside the image."""
            dy, dx = _TAPS[t]
            s = dy * img_w + dx
            if s == 0:
                return v
            rolled = pltpu.roll(v, shift=(-s) % chunk, axis=1)  # out[i] = v[i+s]
            return rolled * mask_ref[t:t + 1, :]

        def prelu(z, alpha):
            return jnp.where(z > 0.0, z, alpha * z)

        for c in range(n_chunks):
            sl = slice(c * chunk, (c + 1) * chunk)
            x = x_ref[0, :, sl]                                  # (1, chunk)

            # ---- conv1: 1 -> 32 on the MXU via a (16, chunk) tap stack ----
            for t in range(9):
                xcol_ref[t:t + 1, :] = tap(x, t)
            z1 = jnp.dot(w1_ref[...], xcol_ref[...],
                         preferred_element_type=jnp.float32) + b1_ref[...]
            act_ref[...] = prelu(z1, a1_ref[...])                # PReLU1 -> VMEM

            # ---- conv2: 32 -> 32 as ONE fused K=288 MXU matmul ----
            for t in range(9):
                col_ref[t * C_MID:(t + 1) * C_MID, :] = tap(act_ref[...], t)
            z2 = jnp.dot(w2_ref[...], col_ref[...],
                         preferred_element_type=jnp.float32) + b2_ref[...]
            act_ref[...] = prelu(z2, a2_ref[...])                # PReLU2 -> VMEM

            # ---- conv3: 32 -> 1 as 9 accumulated (8,32)@(32,chunk) matmuls ----
            # (no second im2col writeback -> half the vst traffic of v1)
            res = jnp.zeros((8, chunk), jnp.float32)
            for t in range(9):
                res = res + jnp.dot(w3_ref[t], tap(act_ref[...], t),
                                    preferred_element_type=jnp.float32)
            upd = res[0:1, :] + b3_ref[...]

            upd_ref[0, :, sl] = upd.astype(upd_ref.dtype)         # lane-dense
            out_ref[0, :, sl] = (x + upd).astype(out_ref.dtype)   # residual add

    return kernel


@jax.jit
def primal_net_forward(primal_nchw, params):
    """PrimalNet forward: returns (primal + update, update), both NCHW."""
    N, C, H, W = primal_nchw.shape
    assert C == 1
    HW = H * W
    ipc, nb, G = _plan(N, HW)
    CHUNK = ipc * HW
    L = nb * HW
    n_chunks = nb // ipc

    # pad the batch to G*nb images (padded images are zeros, results discarded)
    x_flat = primal_nchw.astype(jnp.float32).reshape(N, HW)
    n_pad = G * nb
    if n_pad != N:
        x_flat = jnp.concatenate(
            [x_flat, jnp.zeros((n_pad - N, HW), jnp.float32)], axis=0)
    x_grp = x_flat.reshape(G, 1, L)

    # per-tap validity masks (implement conv zero padding), tiled per chunk
    hh = jnp.arange(HW, dtype=jnp.int32) // W
    ww = jnp.arange(HW, dtype=jnp.int32) % W
    rows = [((hh + dy >= 0) & (hh + dy < H) & (ww + dx >= 0) & (ww + dx < W))
            for (dy, dx) in _TAPS]
    mask9 = jnp.tile(jnp.stack(rows).astype(jnp.float32), (1, ipc))    # (9, CHUNK)

    # pack conv weights for the in-kernel layouts (pure glue, runs in XLA)
    w1p = jnp.concatenate([params["w1"].reshape(C_MID, 9),
                           jnp.zeros((C_MID, 7), jnp.float32)], axis=1)  # (32, 16)
    w2p = jnp.transpose(params["w2"], (0, 2, 3, 1)).reshape(C_MID, K_COL)
    w3r = jnp.transpose(params["w3"], (0, 2, 3, 1)).reshape(9, C_MID)    # (9, 32)
    w3p = jnp.zeros((9, 8, C_MID), jnp.float32).at[:, 0, :].set(w3r)     # (9, 8, 32)
    b1 = params["b1"].reshape(C_MID, 1)
    a1 = params["a1"].reshape(C_MID, 1)
    b2 = params["b2"].reshape(C_MID, 1)
    a2 = params["a2"].reshape(C_MID, 1)
    b3 = params["b3"].reshape(1, 1)

    c2 = lambda g: (0, 0)
    c3 = lambda g: (0, 0, 0)
    out_grp, upd_grp = pl.pallas_call(
        make_primal_kernel(W, CHUNK, n_chunks),
        out_shape=(jax.ShapeDtypeStruct((G, 1, L), jnp.float32),
                   jax.ShapeDtypeStruct((G, 1, L), jnp.float32)),
        grid_spec=pltpu.PrefetchScalarGridSpec(
            num_scalar_prefetch=0,
            grid=(G,),
            in_specs=[
                pl.BlockSpec((9, CHUNK), c2),                   # tap masks
                pl.BlockSpec((1, 1, L), lambda g: (g, 0, 0)),   # x (lane-dense)
                pl.BlockSpec((C_MID, 16), c2),                  # w1 (K padded to 16)
                pl.BlockSpec((C_MID, 1), c2),                   # b1
                pl.BlockSpec((C_MID, 1), c2),                   # PReLU alpha1
                pl.BlockSpec((C_MID, K_COL), c2),               # w2 (K = 288)
                pl.BlockSpec((C_MID, 1), c2),                   # b2
                pl.BlockSpec((C_MID, 1), c2),                   # PReLU alpha2
                pl.BlockSpec((9, 8, C_MID), c3),                # w3 per-tap (M padded)
                pl.BlockSpec((1, 1), c2),                       # b3
            ],
            out_specs=[
                pl.BlockSpec((1, 1, L), lambda g: (g, 0, 0)),   # updated primal
                pl.BlockSpec((1, 1, L), lambda g: (g, 0, 0)),   # update
            ],
            scratch_shapes=[
                pltpu.VMEM((C_MID, CHUNK), jnp.float32),        # act1 / act2
                pltpu.VMEM((16, CHUNK), jnp.float32),           # conv1 tap stack
                pltpu.VMEM((K_COL, CHUNK), jnp.float32),        # conv2 im2col
            ],
        ),
        # DMA is not the bottleneck (per-step HBM traffic ~12*L*4 B); default
        # double-buffering and default scoped-VMEM limits are plenty here.
        compiler_params=pltpu.CompilerParams(
            dimension_semantics=("parallel",)),
    )(mask9, x_grp, w1p, b1, a1, w2p, b2, a2, w3p, b3)

    updated = out_grp.reshape(n_pad, 1, H, W)[:N]
    update = upd_grp.reshape(n_pad, 1, H, W)[:N]
    return updated, update


def make_params(key):
    """Deterministic parameter init matching PrimalNet.__init__/_init_weights:
    Conv2d weights xavier_uniform, biases zero, PReLU alphas = 0.0."""
    k1, k2, k3 = jax.random.split(key, 3)

    def xavier(k, shape_oihw):
        o, i, kh, kw = shape_oihw
        fan_in = i * kh * kw
        fan_out = o * kh * kw
        bound = (6.0 / (fan_in + fan_out)) ** 0.5
        return jax.random.uniform(k, shape_oihw, jnp.float32, -bound, bound)

    return {
        "w1": xavier(k1, (C_MID, 1, 3, 3)),
        "b1": jnp.zeros((C_MID,), jnp.float32),
        "a1": jnp.zeros((C_MID,), jnp.float32),     # PReLU init=0.0
        "w2": xavier(k2, (C_MID, C_MID, 3, 3)),
        "b2": jnp.zeros((C_MID,), jnp.float32),
        "a2": jnp.zeros((C_MID,), jnp.float32),
        "w3": xavier(k3, (1, C_MID, 3, 3)),
        "b3": jnp.zeros((1,), jnp.float32),
    }


def ref_forward(x_nchw, p):
    """Pure-JAX reference (XLA conv), semantics identical to the PyTorch module."""
    def conv(x, w, b):
        y = jax.lax.conv_general_dilated(
            x, w, window_strides=(1, 1), padding=((1, 1), (1, 1)),
            dimension_numbers=("NCHW", "OIHW", "NCHW"))
        return y + b[None, :, None, None]

    r = conv(x_nchw, p["w1"], p["b1"])
    r = jnp.where(r > 0, r, p["a1"][None, :, None, None] * r)
    r = conv(r, p["w2"], p["b2"])
    r = jnp.where(r > 0, r, p["a2"][None, :, None, None] * r)
    r = conv(r, p["w3"], p["b3"])
    return x_nchw + r, r


if __name__ == "__main__":
    key = jax.random.PRNGKey(0)
    kx, kp, ka = jax.random.split(key, 3)

    params = make_params(kp)
    # Exercise the PReLU negative-slope path too (alphas are learnable; the
    # module's init is 0.0 — forward semantics are unchanged).
    ka1, ka2 = jax.random.split(ka)
    params["a1"] = 0.25 * jax.random.normal(ka1, (C_MID,), jnp.float32)
    params["a2"] = 0.25 * jax.random.normal(ka2, (C_MID,), jnp.float32)

    # N=2: single grid step; N=5: exercises batch padding and a 2-step grid.
    for n in (2, 5):
        x = jax.random.normal(jax.random.fold_in(kx, n), (n, 1, 16, 16),
                              jnp.float32)
        updated, update = primal_net_forward(x, params)
        jax.block_until_ready((updated, update))

        ref_updated, ref_update = ref_forward(x, params)
        assert updated.shape == x.shape and update.shape == x.shape
        assert jnp.allclose(updated, ref_updated, atol=1e-4, rtol=1e-4)
        assert jnp.allclose(update, ref_update, atol=1e-4, rtol=1e-4)

    print("KERNEL_OK")
</pallas_src>

<mosaic_0001>
module attributes {stable_mosaic.version = 11 : i64} {
  func.func @kernel(%arg0: i32, %arg1: memref<9x512xf32, #tpu.memory_space<vmem>>, %arg2: memref<1x1x512xf32, #tpu.memory_space<vmem>>, %arg3: memref<32x16xf32, #tpu.memory_space<vmem>>, %arg4: memref<32x1xf32, #tpu.memory_space<vmem>>, %arg5: memref<32x1xf32, #tpu.memory_space<vmem>>, %arg6: memref<32x288xf32, #tpu.memory_space<vmem>>, %arg7: memref<32x1xf32, #tpu.memory_space<vmem>>, %arg8: memref<32x1xf32, #tpu.memory_space<vmem>>, %arg9: memref<9x8x32xf32, #tpu.memory_space<vmem>>, %arg10: memref<1x1xf32, #tpu.memory_space<vmem>>, %arg11: memref<1x1x512xf32, #tpu.memory_space<vmem>>, %arg12: memref<1x1x512xf32, #tpu.memory_space<vmem>>, %arg13: memref<32x512xf32, #tpu.memory_space<vmem>>, %arg14: memref<16x512xf32, #tpu.memory_space<vmem>>, %arg15: memref<288x512xf32, #tpu.memory_space<vmem>>) attributes {dimension_semantics = [#tpu.dimension_semantics<parallel>], iteration_bounds = array<i64: 1>, scalar_prefetch = 0 : i64, scratch_operands = 3 : i64, tpu.core_type = #tpu.core_type<tc>, window_params = [{pipeline_mode = #tpu.pipeline_mode<synchronous>, transform_indices = @transform_0, window_bounds = array<i64: 9, 512>}, {transform_indices = @transform_1, window_bounds = array<i64: 1, 1, 512>}, {pipeline_mode = #tpu.pipeline_mode<synchronous>, transform_indices = @transform_2, window_bounds = array<i64: 32, 16>}, {pipeline_mode = #tpu.pipeline_mode<synchronous>, transform_indices = @transform_3, window_bounds = array<i64: 32, 1>}, {pipeline_mode = #tpu.pipeline_mode<synchronous>, transform_indices = @transform_4, window_bounds = array<i64: 32, 1>}, {pipeline_mode = #tpu.pipeline_mode<synchronous>, transform_indices = @transform_5, window_bounds = array<i64: 32, 288>}, {pipeline_mode = #tpu.pipeline_mode<synchronous>, transform_indices = @transform_6, window_bounds = array<i64: 32, 1>}, {pipeline_mode = #tpu.pipeline_mode<synchronous>, transform_indices = @transform_7, window_bounds = array<i64: 32, 1>}, {pipeline_mode = #tpu.pipeline_mode<synchronous>, transform_indices = @transform_8, window_bounds = array<i64: 9, 8, 32>}, {pipeline_mode = #tpu.pipeline_mode<synchronous>, transform_indices = @transform_9, window_bounds = array<i64: 1, 1>}, {transform_indices = @transform_10, window_bounds = array<i64: 1, 1, 512>}, {transform_indices = @transform_11, window_bounds = array<i64: 1, 1, 512>}]} {
    %cst = arith.constant 0.000000e+00 : f32
    %0 = vector.broadcast %cst : f32 to vector<7x512xf32>
    %c9 = arith.constant 9 : index
    %c0 = arith.constant 0 : index
    %1 = vector.load %arg14[%c9, %c0] : memref<16x512xf32, #tpu.memory_space<vmem>>, vector<7x512xf32>
    tpu.vector_store %arg14[%c9, %c0], %0 {strides = array<i32>} : memref<16x512xf32, #tpu.memory_space<vmem>>, vector<7x512xf32>,
    %c0_0 = arith.constant 0 : index
    %c0_1 = arith.constant 0 : index
    %c0_2 = arith.constant 0 : index
    %2 = vector.load %arg2[%c0_0, %c0_1, %c0_2] : memref<1x1x512xf32, #tpu.memory_space<vmem>>, vector<1x1x512xf32>
    %3 = vector.shape_cast %2 : vector<1x1x512xf32> to vector<1x512xf32>
    %c17_i32 = arith.constant 17 : i32
    %4 = tpu.dynamic_rotate %3 by %c17_i32 dim 1 : vector<1x512xf32>, i32 -> vector<1x512xf32>
    %c0_3 = arith.constant 0 : index
    %c0_4 = arith.constant 0 : index
    %5 = vector.load %arg1[%c0_3, %c0_4] : memref<9x512xf32, #tpu.memory_space<vmem>>, vector<1x512xf32>
    %6 = arith.mulf %4, %5 : vector<1x512xf32>
    %c0_5 = arith.constant 0 : index
    %c0_6 = arith.constant 0 : index
    %7 = vector.load %arg14[%c0_5, %c0_6] : memref<16x512xf32, #tpu.memory_space<vmem>>, vector<1x512xf32>
    tpu.vector_store %arg14[%c0_5, %c0_6], %6 {strides = array<i32>} : memref<16x512xf32, #tpu.memory_space<vmem>>, vector<1x512xf32>,
    %c16_i32 = arith.constant 16 : i32
    %8 = tpu.dynamic_rotate %3 by %c16_i32 dim 1 : vector<1x512xf32>, i32 -> vector<1x512xf32>
    %c1 = arith.constant 1 : index
    %c0_7 = arith.constant 0 : index
    %9 = vector.load %arg1[%c1, %c0_7] : memref<9x512xf32, #tpu.memory_space<vmem>>, vector<1x512xf32>
    %10 = arith.mulf %8, %9 : vector<1x512xf32>
    %c1_8 = arith.constant 1 : index
    %c0_9 = arith.constant 0 : index
    %11 = vector.load %arg14[%c1_8, %c0_9] : memref<16x512xf32, #tpu.memory_space<vmem>>, vector<1x512xf32>
    tpu.vector_store %arg14[%c1_8, %c0_9], %10 {strides = array<i32>} : memref<16x512xf32, #tpu.memory_space<vmem>>, vector<1x512xf32>,
    %c15_i32 = arith.constant 15 : i32
    %12 = tpu.dynamic_rotate %3 by %c15_i32 dim 1 : vector<1x512xf32>, i32 -> vector<1x512xf32>
    %c2 = arith.constant 2 : index
    %c0_10 = arith.constant 0 : index
    %13 = vector.load %arg1[%c2, %c0_10] : memref<9x512xf32, #tpu.memory_space<vmem>>, vector<1x512xf32>
    %14 = arith.mulf %12, %13 : vector<1x512xf32>
    %c2_11 = arith.constant 2 : index
    %c0_12 = arith.constant 0 : index
    %15 = vector.load %arg14[%c2_11, %c0_12] : memref<16x512xf32, #tpu.memory_space<vmem>>, vector<1x512xf32>
    tpu.vector_store %arg14[%c2_11, %c0_12], %14 {strides = array<i32>} : memref<16x512xf32, #tpu.memory_space<vmem>>, vector<1x512xf32>,
    %c1_i32 = arith.constant 1 : i32
    %16 = tpu.dynamic_rotate %3 by %c1_i32 dim 1 : vector<1x512xf32>, i32 -> vector<1x512xf32>
    %c3 = arith.constant 3 : index
    %c0_13 = arith.constant 0 : index
    %17 = vector.load %arg1[%c3, %c0_13] : memref<9x512xf32, #tpu.memory_space<vmem>>, vector<1x512xf32>
    %18 = arith.mulf %16, %17 : vector<1x512xf32>
    %c3_14 = arith.constant 3 : index
    %c0_15 = arith.constant 0 : index
    %19 = vector.load %arg14[%c3_14, %c0_15] : memref<16x512xf32, #tpu.memory_space<vmem>>, vector<1x512xf32>
    tpu.vector_store %arg14[%c3_14, %c0_15], %18 {strides = array<i32>} : memref<16x512xf32, #tpu.memory_space<vmem>>, vector<1x512xf32>,
    %c4 = arith.constant 4 : index
    %c0_16 = arith.constant 0 : index
    %20 = vector.load %arg14[%c4, %c0_16] : memref<16x512xf32, #tpu.memory_space<vmem>>, vector<1x512xf32>
    tpu.vector_store %arg14[%c4, %c0_16], %3 {strides = array<i32>} : memref<16x512xf32, #tpu.memory_space<vmem>>, vector<1x512xf32>,
    %c511_i32 = arith.constant 511 : i32
    %21 = tpu.dynamic_rotate %3 by %c511_i32 dim 1 : vector<1x512xf32>, i32 -> vector<1x512xf32>
    %c5 = arith.constant 5 : index
    %c0_17 = arith.constant 0 : index
    %22 = vector.load %arg1[%c5, %c0_17] : memref<9x512xf32, #tpu.memory_space<vmem>>, vector<1x512xf32>
    %23 = arith.mulf %21, %22 : vector<1x512xf32>
    %c5_18 = arith.constant 5 : index
    %c0_19 = arith.constant 0 : index
    %24 = vector.load %arg14[%c5_18, %c0_19] : memref<16x512xf32, #tpu.memory_space<vmem>>, vector<1x512xf32>
    tpu.vector_store %arg14[%c5_18, %c0_19], %23 {strides = array<i32>} : memref<16x512xf32, #tpu.memory_space<vmem>>, vector<1x512xf32>,
    %c497_i32 = arith.constant 497 : i32
    %25 = tpu.dynamic_rotate %3 by %c497_i32 dim 1 : vector<1x512xf32>, i32 -> vector<1x512xf32>
    %c6 = arith.constant 6 : index
    %c0_20 = arith.constant 0 : index
    %26 = vector.load %arg1[%c6, %c0_20] : memref<9x512xf32, #tpu.memory_space<vmem>>, vector<1x512xf32>
    %27 = arith.mulf %25, %26 : vector<1x512xf32>
    %c6_21 = arith.constant 6 : index
    %c0_22 = arith.constant 0 : index
    %28 = vector.load %arg14[%c6_21, %c0_22] : memref<16x512xf32, #tpu.memory_space<vmem>>, vector<1x512xf32>
    tpu.vector_store %arg14[%c6_21, %c0_22], %27 {strides = array<i32>} : memref<16x512xf32, #tpu.memory_space<vmem>>, vector<1x512xf32>,
    %c496_i32 = arith.constant 496 : i32
    %29 = tpu.dynamic_rotate %3 by %c496_i32 dim 1 : vector<1x512xf32>, i32 -> vector<1x512xf32>
    %c7 = arith.constant 7 : index
    %c0_23 = arith.constant 0 : index
    %30 = vector.load %arg1[%c7, %c0_23] : memref<9x512xf32, #tpu.memory_space<vmem>>, vector<1x512xf32>
    %31 = arith.mulf %29, %30 : vector<1x512xf32>
    %c7_24 = arith.constant 7 : index
    %c0_25 = arith.constant 0 : index
    %32 = vector.load %arg14[%c7_24, %c0_25] : memref<16x512xf32, #tpu.memory_space<vmem>>, vector<1x512xf32>
    tpu.vector_store %arg14[%c7_24, %c0_25], %31 {strides = array<i32>} : memref<16x512xf32, #tpu.memory_space<vmem>>, vector<1x512xf32>,
    %c495_i32 = arith.constant 495 : i32
    %33 = tpu.dynamic_rotate %3 by %c495_i32 dim 1 : vector<1x512xf32>, i32 -> vector<1x512xf32>
    %c8 = arith.constant 8 : index
    %c0_26 = arith.constant 0 : index
    %34 = vector.load %arg1[%c8, %c0_26] : memref<9x512xf32, #tpu.memory_space<vmem>>, vector<1x512xf32>
    %35 = arith.mulf %33, %34 : vector<1x512xf32>
    %c8_27 = arith.constant 8 : index
    %c0_28 = arith.constant 0 : index
    %36 = vector.load %arg14[%c8_27, %c0_28] : memref<16x512xf32, #tpu.memory_space<vmem>>, vector<1x512xf32>
    tpu.vector_store %arg14[%c8_27, %c0_28], %35 {strides = array<i32>} : memref<16x512xf32, #tpu.memory_space<vmem>>, vector<1x512xf32>,
    %c0_29 = arith.constant 0 : index
    %c0_30 = arith.constant 0 : index
    %37 = vector.load %arg3[%c0_29, %c0_30] : memref<32x16xf32, #tpu.memory_space<vmem>>, vector<32x16xf32>
    %c0_31 = arith.constant 0 : index
    %c0_32 = arith.constant 0 : index
    %38 = vector.load %arg14[%c0_31, %c0_32] : memref<16x512xf32, #tpu.memory_space<vmem>>, vector<16x512xf32>
    %cst_33 = arith.constant dense<0.000000e+00> : vector<32x512xf32>
    %39 = tpu.matmul %37, %38, %cst_33 {dimension_numbers = #tpu.dot_dimension_numbers<[1], [0], [0], [1], [0, 0, 1, 1], [], []>} : vector<32x16xf32>, vector<16x512xf32>, vector<32x512xf32> -> vector<32x512xf32>
    %c0_34 = arith.constant 0 : index
    %c0_35 = arith.constant 0 : index
    %40 = vector.load %arg4[%c0_34, %c0_35] : memref<32x1xf32, #tpu.memory_space<vmem>>, vector<32x1xf32>
    %41 = vector.broadcast %40 : vector<32x1xf32> to vector<32x512xf32>
    %42 = arith.addf %39, %41 : vector<32x512xf32>
    %c0_36 = arith.constant 0 : index
    %c0_37 = arith.constant 0 : index
    %43 = vector.load %arg5[%c0_36, %c0_37] : memref<32x1xf32, #tpu.memory_space<vmem>>, vector<32x1xf32>
    %cst_38 = arith.constant 0.000000e+00 : f32
    %44 = vector.broadcast %cst_38 : f32 to vector<32x512xf32>
    %45 = arith.cmpf ogt, %42, %44 : vector<32x512xf32>
    %46 = vector.broadcast %43 : vector<32x1xf32> to vector<32x512xf32>
    %47 = arith.mulf %46, %42 : vector<32x512xf32>
    %48 = arith.select %45, %42, %47 : vector<32x512xi1>, vector<32x512xf32>
    %c0_39 = arith.constant 0 : index
    %c0_40 = arith.constant 0 : index
    %49 = vector.load %arg13[%c0_39, %c0_40] : memref<32x512xf32, #tpu.memory_space<vmem>>, vector<32x512xf32>
    tpu.vector_store %arg13[%c0_39, %c0_40], %48 {strides = array<i32>} : memref<32x512xf32, #tpu.memory_space<vmem>>, vector<32x512xf32>,
    %c0_41 = arith.constant 0 : index
    %c0_42 = arith.constant 0 : index
    %50 = vector.load %arg13[%c0_41, %c0_42] : memref<32x512xf32, #tpu.memory_space<vmem>>, vector<32x512xf32>
    %c17_i32_43 = arith.constant 17 : i32
    %51 = tpu.dynamic_rotate %50 by %c17_i32_43 dim 1 : vector<32x512xf32>, i32 -> vector<32x512xf32>
    %c0_44 = arith.constant 0 : index
    %c0_45 = arith.constant 0 : index
    %52 = vector.load %arg1[%c0_44, %c0_45] : memref<9x512xf32, #tpu.memory_space<vmem>>, vector<1x512xf32>
    %53 = vector.broadcast %52 : vector<1x512xf32> to vector<32x512xf32>
    %54 = arith.mulf %51, %53 : vector<32x512xf32>
    %c0_46 = arith.constant 0 : index
    %c0_47 = arith.constant 0 : index
    %55 = vector.load %arg15[%c0_46, %c0_47] : memref<288x512xf32, #tpu.memory_space<vmem>>, vector<32x512xf32>
    tpu.vector_store %arg15[%c0_46, %c0_47], %54 {strides = array<i32>} : memref<288x512xf32, #tpu.memory_space<vmem>>, vector<32x512xf32>,
    %c0_48 = arith.constant 0 : index
    %c0_49 = arith.constant 0 : index
    %56 = vector.load %arg13[%c0_48, %c0_49] : memref<32x512xf32, #tpu.memory_space<vmem>>, vector<32x512xf32>
    %c16_i32_50 = arith.constant 16 : i32
    %57 = tpu.dynamic_rotate %56 by %c16_i32_50 dim 1 : vector<32x512xf32>, i32 -> vector<32x512xf32>
    %c1_51 = arith.constant 1 : index
    %c0_52 = arith.constant 0 : index
    %58 = vector.load %arg1[%c1_51, %c0_52] : memref<9x512xf32, #tpu.memory_space<vmem>>, vector<1x512xf32>
    %59 = vector.broadcast %58 : vector<1x512xf32> to vector<32x512xf32>
    %60 = arith.mulf %57, %59 : vector<32x512xf32>
    %c32 = arith.constant 32 : index
    %c0_53 = arith.constant 0 : index
    %61 = vector.load %arg15[%c32, %c0_53] : memref<288x512xf32, #tpu.memory_space<vmem>>, vector<32x512xf32>
    tpu.vector_store %arg15[%c32, %c0_53], %60 {strides = array<i32>} : memref<288x512xf32, #tpu.memory_space<vmem>>, vector<32x512xf32>,
    %c0_54 = arith.constant 0 : index
    %c0_55 = arith.constant 0 : index
    %62 = vector.load %arg13[%c0_54, %c0_55] : memref<32x512xf32, #tpu.memory_space<vmem>>, vector<32x512xf32>
    %c15_i32_56 = arith.constant 15 : i32
    %63 = tpu.dynamic_rotate %62 by %c15_i32_56 dim 1 : vector<32x512xf32>, i32 -> vector<32x512xf32>
    %c2_57 = arith.constant 2 : index
    %c0_58 = arith.constant 0 : index
    %64 = vector.load %arg1[%c2_57, %c0_58] : memref<9x512xf32, #tpu.memory_space<vmem>>, vector<1x512xf32>
    %65 = vector.broadcast %64 : vector<1x512xf32> to vector<32x512xf32>
    %66 = arith.mulf %63, %65 : vector<32x512xf32>
    %c64 = arith.constant 64 : index
    %c0_59 = arith.constant 0 : index
    %67 = vector.load %arg15[%c64, %c0_59] : memref<288x512xf32, #tpu.memory_space<vmem>>, vector<32x512xf32>
    tpu.vector_store %arg15[%c64, %c0_59], %66 {strides = array<i32>} : memref<288x512xf32, #tpu.memory_space<vmem>>, vector<32x512xf32>,
    %c0_60 = arith.constant 0 : index
    %c0_61 = arith.constant 0 : index
    %68 = vector.load %arg13[%c0_60, %c0_61] : memref<32x512xf32, #tpu.memory_space<vmem>>, vector<32x512xf32>
    %c1_i32_62 = arith.constant 1 : i32
    %69 = tpu.dynamic_rotate %68 by %c1_i32_62 dim 1 : vector<32x512xf32>, i32 -> vector<32x512xf32>
    %c3_63 = arith.constant 3 : index
    %c0_64 = arith.constant 0 : index
    %70 = vector.load %arg1[%c3_63, %c0_64] : memref<9x512xf32, #tpu.memory_space<vmem>>, vector<1x512xf32>
    %71 = vector.broadcast %70 : vector<1x512xf32> to vector<32x512xf32>
    %72 = arith.mulf %69, %71 : vector<32x512xf32>
    %c96 = arith.constant 96 : index
    %c0_65 = arith.constant 0 : index
    %73 = vector.load %arg15[%c96, %c0_65] : memref<288x512xf32, #tpu.memory_space<vmem>>, vector<32x512xf32>
    tpu.vector_store %arg15[%c96, %c0_65], %72 {strides = array<i32>} : memref<288x512xf32, #tpu.memory_space<vmem>>, vector<32x512xf32>,
    %c0_66 = arith.constant 0 : index
    %c0_67 = arith.constant 0 : index
    %74 = vector.load %arg13[%c0_66, %c0_67] : memref<32x512xf32, #tpu.memory_space<vmem>>, vector<32x512xf32>
    %c128 = arith.constant 128 : index
    %c0_68 = arith.constant 0 : index
    %75 = vector.load %arg15[%c128, %c0_68] : memref<288x512xf32, #tpu.memory_space<vmem>>, vector<32x512xf32>
    tpu.vector_store %arg15[%c128, %c0_68], %74 {strides = array<i32>} : memref<288x512xf32, #tpu.memory_space<vmem>>, vector<32x512xf32>,
    %c0_69 = arith.constant 0 : index
    %c0_70 = arith.constant 0 : index
    %76 = vector.load %arg13[%c0_69, %c0_70] : memref<32x512xf32, #tpu.memory_space<vmem>>, vector<32x512xf32>
    %c511_i32_71 = arith.constant 511 : i32
    %77 = tpu.dynamic_rotate %76 by %c511_i32_71 dim 1 : vector<32x512xf32>, i32 -> vector<32x512xf32>
    %c5_72 = arith.constant 5 : index
    %c0_73 = arith.constant 0 : index
    %78 = vector.load %arg1[%c5_72, %c0_73] : memref<9x512xf32, #tpu.memory_space<vmem>>, vector<1x512xf32>
    %79 = vector.broadcast %78 : vector<1x512xf32> to vector<32x512xf32>
    %80 = arith.mulf %77, %79 : vector<32x512xf32>
    %c160 = arith.constant 160 : index
    %c0_74 = arith.constant 0 : index
    %81 = vector.load %arg15[%c160, %c0_74] : memref<288x512xf32, #tpu.memory_space<vmem>>, vector<32x512xf32>
    tpu.vector_store %arg15[%c160, %c0_74], %80 {strides = array<i32>} : memref<288x512xf32, #tpu.memory_space<vmem>>, vector<32x512xf32>,
    %c0_75 = arith.constant 0 : index
    %c0_76 = arith.constant 0 : index
    %82 = vector.load %arg13[%c0_75, %c0_76] : memref<32x512xf32, #tpu.memory_space<vmem>>, vector<32x512xf32>
    %c497_i32_77 = arith.constant 497 : i32
    %83 = tpu.dynamic_rotate %82 by %c497_i32_77 dim 1 : vector<32x512xf32>, i32 -> vector<32x512xf32>
    %c6_78 = arith.constant 6 : index
    %c0_79 = arith.constant 0 : index
    %84 = vector.load %arg1[%c6_78, %c0_79] : memref<9x512xf32, #tpu.memory_space<vmem>>, vector<1x512xf32>
    %85 = vector.broadcast %84 : vector<1x512xf32> to vector<32x512xf32>
    %86 = arith.mulf %83, %85 : vector<32x512xf32>
    %c192 = arith.constant 192 : index
    %c0_80 = arith.constant 0 : index
    %87 = vector.load %arg15[%c192, %c0_80] : memref<288x512xf32, #tpu.memory_space<vmem>>, vector<32x512xf32>
    tpu.vector_store %arg15[%c192, %c0_80], %86 {strides = array<i32>} : memref<288x512xf32, #tpu.memory_space<vmem>>, vector<32x512xf32>,
    %c0_81 = arith.constant 0 : index
    %c0_82 = arith.constant 0 : index
    %88 = vector.load %arg13[%c0_81, %c0_82] : memref<32x512xf32, #tpu.memory_space<vmem>>, vector<32x512xf32>
    %c496_i32_83 = arith.constant 496 : i32
    %89 = tpu.dynamic_rotate %88 by %c496_i32_83 dim 1 : vector<32x512xf32>, i32 -> vector<32x512xf32>
    %c7_84 = arith.constant 7 : index
    %c0_85 = arith.constant 0 : index
    %90 = vector.load %arg1[%c7_84, %c0_85] : memref<9x512xf32, #tpu.memory_space<vmem>>, vector<1x512xf32>
    %91 = vector.broadcast %90 : vector<1x512xf32> to vector<32x512xf32>
    %92 = arith.mulf %89, %91 : vector<32x512xf32>
    %c224 = arith.constant 224 : index
    %c0_86 = arith.constant 0 : index
    %93 = vector.load %arg15[%c224, %c0_86] : memref<288x512xf32, #tpu.memory_space<vmem>>, vector<32x512xf32>
    tpu.vector_store %arg15[%c224, %c0_86], %92 {strides = array<i32>} : memref<288x512xf32, #tpu.memory_space<vmem>>, vector<32x512xf32>,
    %c0_87 = arith.constant 0 : index
    %c0_88 = arith.constant 0 : index
    %94 = vector.load %arg13[%c0_87, %c0_88] : memref<32x512xf32, #tpu.memory_space<vmem>>, vector<32x512xf32>
    %c495_i32_89 = arith.constant 495 : i32
    %95 = tpu.dynamic_rotate %94 by %c495_i32_89 dim 1 : vector<32x512xf32>, i32 -> vector<32x512xf32>
    %c8_90 = arith.constant 8 : index
    %c0_91 = arith.constant 0 : index
    %96 = vector.load %arg1[%c8_90, %c0_91] : memref<9x512xf32, #tpu.memory_space<vmem>>, vector<1x512xf32>
    %97 = vector.broadcast %96 : vector<1x512xf32> to vector<32x512xf32>
    %98 = arith.mulf %95, %97 : vector<32x512xf32>
    %c256 = arith.constant 256 : index
    %c0_92 = arith.constant 0 : index
    %99 = vector.load %arg15[%c256, %c0_92] : memref<288x512xf32, #tpu.memory_space<vmem>>, vector<32x512xf32>
    tpu.vector_store %arg15[%c256, %c0_92], %98 {strides = array<i32>} : memref<288x512xf32, #tpu.memory_space<vmem>>, vector<32x512xf32>,
    %c0_93 = arith.constant 0 : index
    %c0_94 = arith.constant 0 : index
    %100 = vector.load %arg6[%c0_93, %c0_94] : memref<32x288xf32, #tpu.memory_space<vmem>>, vector<32x288xf32>
    %c0_95 = arith.constant 0 : index
    %c0_96 = arith.constant 0 : index
    %101 = vector.load %arg15[%c0_95, %c0_96] : memref<288x512xf32, #tpu.memory_space<vmem>>, vector<288x512xf32>
    %cst_97 = arith.constant dense<0.000000e+00> : vector<32x512xf32>
    %102 = tpu.matmul %100, %101, %cst_97 {dimension_numbers = #tpu.dot_dimension_numbers<[1], [0], [0], [1], [0, 0, 1, 1], [], []>} : vector<32x288xf32>, vector<288x512xf32>, vector<32x512xf32> -> vector<32x512xf32>
    %c0_98 = arith.constant 0 : index
    %c0_99 = arith.constant 0 : index
    %103 = vector.load %arg7[%c0_98, %c0_99] : memref<32x1xf32, #tpu.memory_space<vmem>>, vector<32x1xf32>
    %104 = vector.broadcast %103 : vector<32x1xf32> to vector<32x512xf32>
    %105 = arith.addf %102, %104 : vector<32x512xf32>
    %c0_100 = arith.constant 0 : index
    %c0_101 = arith.constant 0 : index
    %106 = vector.load %arg8[%c0_100, %c0_101] : memref<32x1xf32, #tpu.memory_space<vmem>>, vector<32x1xf32>
    %cst_102 = arith.constant 0.000000e+00 : f32
    %107 = vector.broadcast %cst_102 : f32 to vector<32x512xf32>
    %108 = arith.cmpf ogt, %105, %107 : vector<32x512xf32>
    %109 = vector.broadcast %106 : vector<32x1xf32> to vector<32x512xf32>
    %110 = arith.mulf %109, %105 : vector<32x512xf32>
    %111 = arith.select %108, %105, %110 : vector<32x512xi1>, vector<32x512xf32>
    %c0_103 = arith.constant 0 : index
    %c0_104 = arith.constant 0 : index
    %112 = vector.load %arg13[%c0_103, %c0_104] : memref<32x512xf32, #tpu.memory_space<vmem>>, vector<32x512xf32>
    tpu.vector_store %arg13[%c0_103, %c0_104], %111 {strides = array<i32>} : memref<32x512xf32, #tpu.memory_space<vmem>>, vector<32x512xf32>,
    %cst_105 = arith.constant 0.000000e+00 : f32
    %113 = vector.broadcast %cst_105 : f32 to vector<8x512xf32>
    %c0_106 = arith.constant 0 : index
    %c0_107 = arith.constant 0 : index
    %c0_108 = arith.constant 0 : index
    %114 = vector.load %arg9[%c0_106, %c0_107, %c0_108] : memref<9x8x32xf32, #tpu.memory_space<vmem>>, vector<1x8x32xf32>
    %115 = vector.shape_cast %114 : vector<1x8x32xf32> to vector<8x32xf32>
    %c0_109 = arith.constant 0 : index
    %c0_110 = arith.constant 0 : index
    %116 = vector.load %arg13[%c0_109, %c0_110] : memref<32x512xf32, #tpu.memory_space<vmem>>, vector<32x512xf32>
    %c17_i32_111 = arith.constant 17 : i32
    %117 = tpu.dynamic_rotate %116 by %c17_i32_111 dim 1 : vector<32x512xf32>, i32 -> vector<32x512xf32>
    %c0_112 = arith.constant 0 : index
    %c0_113 = arith.constant 0 : index
    %118 = vector.load %arg1[%c0_112, %c0_113] : memref<9x512xf32, #tpu.memory_space<vmem>>, vector<1x512xf32>
    %119 = vector.broadcast %118 : vector<1x512xf32> to vector<32x512xf32>
    %120 = arith.mulf %117, %119 : vector<32x512xf32>
    %cst_114 = arith.constant dense<0.000000e+00> : vector<8x512xf32>
    %121 = tpu.matmul %115, %120, %cst_114 {dimension_numbers = #tpu.dot_dimension_numbers<[1], [0], [0], [1], [0, 0, 1, 1], [], []>} : vector<8x32xf32>, vector<32x512xf32>, vector<8x512xf32> -> vector<8x512xf32>
    %122 = arith.addf %113, %121 : vector<8x512xf32>
    %c1_115 = arith.constant 1 : index
    %c0_116 = arith.constant 0 : index
    %c0_117 = arith.constant 0 : index
    %123 = vector.load %arg9[%c1_115, %c0_116, %c0_117] : memref<9x8x32xf32, #tpu.memory_space<vmem>>, vector<1x8x32xf32>
    %124 = vector.shape_cast %123 : vector<1x8x32xf32> to vector<8x32xf32>
    %c0_118 = arith.constant 0 : index
    %c0_119 = arith.constant 0 : index
    %125 = vector.load %arg13[%c0_118, %c0_119] : memref<32x512xf32, #tpu.memory_space<vmem>>, vector<32x512xf32>
    %c16_i32_120 = arith.constant 16 : i32
    %126 = tpu.dynamic_rotate %125 by %c16_i32_120 dim 1 : vector<32x512xf32>, i32 -> vector<32x512xf32>
    %c1_121 = arith.constant 1 : index
    %c0_122 = arith.constant 0 : index
    %127 = vector.load %arg1[%c1_121, %c0_122] : memref<9x512xf32, #tpu.memory_space<vmem>>, vector<1x512xf32>
    %128 = vector.broadcast %127 : vector<1x512xf32> to vector<32x512xf32>
    %129 = arith.mulf %126, %128 : vector<32x512xf32>
    %cst_123 = arith.constant dense<0.000000e+00> : vector<8x512xf32>
    %130 = tpu.matmul %124, %129, %cst_123 {dimension_numbers = #tpu.dot_dimension_numbers<[1], [0], [0], [1], [0, 0, 1, 1], [], []>} : vector<8x32xf32>, vector<32x512xf32>, vector<8x512xf32> -> vector<8x512xf32>
    %131 = arith.addf %122, %130 : vector<8x512xf32>
    %c2_124 = arith.constant 2 : index
    %c0_125 = arith.constant 0 : index
    %c0_126 = arith.constant 0 : index
    %132 = vector.load %arg9[%c2_124, %c0_125, %c0_126] : memref<9x8x32xf32, #tpu.memory_space<vmem>>, vector<1x8x32xf32>
    %133 = vector.shape_cast %132 : vector<1x8x32xf32> to vector<8x32xf32>
    %c0_127 = arith.constant 0 : index
    %c0_128 = arith.constant 0 : index
    %134 = vector.load %arg13[%c0_127, %c0_128] : memref<32x512xf32, #tpu.memory_space<vmem>>, vector<32x512xf32>
    %c15_i32_129 = arith.constant 15 : i32
    %135 = tpu.dynamic_rotate %134 by %c15_i32_129 dim 1 : vector<32x512xf32>, i32 -> vector<32x512xf32>
    %c2_130 = arith.constant 2 : index
    %c0_131 = arith.constant 0 : index
    %136 = vector.load %arg1[%c2_130, %c0_131] : memref<9x512xf32, #tpu.memory_space<vmem>>, vector<1x512xf32>
    %137 = vector.broadcast %136 : vector<1x512xf32> to vector<32x512xf32>
    %138 = arith.mulf %135, %137 : vector<32x512xf32>
    %cst_132 = arith.constant dense<0.000000e+00> : vector<8x512xf32>
    %139 = tpu.matmul %133, %138, %cst_132 {dimension_numbers = #tpu.dot_dimension_numbers<[1], [0], [0], [1], [0, 0, 1, 1], [], []>} : vector<8x32xf32>, vector<32x512xf32>, vector<8x512xf32> -> vector<8x512xf32>
    %140 = arith.addf %131, %139 : vector<8x512xf32>
    %c3_133 = arith.constant 3 : index
    %c0_134 = arith.constant 0 : index
    %c0_135 = arith.constant 0 : index
    %141 = vector.load %arg9[%c3_133, %c0_134, %c0_135] : memref<9x8x32xf32, #tpu.memory_space<vmem>>, vector<1x8x32xf32>
    %142 = vector.shape_cast %141 : vector<1x8x32xf32> to vector<8x32xf32>
    %c0_136 = arith.constant 0 : index
    %c0_137 = arith.constant 0 : index
    %143 = vector.load %arg13[%c0_136, %c0_137] : memref<32x512xf32, #tpu.memory_space<vmem>>, vector<32x512xf32>
    %c1_i32_138 = arith.constant 1 : i32
    %144 = tpu.dynamic_rotate %143 by %c1_i32_138 dim 1 : vector<32x512xf32>, i32 -> vector<32x512xf32>
    %c3_139 = arith.constant 3 : index
    %c0_140 = arith.constant 0 : index
    %145 = vector.load %arg1[%c3_139, %c0_140] : memref<9x512xf32, #tpu.memory_space<vmem>>, vector<1x512xf32>
    %146 = vector.broadcast %145 : vector<1x512xf32> to vector<32x512xf32>
    %147 = arith.mulf %144, %146 : vector<32x512xf32>
    %cst_141 = arith.constant dense<0.000000e+00> : vector<8x512xf32>
    %148 = tpu.matmul %142, %147, %cst_141 {dimension_numbers = #tpu.dot_dimension_numbers<[1], [0], [0], [1], [0, 0, 1, 1], [], []>} : vector<8x32xf32>, vector<32x512xf32>, vector<8x512xf32> -> vector<8x512xf32>
    %149 = arith.addf %140, %148 : vector<8x512xf32>
    %c4_142 = arith.constant 4 : index
    %c0_143 = arith.constant 0 : index
    %c0_144 = arith.constant 0 : index
    %150 = vector.load %arg9[%c4_142, %c0_143, %c0_144] : memref<9x8x32xf32, #tpu.memory_space<vmem>>, vector<1x8x32xf32>
    %151 = vector.shape_cast %150 : vector<1x8x32xf32> to vector<8x32xf32>
    %c0_145 = arith.constant 0 : index
    %c0_146 = arith.constant 0 : index
    %152 = vector.load %arg13[%c0_145, %c0_146] : memref<32x512xf32, #tpu.memory_space<vmem>>, vector<32x512xf32>
    %cst_147 = arith.constant dense<0.000000e+00> : vector<8x512xf32>
    %153 = tpu.matmul %151, %152, %cst_147 {dimension_numbers = #tpu.dot_dimension_numbers<[1], [0], [0], [1], [0, 0, 1, 1], [], []>} : vector<8x32xf32>, vector<32x512xf32>, vector<8x512xf32> -> vector<8x512xf32>
    %154 = arith.addf %149, %153 : vector<8x512xf32>
    %c5_148 = arith.constant 5 : index
    %c0_149 = arith.constant 0 : index
    %c0_150 = arith.constant 0 : index
    %155 = vector.load %arg9[%c5_148, %c0_149, %c0_150] : memref<9x8x32xf32, #tpu.memory_space<vmem>>, vector<1x8x32xf32>
    %156 = vector.shape_cast %155 : vector<1x8x32xf32> to vector<8x32xf32>
    %c0_151 = arith.constant 0 : index
    %c0_152 = arith.constant 0 : index
    %157 = vector.load %arg13[%c0_151, %c0_152] : memref<32x512xf32, #tpu.memory_space<vmem>>, vector<32x512xf32>
    %c511_i32_153 = arith.constant 511 : i32
    %158 = tpu.dynamic_rotate %157 by %c511_i32_153 dim 1 : vector<32x512xf32>, i32 -> vector<32x512xf32>
    %c5_154 = arith.constant 5 : index
    %c0_155 = arith.constant 0 : index
    %159 = vector.load %arg1[%c5_154, %c0_155] : memref<9x512xf32, #tpu.memory_space<vmem>>, vector<1x512xf32>
    %160 = vector.broadcast %159 : vector<1x512xf32> to vector<32x512xf32>
    %161 = arith.mulf %158, %160 : vector<32x512xf32>
    %cst_156 = arith.constant dense<0.000000e+00> : vector<8x512xf32>
    %162 = tpu.matmul %156, %161, %cst_156 {dimension_numbers = #tpu.dot_dimension_numbers<[1], [0], [0], [1], [0, 0, 1, 1], [], []>} : vector<8x32xf32>, vector<32x512xf32>, vector<8x512xf32> -> vector<8x512xf32>
    %163 = arith.addf %154, %162 : vector<8x512xf32>
    %c6_157 = arith.constant 6 : index
    %c0_158 = arith.constant 0 : index
    %c0_159 = arith.constant 0 : index
    %164 = vector.load %arg9[%c6_157, %c0_158, %c0_159] : memref<9x8x32xf32, #tpu.memory_space<vmem>>, vector<1x8x32xf32>
    %165 = vector.shape_cast %164 : vector<1x8x32xf32> to vector<8x32xf32>
    %c0_160 = arith.constant 0 : index
    %c0_161 = arith.constant 0 : index
    %166 = vector.load %arg13[%c0_160, %c0_161] : memref<32x512xf32, #tpu.memory_space<vmem>>, vector<32x512xf32>
    %c497_i32_162 = arith.constant 497 : i32
    %167 = tpu.dynamic_rotate %166 by %c497_i32_162 dim 1 : vector<32x512xf32>, i32 -> vector<32x512xf32>
    %c6_163 = arith.constant 6 : index
    %c0_164 = arith.constant 0 : index
    %168 = vector.load %arg1[%c6_163, %c0_164] : memref<9x512xf32, #tpu.memory_space<vmem>>, vector<1x512xf32>
    %169 = vector.broadcast %168 : vector<1x512xf32> to vector<32x512xf32>
    %170 = arith.mulf %167, %169 : vector<32x512xf32>
    %cst_165 = arith.constant dense<0.000000e+00> : vector<8x512xf32>
    %171 = tpu.matmul %165, %170, %cst_165 {dimension_numbers = #tpu.dot_dimension_numbers<[1], [0], [0], [1], [0, 0, 1, 1], [], []>} : vector<8x32xf32>, vector<32x512xf32>, vector<8x512xf32> -> vector<8x512xf32>
    %172 = arith.addf %163, %171 : vector<8x512xf32>
    %c7_166 = arith.constant 7 : index
    %c0_167 = arith.constant 0 : index
    %c0_168 = arith.constant 0 : index
    %173 = vector.load %arg9[%c7_166, %c0_167, %c0_168] : memref<9x8x32xf32, #tpu.memory_space<vmem>>, vector<1x8x32xf32>
    %174 = vector.shape_cast %173 : vector<1x8x32xf32> to vector<8x32xf32>
    %c0_169 = arith.constant 0 : index
    %c0_170 = arith.constant 0 : index
    %175 = vector.load %arg13[%c0_169, %c0_170] : memref<32x512xf32, #tpu.memory_space<vmem>>, vector<32x512xf32>
    %c496_i32_171 = arith.constant 496 : i32
    %176 = tpu.dynamic_rotate %175 by %c496_i32_171 dim 1 : vector<32x512xf32>, i32 -> vector<32x512xf32>
    %c7_172 = arith.constant 7 : index
    %c0_173 = arith.constant 0 : index
    %177 = vector.load %arg1[%c7_172, %c0_173] : memref<9x512xf32, #tpu.memory_space<vmem>>, vector<1x512xf32>
    %178 = vector.broadcast %177 : vector<1x512xf32> to vector<32x512xf32>
    %179 = arith.mulf %176, %178 : vector<32x512xf32>
    %cst_174 = arith.constant dense<0.000000e+00> : vector<8x512xf32>
    %180 = tpu.matmul %174, %179, %cst_174 {dimension_numbers = #tpu.dot_dimension_numbers<[1], [0], [0], [1], [0, 0, 1, 1], [], []>} : vector<8x32xf32>, vector<32x512xf32>, vector<8x512xf32> -> vector<8x512xf32>
    %181 = arith.addf %172, %180 : vector<8x512xf32>
    %c8_175 = arith.constant 8 : index
    %c0_176 = arith.constant 0 : index
    %c0_177 = arith.constant 0 : index
    %182 = vector.load %arg9[%c8_175, %c0_176, %c0_177] : memref<9x8x32xf32, #tpu.memory_space<vmem>>, vector<1x8x32xf32>
    %183 = vector.shape_cast %182 : vector<1x8x32xf32> to vector<8x32xf32>
    %c0_178 = arith.constant 0 : index
    %c0_179 = arith.constant 0 : index
    %184 = vector.load %arg13[%c0_178, %c0_179] : memref<32x512xf32, #tpu.memory_space<vmem>>, vector<32x512xf32>
    %c495_i32_180 = arith.constant 495 : i32
    %185 = tpu.dynamic_rotate %184 by %c495_i32_180 dim 1 : vector<32x512xf32>, i32 -> vector<32x512xf32>
    %c8_181 = arith.constant 8 : index
    %c0_182 = arith.constant 0 : index
    %186 = vector.load %arg1[%c8_181, %c0_182] : memref<9x512xf32, #tpu.memory_space<vmem>>, vector<1x512xf32>
    %187 = vector.broadcast %186 : vector<1x512xf32> to vector<32x512xf32>
    %188 = arith.mulf %185, %187 : vector<32x512xf32>
    %cst_183 = arith.constant dense<0.000000e+00> : vector<8x512xf32>
    %189 = tpu.matmul %183, %188, %cst_183 {dimension_numbers = #tpu.dot_dimension_numbers<[1], [0], [0], [1], [0, 0, 1, 1], [], []>} : vector<8x32xf32>, vector<32x512xf32>, vector<8x512xf32> -> vector<8x512xf32>
    %190 = arith.addf %181, %189 : vector<8x512xf32>
    %191 = vector.extract_strided_slice %190 {offsets = [0, 0], sizes = [1, 512], strides = [1, 1]} : vector<8x512xf32> to vector<1x512xf32>
    %c0_184 = arith.constant 0 : index
    %c0_185 = arith.constant 0 : index
    %192 = vector.load %arg10[%c0_184, %c0_185] : memref<1x1xf32, #tpu.memory_space<vmem>>, vector<1x1xf32>
    %193 = vector.broadcast %192 : vector<1x1xf32> to vector<1x512xf32>
    %194 = arith.addf %191, %193 : vector<1x512xf32>
    %c0_186 = arith.constant 0 : index
    %c0_187 = arith.constant 0 : index
    %c0_188 = arith.constant 0 : index
    %195 = vector.load %arg12[%c0_186, %c0_187, %c0_188] : memref<1x1x512xf32, #tpu.memory_space<vmem>>, vector<1x1x512xf32>
    %196 = vector.shape_cast %195 : vector<1x1x512xf32> to vector<1x512xf32>
    %197 = vector.shape_cast %194 : vector<1x512xf32> to vector<1x1x512xf32>
    tpu.vector_store %arg12[%c0_186, %c0_187, %c0_188], %197 {strides = array<i32>} : memref<1x1x512xf32, #tpu.memory_space<vmem>>, vector<1x1x512xf32>,
    %198 = arith.addf %3, %194 : vector<1x512xf32>
    %c0_189 = arith.constant 0 : index
    %c0_190 = arith.constant 0 : index
    %c0_191 = arith.constant 0 : index
    %199 = vector.load %arg11[%c0_189, %c0_190, %c0_191] : memref<1x1x512xf32, #tpu.memory_space<vmem>>, vector<1x1x512xf32>
    %200 = vector.shape_cast %199 : vector<1x1x512xf32> to vector<1x512xf32>
    %201 = vector.shape_cast %198 : vector<1x512xf32> to vector<1x1x512xf32>
    tpu.vector_store %arg11[%c0_189, %c0_190, %c0_191], %201 {strides = array<i32>} : memref<1x1x512xf32, #tpu.memory_space<vmem>>, vector<1x1x512xf32>,
    return
  }
  func.func @transform_0(%arg0: i32) -> (i32, i32) {
    %c0_i32 = arith.constant 0 : i32
    %c0_i32_0 = arith.constant 0 : i32
    %c0_i32_1 = arith.constant 0 : i32
    return %c0_i32, %c0_i32_0 : i32, i32
  }
  func.func @transform_1(%arg0: i32) -> (i32, i32, i32) {
    %c0_i32 = arith.constant 0 : i32
    %c0_i32_0 = arith.constant 0 : i32
    %c0_i32_1 = arith.constant 0 : i32
    return %arg0, %c0_i32, %c0_i32_0 : i32, i32, i32
  }
  func.func @transform_2(%arg0: i32) -> (i32, i32) {
    %c0_i32 = arith.constant 0 : i32
    %c0_i32_0 = arith.constant 0 : i32
    %c0_i32_1 = arith.constant 0 : i32
    return %c0_i32, %c0_i32_0 : i32, i32
  }
  func.func @transform_3(%arg0: i32) -> (i32, i32) {
    %c0_i32 = arith.constant 0 : i32
    %c0_i32_0 = arith.constant 0 : i32
    %c0_i32_1 = arith.constant 0 : i32
    return %c0_i32, %c0_i32_0 : i32, i32
  }
  func.func @transform_4(%arg0: i32) -> (i32, i32) {
    %c0_i32 = arith.constant 0 : i32
    %c0_i32_0 = arith.constant 0 : i32
    %c0_i32_1 = arith.constant 0 : i32
    return %c0_i32, %c0_i32_0 : i32, i32
  }
  func.func @transform_5(%arg0: i32) -> (i32, i32) {
    %c0_i32 = arith.constant 0 : i32
    %c0_i32_0 = arith.constant 0 : i32
    %c0_i32_1 = arith.constant 0 : i32
    return %c0_i32, %c0_i32_0 : i32, i32
  }
  func.func @transform_6(%arg0: i32) -> (i32, i32) {
    %c0_i32 = arith.constant 0 : i32
    %c0_i32_0 = arith.constant 0 : i32
    %c0_i32_1 = arith.constant 0 : i32
    return %c0_i32, %c0_i32_0 : i32, i32
  }
  func.func @transform_7(%arg0: i32) -> (i32, i32) {
    %c0_i32 = arith.constant 0 : i32
    %c0_i32_0 = arith.constant 0 : i32
    %c0_i32_1 = arith.constant 0 : i32
    return %c0_i32, %c0_i32_0 : i32, i32
  }
  func.func @transform_8(%arg0: i32) -> (i32, i32, i32) {
    %c0_i32 = arith.constant 0 : i32
    %c0_i32_0 = arith.constant 0 : i32
    %c0_i32_1 = arith.constant 0 : i32
    %c0_i32_2 = arith.constant 0 : i32
    return %c0_i32, %c0_i32_0, %c0_i32_1 : i32, i32, i32
  }
  func.func @transform_9(%arg0: i32) -> (i32, i32) {
    %c0_i32 = arith.constant 0 : i32
    %c0_i32_0 = arith.constant 0 : i32
    %c0_i32_1 = arith.constant 0 : i32
    return %c0_i32, %c0_i32_0 : i32, i32
  }
  func.func @transform_10(%arg0: i32) -> (i32, i32, i32) {
    %c0_i32 = arith.constant 0 : i32
    %c0_i32_0 = arith.constant 0 : i32
    %c0_i32_1 = arith.constant 0 : i32
    return %arg0, %c0_i32, %c0_i32_0 : i32, i32, i32
  }
  func.func @transform_11(%arg0: i32) -> (i32, i32, i32) {
    %c0_i32 = arith.constant 0 : i32
    %c0_i32_0 = arith.constant 0 : i32
    %c0_i32_1 = arith.constant 0 : i32
    return %arg0, %c0_i32, %c0_i32_0 : i32, i32, i32
  }
}

</mosaic_0001>

<llo_original>
// kernel: primal_net_forward.1
$region0: #{primal_net_forward.1}
  #allocation0 [shape = 'u32[]', space=smem, size = 0x4, offset = 0x4, fixed_abs, tag = 'smem constant byte address 0x4 - core index']
  #allocation1 [shape = 'u32[72,128]{1,0:T(1,128)}', space=vmem, size = 0x9000, scoped, tag = 'internal scratch']
  #allocation2 [shape = 'f32[32,512]{1,0:T(8,128)}', space=vmem, size = 0x10000, scoped, tag = 'scratch operand']
  #allocation3 [shape = 'f32[16,512]{1,0:T(8,128)}', space=vmem, size = 0x8000, scoped, tag = 'scratch operand']
  #allocation4 [shape = 'f32[288,512]{1,0:T(8,128)}', space=vmem, size = 0x90000, scoped, tag = 'scratch operand']
  #allocation5 [shape = 'f32[1,1]{1,0:T(1,128)S(1)}', space=vmem, size = 0x200, scoped, tag = 'scoped memory for primal_net_forward.1']
  %s0 = inlined_call_operand.vmem [shape: f32[9,512], index: 0, kind: input, shape index: {}]
  %s1 = inlined_call_operand.vmem [shape: f32[1,1,512], index: 1, kind: input, shape index: {}]
  %s2 = inlined_call_operand.vmem [shape: f32[32,16], index: 2, kind: input, shape index: {}]
  %s3 = inlined_call_operand.vmem [shape: f32[32,1], index: 3, kind: input, shape index: {}]
  %s4 = inlined_call_operand.vmem [shape: f32[32,1], index: 4, kind: input, shape index: {}]
  %s5 = inlined_call_operand.vmem [shape: f32[32,288], index: 5, kind: input, shape index: {}]
  %s6 = inlined_call_operand.vmem [shape: f32[32,1], index: 6, kind: input, shape index: {}]
  %s7 = inlined_call_operand.vmem [shape: f32[32,1], index: 7, kind: input, shape index: {}]
  %s8 = inlined_call_operand.vmem [shape: f32[9,8,32], index: 8, kind: input, shape index: {}]
  %s9 = inlined_call_operand.<no memory space> [shape: f32[1,1], index: 9, kind: input, shape index: {}]
  %s10 = inlined_call_operand.vmem [shape: f32[1,1,512], index: 10, kind: output, shape index: {0}]
  %s11 = inlined_call_operand.vmem [shape: f32[1,1,512], index: 11, kind: output, shape index: {1}]
  %12 = xla_tuple %s10, %s11
  %s13 = sld [smem:[#allocation0]]
  $region58: #{primal_net_forward.1} parent=0
    _
  %s15 = ssub.s32 1, %s13
  %s16 = scalar_select 0, %s15, %s13
  %v17 = vstv %s9
  %18 = vst [vmem:[#allocation5] sm:$0x1] %v17
  // Predicated region
  $region2: #{primal_net_forward.1} parent=0 // pred_check
    _
  $region3: #{primal_net_forward.1} parent=0 // pred_check_branch
    %20 = sbr.rel (0) target = $region5
  $region4: #{primal_net_forward.1} parent=0 // pred_region
    _
  $region5: #{primal_net_forward.1} parent=0 // pred_fallthru
    _
  // Predicated region
  $region6: #{primal_net_forward.1} parent=0 // pred_check
    _
  $region7: #{primal_net_forward.1} parent=0 // pred_check_branch
    %22 = sbr.rel (0) target = $region9
  $region8: #{primal_net_forward.1} parent=0 // pred_region
    _
  $region9: #{primal_net_forward.1} parent=0 // pred_fallthru
    _
  // Predicated region
  $region10: #{primal_net_forward.1} parent=0 // pred_check
    _
  $region11: #{primal_net_forward.1} parent=0 // pred_check_branch
    %24 = sbr.rel (0) target = $region13
  $region12: #{primal_net_forward.1} parent=0 // pred_region
    _
  $region13: #{primal_net_forward.1} parent=0 // pred_fallthru
    _
  // Predicated region
  $region14: #{primal_net_forward.1} parent=0 // pred_check
    _
  $region15: #{primal_net_forward.1} parent=0 // pred_check_branch
    %26 = sbr.rel (0) target = $region17
  $region16: #{primal_net_forward.1} parent=0 // pred_region
    _
  $region17: #{primal_net_forward.1} parent=0 // pred_fallthru
    _
  // Predicated region
  $region18: #{primal_net_forward.1} parent=0 // pred_check
    _
  $region19: #{primal_net_forward.1} parent=0 // pred_check_branch
    %28 = sbr.rel (0) target = $region21
  $region20: #{primal_net_forward.1} parent=0 // pred_region
    _
  $region21: #{primal_net_forward.1} parent=0 // pred_fallthru
    _
  // Predicated region
  $region22: #{primal_net_forward.1} parent=0 // pred_check
    _
  $region23: #{primal_net_forward.1} parent=0 // pred_check_branch
    %30 = sbr.rel (0) target = $region25
  $region24: #{primal_net_forward.1} parent=0 // pred_region
    _
  $region25: #{primal_net_forward.1} parent=0 // pred_fallthru
    _
  // Predicated region
  $region26: #{primal_net_forward.1} parent=0 // pred_check
    _
  $region27: #{primal_net_forward.1} parent=0 // pred_check_branch
    %32 = sbr.rel (0) target = $region29
  $region28: #{primal_net_forward.1} parent=0 // pred_region
    _
  $region29: #{primal_net_forward.1} parent=0 // pred_fallthru
    _
  // Predicated region
  $region30: #{primal_net_forward.1} parent=0 // pred_check
    _
  $region31: #{primal_net_forward.1} parent=0 // pred_check_branch
    %34 = sbr.rel (0) target = $region33
  $region32: #{primal_net_forward.1} parent=0 // pred_region
    _
  $region33: #{primal_net_forward.1} parent=0 // pred_fallthru
    _
  // Predicated region
  $region34: #{primal_net_forward.1} parent=0 // pred_check
    _
  $region35: #{primal_net_forward.1} parent=0 // pred_check_branch
    %36 = sbr.rel (0) target = $region37
  $region36: #{primal_net_forward.1} parent=0 // pred_region
    _
  $region37: #{primal_net_forward.1} parent=0 // pred_fallthru
    _
  // Predicated region
  $region38: #{primal_net_forward.1} parent=0 // pred_check
    _
  $region39: #{primal_net_forward.1} parent=0 // pred_check_branch
    %38 = sbr.rel (0) target = $region41
  $region40: #{primal_net_forward.1} parent=0 // pred_region
    _
  $region41: #{primal_net_forward.1} parent=0 // pred_fallthru
    _
  %39 = vst [vmem:[#allocation3 + $0x20] sm:$0xfe] 0.0
  %40 = vst [vmem:[#allocation3 + $0x28] sm:$0xfe] 0.0
  %41 = vst [vmem:[#allocation3 + $0x30] sm:$0xfe] 0.0
  %42 = vst [vmem:[#allocation3 + $0x38] sm:$0xfe] 0.0
  %v43 = vld [vmem:[%s1] sm:$0xf]
  %v45 = vperm.slane %v43, 0
  %v46 = vperm.slane %v43, 1
  %v47 = vperm.slane %v43, 2
  %v48 = vperm.slane %v43, 3
  %53 = vrot.lane.b32.xlu0 %v45, 17
  %v54 = vpop.permute.xlu0 %53
  %55 = vrot.lane.b32.xlu0 %v46, 17
  %v56 = vpop.permute.xlu0 %55
  %57 = vrot.lane.b32.xlu0 %v47, 17
  %v58 = vpop.permute.xlu0 %57
  %59 = vrot.lane.b32.xlu0 %v48, 17
  %v60 = vpop.permute.xlu0 %59
  %v61 = vlaneseq
  %v62 = vand.u32 %v61, 127
  %vm63 = vcmp.lt.s32.totalorder %v62, 17
  %v64 = vsel %vm63, %v58, %v60
  %v65 = vsel %vm63, %v56, %v58
  %v66 = vsel %vm63, %v54, %v56
  %v67 = vsel %vm63, %v60, %v54
  %v68 = vld [vmem:[%s0] ss:$8 sm:$0xf]
  %v70 = vperm.slane %v68, 0
  %v71 = vperm.slane %v68, 1
  %v72 = vperm.slane %v68, 2
  %v73 = vperm.slane %v68, 3
  %v78 = vmul.f32 %v67, %v70
  %v79 = vmul.f32 %v66, %v71
  %v80 = vmul.f32 %v65, %v72
  %v81 = vmul.f32 %v64, %v73
  %v86 = vrot.slane %v79, 7
  %v87 = vrot.slane %v80, 6
  %v88 = vrot.slane %v81, 5
  %vm89 = vcmask 1040384
  %v90 = vsel %vm89, %v78, %v86
  %vm91 = vcmask 1042434
  %v92 = vsel %vm91, %v87, %v88
  %vm93 = vcmask 1041408
  %v94 = vsel %vm93, %v90, %v92
  %v96 = vlaneseq
  %vm97 = vcmp.ge.s32.totalorder %v96, 0
  %vm98 = vcmp.lt.s32.totalorder %v96, 512
  %vm99 = vmand %vm97, %vm98
  %100 = vst.msk [vmem:[#allocation3] ss:$8 sm:$0xf] %vm99, %v94
  %101 = vst.msk [vmem:[#allocation3] ss:$8 sm:$0x0] %vm99, %v94
  %102 = vrot.lane.b32.xlu0 %v45, 16
  %v103 = vpop.permute.xlu0 %102
  %104 = vrot.lane.b32.xlu0 %v46, 16
  %v105 = vpop.permute.xlu0 %104
  %106 = vrot.lane.b32.xlu0 %v47, 16
  %v107 = vpop.permute.xlu0 %106
  %108 = vrot.lane.b32.xlu0 %v48, 16
  %v109 = vpop.permute.xlu0 %108
  %vm110 = vcmp.lt.s32.totalorder %v62, 16
  %v111 = vsel %vm110, %v107, %v109
  %v112 = vsel %vm110, %v105, %v107
  %v113 = vsel %vm110, %v103, %v105
  %v114 = vsel %vm110, %v109, %v103
  %s115 = scalar_lea.vmem %s0, 1
  %v116 = vld [vmem:[%s115] ss:$8 sm:$0xf]
  %v118 = vperm.slane %v116, 0
  %v119 = vperm.slane %v116, 1
  %v120 = vperm.slane %v116, 2
  %v121 = vperm.slane %v116, 3
  %v126 = vmul.f32 %v114, %v118
  %v127 = vmul.f32 %v113, %v119
  %v128 = vmul.f32 %v112, %v120
  %v129 = vmul.f32 %v111, %v121
  %v134 = vrot.slane %v127, 7
  %v135 = vrot.slane %v128, 6
  %v136 = vrot.slane %v129, 5
  %v137 = vsel %vm89, %v126, %v134
  %v138 = vsel %vm91, %v135, %v136
  %v139 = vsel %vm93, %v137, %v138
  %s141 = scalar_lea.vmem [#allocation3], 1
  %142 = vst.msk [vmem:[%s141] ss:$8 sm:$0xf] %vm99, %v139
  %143 = vst.msk [vmem:[%s141] ss:$8 sm:$0x0] %vm99, %v139
  %144 = vrot.lane.b32.xlu0 %v45, 15
  %v145 = vpop.permute.xlu0 %144
  %146 = vrot.lane.b32.xlu0 %v46, 15
  %v147 = vpop.permute.xlu0 %146
  %148 = vrot.lane.b32.xlu0 %v47, 15
  %v149 = vpop.permute.xlu0 %148
  %150 = vrot.lane.b32.xlu0 %v48, 15
  %v151 = vpop.permute.xlu0 %150
  %vm152 = vcmp.lt.s32.totalorder %v62, 15
  %v153 = vsel %vm152, %v149, %v151
  %v154 = vsel %vm152, %v147, %v149
  %v155 = vsel %vm152, %v145, %v147
  %v156 = vsel %vm152, %v151, %v145
  %s157 = scalar_lea.vmem %s0, 2
  %v158 = vld [vmem:[%s157] ss:$8 sm:$0xf]
  %v160 = vperm.slane %v158, 0
  %v161 = vperm.slane %v158, 1
  %v162 = vperm.slane %v158, 2
  %v163 = vperm.slane %v158, 3
  %v168 = vmul.f32 %v156, %v160
  %v169 = vmul.f32 %v155, %v161
  %v170 = vmul.f32 %v154, %v162
  %v171 = vmul.f32 %v153, %v163
  %v176 = vrot.slane %v169, 7
  %v177 = vrot.slane %v170, 6
  %v178 = vrot.slane %v171, 5
  %v179 = vsel %vm89, %v168, %v176
  %v180 = vsel %vm91, %v177, %v178
  %v181 = vsel %vm93, %v179, %v180
  %s183 = scalar_lea.vmem [#allocation3], 2
  %184 = vst.msk [vmem:[%s183] ss:$8 sm:$0xf] %vm99, %v181
  %185 = vst.msk [vmem:[%s183] ss:$8 sm:$0x0] %vm99, %v181
  %186 = vrot.lane.b32.xlu0 %v45, 1
  %v187 = vpop.permute.xlu0 %186
  %188 = vrot.lane.b32.xlu0 %v46, 1
  %v189 = vpop.permute.xlu0 %188
  %190 = vrot.lane.b32.xlu0 %v47, 1
  %v191 = vpop.permute.xlu0 %190
  %192 = vrot.lane.b32.xlu0 %v48, 1
  %v193 = vpop.permute.xlu0 %192
  %vm194 = vcmp.lt.s32.totalorder %v62, 1
  %v195 = vsel %vm194, %v191, %v193
  %v196 = vsel %vm194, %v189, %v191
  %v197 = vsel %vm194, %v187, %v189
  %v198 = vsel %vm194, %v193, %v187
  %s199 = scalar_lea.vmem %s0, 3
  %v200 = vld [vmem:[%s199] ss:$8 sm:$0xf]
  %v202 = vperm.slane %v200, 0
  %v203 = vperm.slane %v200, 1
  %v204 = vperm.slane %v200, 2
  %v205 = vperm.slane %v200, 3
  %v210 = vmul.f32 %v198, %v202
  %v211 = vmul.f32 %v197, %v203
  %v212 = vmul.f32 %v196, %v204
  %v213 = vmul.f32 %v195, %v205
  %v218 = vrot.slane %v211, 7
  %v219 = vrot.slane %v212, 6
  %v220 = vrot.slane %v213, 5
  %v221 = vsel %vm89, %v210, %v218
  %v222 = vsel %vm91, %v219, %v220
  %v223 = vsel %vm93, %v221, %v222
  %s225 = scalar_lea.vmem [#allocation3], 3
  %226 = vst.msk [vmem:[%s225] ss:$8 sm:$0xf] %vm99, %v223
  %227 = vst.msk [vmem:[%s225] ss:$8 sm:$0x0] %vm99, %v223
  %s228 = scalar_lea.vmem [#allocation3], 4
  %229 = vst.msk [vmem:[%s228] ss:$8 sm:$0xf] %vm99, %v43
  %230 = vst.msk [vmem:[%s228] ss:$8 sm:$0x0] %vm99, %v43
  %231 = vrot.lane.b32.xlu0 %v45, 127
  %v232 = vpop.permute.xlu0 %231
  %233 = vrot.lane.b32.xlu0 %v46, 127
  %v234 = vpop.permute.xlu0 %233
  %235 = vrot.lane.b32.xlu0 %v47, 127
  %v236 = vpop.permute.xlu0 %235
  %237 = vrot.lane.b32.xlu0 %v48, 127
  %v238 = vpop.permute.xlu0 %237
  %vm239 = vcmp.lt.s32.totalorder %v62, 127
  %v240 = vsel %vm239, %v236, %v238
  %v241 = vsel %vm239, %v234, %v236
  %v242 = vsel %vm239, %v232, %v234
  %v243 = vsel %vm239, %v238, %v232
  %s244 = scalar_lea.vmem %s0, 5
  %v245 = vld [vmem:[%s244] ss:$8 sm:$0xf]
  %v247 = vperm.slane %v245, 0
  %v248 = vperm.slane %v245, 1
  %v249 = vperm.slane %v245, 2
  %v250 = vperm.slane %v245, 3
  %v255 = vmul.f32 %v242, %v247
  %v256 = vmul.f32 %v241, %v248
  %v257 = vmul.f32 %v240, %v249
  %v258 = vmul.f32 %v243, %v250
  %v263 = vrot.slane %v256, 7
  %v264 = vrot.slane %v257, 6
  %v265 = vrot.slane %v258, 5
  %v266 = vsel %vm89, %v255, %v263
  %v267 = vsel %vm91, %v264, %v265
  %v268 = vsel %vm93, %v266, %v267
  %s270 = scalar_lea.vmem [#allocation3], 5
  %271 = vst.msk [vmem:[%s270] ss:$8 sm:$0xf] %vm99, %v268
  %272 = vst.msk [vmem:[%s270] ss:$8 sm:$0x0] %vm99, %v268
  %273 = vrot.lane.b32.xlu0 %v45, 113
  %v274 = vpop.permute.xlu0 %273
  %275 = vrot.lane.b32.xlu0 %v46, 113
  %v276 = vpop.permute.xlu0 %275
  %277 = vrot.lane.b32.xlu0 %v47, 113
  %v278 = vpop.permute.xlu0 %277
  %279 = vrot.lane.b32.xlu0 %v48, 113
  %v280 = vpop.permute.xlu0 %279
  %vm281 = vcmp.lt.s32.totalorder %v62, 113
  %v282 = vsel %vm281, %v278, %v280
  %v283 = vsel %vm281, %v276, %v278
  %v284 = vsel %vm281, %v274, %v276
  %v285 = vsel %vm281, %v280, %v274
  %s286 = scalar_lea.vmem %s0, 6
  %v287 = vld [vmem:[%s286] ss:$8 sm:$0xf]
  %v289 = vperm.slane %v287, 0
  %v290 = vperm.slane %v287, 1
  %v291 = vperm.slane %v287, 2
  %v292 = vperm.slane %v287, 3
  %v297 = vmul.f32 %v284, %v289
  %v298 = vmul.f32 %v283, %v290
  %v299 = vmul.f32 %v282, %v291
  %v300 = vmul.f32 %v285, %v292
  %v305 = vrot.slane %v298, 7
  %v306 = vrot.slane %v299, 6
  %v307 = vrot.slane %v300, 5
  %v308 = vsel %vm89, %v297, %v305
  %v309 = vsel %vm91, %v306, %v307
  %v310 = vsel %vm93, %v308, %v309
  %s312 = scalar_lea.vmem [#allocation3], 6
  %313 = vst.msk [vmem:[%s312] ss:$8 sm:$0xf] %vm99, %v310
  %314 = vst.msk [vmem:[%s312] ss:$8 sm:$0x0] %vm99, %v310
  %315 = vrot.lane.b32.xlu0 %v45, 112
  %v316 = vpop.permute.xlu0 %315
  %317 = vrot.lane.b32.xlu0 %v46, 112
  %v318 = vpop.permute.xlu0 %317
  %319 = vrot.lane.b32.xlu0 %v47, 112
  %v320 = vpop.permute.xlu0 %319
  %321 = vrot.lane.b32.xlu0 %v48, 112
  %v322 = vpop.permute.xlu0 %321
  %vm323 = vcmp.lt.s32.totalorder %v62, 112
  %v324 = vsel %vm323, %v320, %v322
  %v325 = vsel %vm323, %v318, %v320
  %v326 = vsel %vm323, %v316, %v318
  %v327 = vsel %vm323, %v322, %v316
  %s328 = scalar_lea.vmem %s0, 7
  %v329 = vld [vmem:[%s328] ss:$8 sm:$0xf]
  %v331 = vperm.slane %v329, 0
  %v332 = vperm.slane %v329, 1
  %v333 = vperm.slane %v329, 2
  %v334 = vperm.slane %v329, 3
  %v339 = vmul.f32 %v326, %v331
  %v340 = vmul.f32 %v325, %v332
  %v341 = vmul.f32 %v324, %v333
  %v342 = vmul.f32 %v327, %v334
  %v347 = vrot.slane %v340, 7
  %v348 = vrot.slane %v341, 6
  %v349 = vrot.slane %v342, 5
  %v350 = vsel %vm89, %v339, %v347
  %v351 = vsel %vm91, %v348, %v349
  %v352 = vsel %vm93, %v350, %v351
  %s354 = scalar_lea.vmem [#allocation3], 7
  %355 = vst.msk [vmem:[%s354] ss:$8 sm:$0xf] %vm99, %v352
  %356 = vst.msk [vmem:[%s354] ss:$8 sm:$0x0] %vm99, %v352
  %357 = vrot.lane.b32.xlu0 %v45, 111
  %v358 = vpop.permute.xlu0 %357
  %359 = vrot.lane.b32.xlu0 %v46, 111
  %v360 = vpop.permute.xlu0 %359
  %361 = vrot.lane.b32.xlu0 %v47, 111
  %v362 = vpop.permute.xlu0 %361
  %363 = vrot.lane.b32.xlu0 %v48, 111
  %v364 = vpop.permute.xlu0 %363
  %vm365 = vcmp.lt.s32.totalorder %v62, 111
  %v366 = vsel %vm365, %v362, %v364
  %v367 = vsel %vm365, %v360, %v362
  %v368 = vsel %vm365, %v358, %v360
  %v369 = vsel %vm365, %v364, %v358
  %s370 = scalar_lea.vmem %s0, 32
  %v371 = vld [vmem:[%s370] ss:$8 sm:$0xf]
  %v373 = vperm.slane %v371, 0
  %v374 = vperm.slane %v371, 1
  %v375 = vperm.slane %v371, 2
  %v376 = vperm.slane %v371, 3
  %v381 = vmul.f32 %v368, %v373
  %v382 = vmul.f32 %v367, %v374
  %v383 = vmul.f32 %v366, %v375
  %v384 = vmul.f32 %v369, %v376
  %v389 = vrot.slane %v382, 7
  %v390 = vrot.slane %v383, 6
  %v391 = vrot.slane %v384, 5
  %v392 = vsel %vm89, %v381, %v389
  %v393 = vsel %vm91, %v390, %v391
  %v394 = vsel %vm93, %v392, %v393
  %s396 = scalar_lea.vmem [#allocation3], 32
  %397 = vst.msk [vmem:[%s396] ss:$8 sm:$0xf] %vm99, %v394
  %398 = vst.msk [vmem:[%s396] ss:$8 sm:$0x0] %vm99, %v394
  %v399 = vld [vmem:[%s2] sm:$0xff]
  %v400 = vld [vmem:[%s2 + $0x8] sm:$0xff]
  %v401 = vld [vmem:[%s2 + $0x10] sm:$0xff]
  %v402 = vld [vmem:[%s2 + $0x18] sm:$0xff]
  %v403 = vld [vmem:[#allocation3] sm:$0xff]
  %v404 = vld [vmem:[#allocation3 + $0x8] sm:$0xff]
  %v405 = vld [vmem:[#allocation3 + $0x10] sm:$0xff]
  %v406 = vld [vmem:[#allocation3 + $0x18] sm:$0xff]
  %v407 = vld [vmem:[#allocation3 + $0x20] sm:$0xff]
  %v408 = vld [vmem:[#allocation3 + $0x28] sm:$0xff]
  %v409 = vld [vmem:[#allocation3 + $0x30] sm:$0xff]
  %v410 = vld [vmem:[#allocation3 + $0x38] sm:$0xff]
  %v411 = vld [vmem:[%s3] sm:$0xff]
  %v412 = vld [vmem:[%s3 + $0x8] sm:$0xff]
  %v413 = vld [vmem:[%s3 + $0x10] sm:$0xff]
  %v414 = vld [vmem:[%s3 + $0x18] sm:$0xff]
  %416 = vset.pattern.permute.xlu0 0
  %417 = vperm.xlu0 %416, %v411
  %v418 = vpop.permute.xlu0 %417
  %421 = vset.pattern.permute.xlu0 0
  %422 = vperm.xlu0 %421, %v412
  %v423 = vpop.permute.xlu0 %422
  %426 = vset.pattern.permute.xlu0 0
  %427 = vperm.xlu0 %426, %v413
  %v428 = vpop.permute.xlu0 %427
  %431 = vset.pattern.permute.xlu0 0
  %432 = vperm.xlu0 %431, %v414
  %v433 = vpop.permute.xlu0 %432
  %vm435 = vcmask 130048
  %v437 = vsel %vm435, %v399, 0
  %v440 = vsel %vm435, %v400, 0
  %v443 = vsel %vm435, %v401, 0
  %v446 = vsel %vm435, %v402, 0
  %448 = vmatpush.msra.mxu0 0.0
  %449 = vmatpush.msra.mxu0 0.0
  %450 = vmatpush.msra.mxu0 0.0
  %451 = vmatpush.msra.mxu0 0.0
  %452 = vmatpush.msra.mxu0 0.0
  %453 = vmatpush.msra.mxu0 0.0
  %454 = vmatpush.msra.mxu0 0.0
  %455 = vmatpush.msra.mxu0 0.0
  %456 = vmatpush.msra.mxu0 0.0
  %457 = vmatpush.msra.mxu0 0.0
  %458 = vmatpush.msra.mxu0 0.0
  %459 = vmatpush.msra.mxu0 0.0
  %460 = vmatpush.msra.mxu0 0.0
  %461 = vmatpush.msra.mxu0 0.0
  %462 = vmatpush.msra.mxu0 %v407
  %463 = vmatpush.msra.mxu0 %v403
  %464 = vmatmul.f32.gmra.mxu0 %v437
  %v465 = vpop.f32.mrf.mxu0
  %v466 = vadd.f32 %v418, %v465
  %467 = vmatmul.f32.gmra.mxu0 %v440
  %v468 = vpop.f32.mrf.mxu0
  %v469 = vadd.f32 %v423, %v468
  %470 = vmatmul.f32.gmra.mxu0 %v443
  %v471 = vpop.f32.mrf.mxu0
  %v472 = vadd.f32 %v428, %v471
  %473 = vmatmul.f32.gmra.mxu0 %v446
  %v474 = vpop.f32.mrf.mxu0
  %v475 = vadd.f32 %v433, %v474
  %476 = vdwg.mxu0
  %477 = vmatpush.msra.mxu0 0.0
  %478 = vmatpush.msra.mxu0 0.0
  %479 = vmatpush.msra.mxu0 0.0
  %480 = vmatpush.msra.mxu0 0.0
  %481 = vmatpush.msra.mxu0 0.0
  %482 = vmatpush.msra.mxu0 0.0
  %483 = vmatpush.msra.mxu0 0.0
  %484 = vmatpush.msra.mxu0 0.0
  %485 = vmatpush.msra.mxu0 0.0
  %486 = vmatpush.msra.mxu0 0.0
  %487 = vmatpush.msra.mxu0 0.0
  %488 = vmatpush.msra.mxu0 0.0
  %489 = vmatpush.msra.mxu0 0.0
  %490 = vmatpush.msra.mxu0 0.0
  %491 = vmatpush.msra.mxu0 %v408
  %492 = vmatpush.msra.mxu0 %v404
  %493 = vmatmul.f32.gmra.mxu0 %v437
  %v494 = vpop.f32.mrf.mxu0
  %v495 = vadd.f32 %v418, %v494
  %496 = vmatmul.f32.gmra.mxu0 %v440
  %v497 = vpop.f32.mrf.mxu0
  %v498 = vadd.f32 %v423, %v497
  %499 = vmatmul.f32.gmra.mxu0 %v443
  %v500 = vpop.f32.mrf.mxu0
  %v501 = vadd.f32 %v428, %v500
  %502 = vmatmul.f32.gmra.mxu0 %v446
  %v503 = vpop.f32.mrf.mxu0
  %v504 = vadd.f32 %v433, %v503
  %505 = vdwg.mxu0
  %506 = vmatpush.msra.mxu0 0.0
  %507 = vmatpush.msra.mxu0 0.0
  %508 = vmatpush.msra.mxu0 0.0
  %509 = vmatpush.msra.mxu0 0.0
  %510 = vmatpush.msra.mxu0 0.0
  %511 = vmatpush.msra.mxu0 0.0
  %512 = vmatpush.msra.mxu0 0.0
  %513 = vmatpush.msra.mxu0 0.0
  %514 = vmatpush.msra.mxu0 0.0
  %515 = vmatpush.msra.mxu0 0.0
  %516 = vmatpush.msra.mxu0 0.0
  %517 = vmatpush.msra.mxu0 0.0
  %518 = vmatpush.msra.mxu0 0.0
  %519 = vmatpush.msra.mxu0 0.0
  %520 = vmatpush.msra.mxu0 %v409
  %521 = vmatpush.msra.mxu0 %v405
  %522 = vmatmul.f32.gmra.mxu0 %v437
  %v523 = vpop.f32.mrf.mxu0
  %v524 = vadd.f32 %v418, %v523
  %525 = vmatmul.f32.gmra.mxu0 %v440
  %v526 = vpop.f32.mrf.mxu0
  %v527 = vadd.f32 %v423, %v526
  %528 = vmatmul.f32.gmra.mxu0 %v443
  %v529 = vpop.f32.mrf.mxu0
  %v530 = vadd.f32 %v428, %v529
  %531 = vmatmul.f32.gmra.mxu0 %v446
  %v532 = vpop.f32.mrf.mxu0
  %v533 = vadd.f32 %v433, %v532
  %534 = vdwg.mxu0
  %535 = vmatpush.msra.mxu0 0.0
  %536 = vmatpush.msra.mxu0 0.0
  %537 = vmatpush.msra.mxu0 0.0
  %538 = vmatpush.msra.mxu0 0.0
  %539 = vmatpush.msra.mxu0 0.0
  %540 = vmatpush.msra.mxu0 0.0
  %541 = vmatpush.msra.mxu0 0.0
  %542 = vmatpush.msra.mxu0 0.0
  %543 = vmatpush.msra.mxu0 0.0
  %544 = vmatpush.msra.mxu0 0.0
  %545 = vmatpush.msra.mxu0 0.0
  %546 = vmatpush.msra.mxu0 0.0
  %547 = vmatpush.msra.mxu0 0.0
  %548 = vmatpush.msra.mxu0 0.0
  %549 = vmatpush.msra.mxu0 %v410
  %550 = vmatpush.msra.mxu0 %v406
  %551 = vmatmul.f32.gmra.mxu0 %v437
  %v552 = vpop.f32.mrf.mxu0
  %v553 = vadd.f32 %v418, %v552
  %554 = vmatmul.f32.gmra.mxu0 %v440
  %v555 = vpop.f32.mrf.mxu0
  %v556 = vadd.f32 %v423, %v555
  %557 = vmatmul.f32.gmra.mxu0 %v443
  %v558 = vpop.f32.mrf.mxu0
  %v559 = vadd.f32 %v428, %v558
  %560 = vmatmul.f32.gmra.mxu0 %v446
  %v561 = vpop.f32.mrf.mxu0
  %v562 = vadd.f32 %v433, %v561
  %563 = vdwg.mxu0
  %v564 = vld [vmem:[%s4] sm:$0xff]
  %v565 = vld [vmem:[%s4 + $0x8] sm:$0xff]
  %v566 = vld [vmem:[%s4 + $0x10] sm:$0xff]
  %v567 = vld [vmem:[%s4 + $0x18] sm:$0xff]
  %vm568 = vcmp.gt.f32.partialorder %v466, 0.0
  %vm569 = vcmp.gt.f32.partialorder %v495, 0.0
  %vm570 = vcmp.gt.f32.partialorder %v524, 0.0
  %vm571 = vcmp.gt.f32.partialorder %v553, 0.0
  %vm572 = vcmp.gt.f32.partialorder %v469, 0.0
  %vm573 = vcmp.gt.f32.partialorder %v498, 0.0
  %vm574 = vcmp.gt.f32.partialorder %v527, 0.0
  %vm575 = vcmp.gt.f32.partialorder %v556, 0.0
  %vm576 = vcmp.gt.f32.partialorder %v472, 0.0
  %vm577 = vcmp.gt.f32.partialorder %v501, 0.0
  %vm578 = vcmp.gt.f32.partialorder %v530, 0.0
  %vm579 = vcmp.gt.f32.partialorder %v559, 0.0
  %vm580 = vcmp.gt.f32.partialorder %v475, 0.0
  %vm581 = vcmp.gt.f32.partialorder %v504, 0.0
  %vm582 = vcmp.gt.f32.partialorder %v533, 0.0
  %vm583 = vcmp.gt.f32.partialorder %v562, 0.0
  %585 = vset.pattern.permute.xlu0 0
  %586 = vperm.xlu0 %585, %v564
  %v587 = vpop.permute.xlu0 %586
  %590 = vset.pattern.permute.xlu0 0
  %591 = vperm.xlu0 %590, %v565
  %v592 = vpop.permute.xlu0 %591
  %595 = vset.pattern.permute.xlu0 0
  %596 = vperm.xlu0 %595, %v566
  %v597 = vpop.permute.xlu0 %596
  %600 = vset.pattern.permute.xlu0 0
  %601 = vperm.xlu0 %600, %v567
  %v602 = vpop.permute.xlu0 %601
  %v604 = vmul.f32 %v587, %v466
  %v605 = vmul.f32 %v587, %v495
  %v606 = vmul.f32 %v587, %v524
  %v607 = vmul.f32 %v587, %v553
  %v608 = vmul.f32 %v592, %v469
  %v609 = vmul.f32 %v592, %v498
  %v610 = vmul.f32 %v592, %v527
  %v611 = vmul.f32 %v592, %v556
  %v612 = vmul.f32 %v597, %v472
  %v613 = vmul.f32 %v597, %v501
  %v614 = vmul.f32 %v597, %v530
  %v615 = vmul.f32 %v597, %v559
  %v616 = vmul.f32 %v602, %v475
  %v617 = vmul.f32 %v602, %v504
  %v618 = vmul.f32 %v602, %v533
  %v619 = vmul.f32 %v602, %v562
  %v620 = vsel %vm568, %v466, %v604
  %v621 = vsel %vm569, %v495, %v605
  %v622 = vsel %vm570, %v524, %v606
  %v623 = vsel %vm571, %v553, %v607
  %v624 = vsel %vm572, %v469, %v608
  %v625 = vsel %vm573, %v498, %v609
  %v626 = vsel %vm574, %v527, %v610
  %v627 = vsel %vm575, %v556, %v611
  %v628 = vsel %vm576, %v472, %v612
  %v629 = vsel %vm577, %v501, %v613
  %v630 = vsel %vm578, %v530, %v614
  %v631 = vsel %vm579, %v559, %v615
  %v632 = vsel %vm580, %v475, %v616
  %v633 = vsel %vm581, %v504, %v617
  %v634 = vsel %vm582, %v533, %v618
  %v635 = vsel %vm583, %v562, %v619
  %636 = vst [vmem:[#allocation2] sm:$0xff] %v620
  %637 = vst [vmem:[#allocation2 + $0x8] sm:$0xff] %v621
  %638 = vst [vmem:[#allocation2 + $0x10] sm:$0xff] %v622
  %639 = vst [vmem:[#allocation2 + $0x18] sm:$0xff] %v623
  %640 = vst [vmem:[#allocation2 + $0x20] sm:$0xff] %v624
  %641 = vst [vmem:[#allocation2 + $0x28] sm:$0xff] %v625
  %642 = vst [vmem:[#allocation2 + $0x30] sm:$0xff] %v626
  %643 = vst [vmem:[#allocation2 + $0x38] sm:$0xff] %v627
  %644 = vst [vmem:[#allocation2 + $0x40] sm:$0xff] %v628
  %645 = vst [vmem:[#allocation2 + $0x48] sm:$0xff] %v629
  %646 = vst [vmem:[#allocation2 + $0x50] sm:$0xff] %v630
  %647 = vst [vmem:[#allocation2 + $0x58] sm:$0xff] %v631
  %648 = vst [vmem:[#allocation2 + $0x60] sm:$0xff] %v632
  %649 = vst [vmem:[#allocation2 + $0x68] sm:$0xff] %v633
  %650 = vst [vmem:[#allocation2 + $0x70] sm:$0xff] %v634
  %651 = vst [vmem:[#allocation2 + $0x78] sm:$0xff] %v635
  %v652 = vld [vmem:[#allocation2] sm:$0xff]
  %v653 = vld [vmem:[#allocation2 + $0x8] sm:$0xff]
  %v654 = vld [vmem:[#allocation2 + $0x10] sm:$0xff]
  %v655 = vld [vmem:[#allocation2 + $0x18] sm:$0xff]
  %v656 = vld [vmem:[#allocation2 + $0x20] sm:$0xff]
  %v657 = vld [vmem:[#allocation2 + $0x28] sm:$0xff]
  %v658 = vld [vmem:[#allocation2 + $0x30] sm:$0xff]
  %v659 = vld [vmem:[#allocation2 + $0x38] sm:$0xff]
  %v660 = vld [vmem:[#allocation2 + $0x40] sm:$0xff]
  %v661 = vld [vmem:[#allocation2 + $0x48] sm:$0xff]
  %v662 = vld [vmem:[#allocation2 + $0x50] sm:$0xff]
  %v663 = vld [vmem:[#allocation2 + $0x58] sm:$0xff]
  %v664 = vld [vmem:[#allocation2 + $0x60] sm:$0xff]
  %v665 = vld [vmem:[#allocation2 + $0x68] sm:$0xff]
  %v666 = vld [vmem:[#allocation2 + $0x70] sm:$0xff]
  %v667 = vld [vmem:[#allocation2 + $0x78] sm:$0xff]
  %668 = vrot.lane.b32.xlu0 %v652, 17
  %v669 = vpop.permute.xlu0 %668
  %670 = vrot.lane.b32.xlu0 %v656, 17
  %v671 = vpop.permute.xlu0 %670
  %672 = vrot.lane.b32.xlu0 %v660, 17
  %v673 = vpop.permute.xlu0 %672
  %674 = vrot.lane.b32.xlu0 %v664, 17
  %v675 = vpop.permute.xlu0 %674
  %676 = vrot.lane.b32.xlu0 %v653, 17
  %v677 = vpop.permute.xlu0 %676
  %678 = vrot.lane.b32.xlu0 %v657, 17
  %v679 = vpop.permute.xlu0 %678
  %680 = vrot.lane.b32.xlu0 %v661, 17
  %v681 = vpop.permute.xlu0 %680
  %682 = vrot.lane.b32.xlu0 %v665, 17
  %v683 = vpop.permute.xlu0 %682
  %684 = vrot.lane.b32.xlu0 %v654, 17
  %v685 = vpop.permute.xlu0 %684
  %686 = vrot.lane.b32.xlu0 %v658, 17
  %v687 = vpop.permute.xlu0 %686
  %688 = vrot.lane.b32.xlu0 %v662, 17
  %v689 = vpop.permute.xlu0 %688
  %690 = vrot.lane.b32.xlu0 %v666, 17
  %v691 = vpop.permute.xlu0 %690
  %692 = vrot.lane.b32.xlu0 %v655, 17
  %v693 = vpop.permute.xlu0 %692
  %694 = vrot.lane.b32.xlu0 %v659, 17
  %v695 = vpop.permute.xlu0 %694
  %696 = vrot.lane.b32.xlu0 %v663, 17
  %v697 = vpop.permute.xlu0 %696
  %698 = vrot.lane.b32.xlu0 %v667, 17
  %v699 = vpop.permute.xlu0 %698
  %v700 = vsel %vm63, %v685, %v693
  %v701 = vsel %vm63, %v687, %v695
  %v702 = vsel %vm63, %v689, %v697
  %v703 = vsel %vm63, %v691, %v699
  %v704 = vsel %vm63, %v677, %v685
  %v705 = vsel %vm63, %v679, %v687
  %v706 = vsel %vm63, %v681, %v689
  %v707 = vsel %vm63, %v683, %v691
  %v708 = vsel %vm63, %v669, %v677
  %v709 = vsel %vm63, %v671, %v679
  %v710 = vsel %vm63, %v673, %v681
  %v711 = vsel %vm63, %v675, %v683
  %v712 = vsel %vm63, %v693, %v669
  %v713 = vsel %vm63, %v695, %v671
  %v714 = vsel %vm63, %v697, %v673
  %v715 = vsel %vm63, %v699, %v675
  %v716 = vld [vmem:[%s0] ss:$8 sm:$0xf]
  %v718 = vperm.slane %v716, 0
  %v719 = vperm.slane %v716, 1
  %v720 = vperm.slane %v716, 2
  %v721 = vperm.slane %v716, 3
  %v726 = vmul.f32 %v712, %v718
  %v727 = vmul.f32 %v708, %v719
  %v728 = vmul.f32 %v704, %v720
  %v729 = vmul.f32 %v700, %v721
  %v730 = vmul.f32 %v713, %v718
  %v731 = vmul.f32 %v709, %v719
  %v732 = vmul.f32 %v705, %v720
  %v733 = vmul.f32 %v701, %v721
  %v734 = vmul.f32 %v714, %v718
  %v735 = vmul.f32 %v710, %v719
  %v736 = vmul.f32 %v706, %v720
  %v737 = vmul.f32 %v702, %v721
  %v738 = vmul.f32 %v715, %v718
  %v739 = vmul.f32 %v711, %v719
  %v740 = vmul.f32 %v707, %v720
  %v741 = vmul.f32 %v703, %v721
  %742 = vst [vmem:[#allocation4] sm:$0xff] %v726
  %743 = vst [vmem:[#allocation4 + $0x8] sm:$0xff] %v727
  %744 = vst [vmem:[#allocation4 + $0x10] sm:$0xff] %v728
  %745 = vst [vmem:[#allocation4 + $0x18] sm:$0xff] %v729
  %746 = vst [vmem:[#allocation4 + $0x20] sm:$0xff] %v730
  %747 = vst [vmem:[#allocation4 + $0x28] sm:$0xff] %v731
  %748 = vst [vmem:[#allocation4 + $0x30] sm:$0xff] %v732
  %749 = vst [vmem:[#allocation4 + $0x38] sm:$0xff] %v733
  %750 = vst [vmem:[#allocation4 + $0x40] sm:$0xff] %v734
  %751 = vst [vmem:[#allocation4 + $0x48] sm:$0xff] %v735
  %752 = vst [vmem:[#allocation4 + $0x50] sm:$0xff] %v736
  %753 = vst [vmem:[#allocation4 + $0x58] sm:$0xff] %v737
  %754 = vst [vmem:[#allocation4 + $0x60] sm:$0xff] %v738
  %755 = vst [vmem:[#allocation4 + $0x68] sm:$0xff] %v739
  %756 = vst [vmem:[#allocation4 + $0x70] sm:$0xff] %v740
  %757 = vst [vmem:[#allocation4 + $0x78] sm:$0xff] %v741
  %v758 = vld [vmem:[#allocation2] sm:$0xff]
  %v759 = vld [vmem:[#allocation2 + $0x8] sm:$0xff]
  %v760 = vld [vmem:[#allocation2 + $0x10] sm:$0xff]
  %v761 = vld [vmem:[#allocation2 + $0x18] sm:$0xff]
  %v762 = vld [vmem:[#allocation2 + $0x20] sm:$0xff]
  %v763 = vld [vmem:[#allocation2 + $0x28] sm:$0xff]
  %v764 = vld [vmem:[#allocation2 + $0x30] sm:$0xff]
  %v765 = vld [vmem:[#allocation2 + $0x38] sm:$0xff]
  %v766 = vld [vmem:[#allocation2 + $0x40] sm:$0xff]
  %v767 = vld [vmem:[#allocation2 + $0x48] sm:$0xff]
  %v768 = vld [vmem:[#allocation2 + $0x50] sm:$0xff]
  %v769 = vld [vmem:[#allocation2 + $0x58] sm:$0xff]
  %v770 = vld [vmem:[#allocation2 + $0x60] sm:$0xff]
  %v771 = vld [vmem:[#allocation2 + $0x68] sm:$0xff]
  %v772 = vld [vmem:[#allocation2 + $0x70] sm:$0xff]
  %v773 = vld [vmem:[#allocation2 + $0x78] sm:$0xff]
  %774 = vrot.lane.b32.xlu0 %v758, 16
  %v775 = vpop.permute.xlu0 %774
  %776 = vrot.lane.b32.xlu0 %v762, 16
  %v777 = vpop.permute.xlu0 %776
  %778 = vrot.lane.b32.xlu0 %v766, 16
  %v779 = vpop.permute.xlu0 %778
  %780 = vrot.lane.b32.xlu0 %v770, 16
  %v781 = vpop.permute.xlu0 %780
  %782 = vrot.lane.b32.xlu0 %v759, 16
  %v783 = vpop.permute.xlu0 %782
  %784 = vrot.lane.b32.xlu0 %v763, 16
  %v785 = vpop.permute.xlu0 %784
  %786 = vrot.lane.b32.xlu0 %v767, 16
  %v787 = vpop.permute.xlu0 %786
  %788 = vrot.lane.b32.xlu0 %v771, 16
  %v789 = vpop.permute.xlu0 %788
  %790 = vrot.lane.b32.xlu0 %v760, 16
  %v791 = vpop.permute.xlu0 %790
  %792 = vrot.lane.b32.xlu0 %v764, 16
  %v793 = vpop.permute.xlu0 %792
  %794 = vrot.lane.b32.xlu0 %v768, 16
  %v795 = vpop.permute.xlu0 %794
  %796 = vrot.lane.b32.xlu0 %v772, 16
  %v797 = vpop.permute.xlu0 %796
  %798 = vrot.lane.b32.xlu0 %v761, 16
  %v799 = vpop.permute.xlu0 %798
  %800 = vrot.lane.b32.xlu0 %v765, 16
  %v801 = vpop.permute.xlu0 %800
  %802 = vrot.lane.b32.xlu0 %v769, 16
  %v803 = vpop.permute.xlu0 %802
  %804 = vrot.lane.b32.xlu0 %v773, 16
  %v805 = vpop.permute.xlu0 %804
  %v806 = vsel %vm110, %v791, %v799
  %v807 = vsel %vm110, %v793, %v801
  %v808 = vsel %vm110, %v795, %v803
  %v809 = vsel %vm110, %v797, %v805
  %v810 = vsel %vm110, %v783, %v791
  %v811 = vsel %vm110, %v785, %v793
  %v812 = vsel %vm110, %v787, %v795
  %v813 = vsel %vm110, %v789, %v797
  %v814 = vsel %vm110, %v775, %v783
  %v815 = vsel %vm110, %v777, %v785
  %v816 = vsel %vm110, %v779, %v787
  %v817 = vsel %vm110, %v781, %v789
  %v818 = vsel %vm110, %v799, %v775
  %v819 = vsel %vm110, %v801, %v777
  %v820 = vsel %vm110, %v803, %v779
  %v821 = vsel %vm110, %v805, %v781
  %v822 = vld [vmem:[%s115] ss:$8 sm:$0xf]
  %v824 = vperm.slane %v822, 0
  %v825 = vperm.slane %v822, 1
  %v826 = vperm.slane %v822, 2
  %v827 = vperm.slane %v822, 3
  %v832 = vmul.f32 %v818, %v824
  %v833 = vmul.f32 %v814, %v825
  %v834 = vmul.f32 %v810, %v826
  %v835 = vmul.f32 %v806, %v827
  %v836 = vmul.f32 %v819, %v824
  %v837 = vmul.f32 %v815, %v825
  %v838 = vmul.f32 %v811, %v826
  %v839 = vmul.f32 %v807, %v827
  %v840 = vmul.f32 %v820, %v824
  %v841 = vmul.f32 %v816, %v825
  %v842 = vmul.f32 %v812, %v826
  %v843 = vmul.f32 %v808, %v827
  %v844 = vmul.f32 %v821, %v824
  %v845 = vmul.f32 %v817, %v825
  %v846 = vmul.f32 %v813, %v826
  %v847 = vmul.f32 %v809, %v827
  %848 = vst [vmem:[#allocation4 + $0x80] sm:$0xff] %v832
  %849 = vst [vmem:[#allocation4 + $0x88] sm:$0xff] %v833
  %850 = vst [vmem:[#allocation4 + $0x90] sm:$0xff] %v834
  %851 = vst [vmem:[#allocation4 + $0x98] sm:$0xff] %v835
  %852 = vst [vmem:[#allocation4 + $0xa0] sm:$0xff] %v836
  %853 = vst [vmem:[#allocation4 + $0xa8] sm:$0xff] %v837
  %854 = vst [vmem:[#allocation4 + $0xb0] sm:$0xff] %v838
  %855 = vst [vmem:[#allocation4 + $0xb8] sm:$0xff] %v839
  %856 = vst [vmem:[#allocation4 + $0xc0] sm:$0xff] %v840
  %857 = vst [vmem:[#allocation4 + $0xc8] sm:$0xff] %v841
  %858 = vst [vmem:[#allocation4 + $0xd0] sm:$0xff] %v842
  %859 = vst [vmem:[#allocation4 + $0xd8] sm:$0xff] %v843
  %860 = vst [vmem:[#allocation4 + $0xe0] sm:$0xff] %v844
  %861 = vst [vmem:[#allocation4 + $0xe8] sm:$0xff] %v845
  %862 = vst [vmem:[#allocation4 + $0xf0] sm:$0xff] %v846
  %863 = vst [vmem:[#allocation4 + $0xf8] sm:$0xff] %v847
  %v864 = vld [vmem:[#allocation2] sm:$0xff]
  %v865 = vld [vmem:[#allocation2 + $0x8] sm:$0xff]
  %v866 = vld [vmem:[#allocation2 + $0x10] sm:$0xff]
  %v867 = vld [vmem:[#allocation2 + $0x18] sm:$0xff]
  %v868 = vld [vmem:[#allocation2 + $0x20] sm:$0xff]
  %v869 = vld [vmem:[#allocation2 + $0x28] sm:$0xff]
  %v870 = vld [vmem:[#allocation2 + $0x30] sm:$0xff]
  %v871 = vld [vmem:[#allocation2 + $0x38] sm:$0xff]
  %v872 = vld [vmem:[#allocation2 + $0x40] sm:$0xff]
  %v873 = vld [vmem:[#allocation2 + $0x48] sm:$0xff]
  %v874 = vld [vmem:[#allocation2 + $0x50] sm:$0xff]
  %v875 = vld [vmem:[#allocation2 + $0x58] sm:$0xff]
  %v876 = vld [vmem:[#allocation2 + $0x60] sm:$0xff]
  %v877 = vld [vmem:[#allocation2 + $0x68] sm:$0xff]
  %v878 = vld [vmem:[#allocation2 + $0x70] sm:$0xff]
  %v879 = vld [vmem:[#allocation2 + $0x78] sm:$0xff]
  %880 = vrot.lane.b32.xlu0 %v864, 15
  %v881 = vpop.permute.xlu0 %880
  %882 = vrot.lane.b32.xlu0 %v868, 15
  %v883 = vpop.permute.xlu0 %882
  %884 = vrot.lane.b32.xlu0 %v872, 15
  %v885 = vpop.permute.xlu0 %884
  %886 = vrot.lane.b32.xlu0 %v876, 15
  %v887 = vpop.permute.xlu0 %886
  %888 = vrot.lane.b32.xlu0 %v865, 15
  %v889 = vpop.permute.xlu0 %888
  %890 = vrot.lane.b32.xlu0 %v869, 15
  %v891 = vpop.permute.xlu0 %890
  %892 = vrot.lane.b32.xlu0 %v873, 15
  %v893 = vpop.permute.xlu0 %892
  %894 = vrot.lane.b32.xlu0 %v877, 15
  %v895 = vpop.permute.xlu0 %894
  %896 = vrot.lane.b32.xlu0 %v866, 15
  %v897 = vpop.permute.xlu0 %896
  %898 = vrot.lane.b32.xlu0 %v870, 15
  %v899 = vpop.permute.xlu0 %898
  %900 = vrot.lane.b32.xlu0 %v874, 15
  %v901 = vpop.permute.xlu0 %900
  %902 = vrot.lane.b32.xlu0 %v878, 15
  %v903 = vpop.permute.xlu0 %902
  %904 = vrot.lane.b32.xlu0 %v867, 15
  %v905 = vpop.permute.xlu0 %904
  %906 = vrot.lane.b32.xlu0 %v871, 15
  %v907 = vpop.permute.xlu0 %906
  %908 = vrot.lane.b32.xlu0 %v875, 15
  %v909 = vpop.permute.xlu0 %908
  %910 = vrot.lane.b32.xlu0 %v879, 15
  %v911 = vpop.permute.xlu0 %910
  %v912 = vsel %vm152, %v897, %v905
  %v913 = vsel %vm152, %v899, %v907
  %v914 = vsel %vm152, %v901, %v909
  %v915 = vsel %vm152, %v903, %v911
  %v916 = vsel %vm152, %v889, %v897
  %v917 = vsel %vm152, %v891, %v899
  %v918 = vsel %vm152, %v893, %v901
  %v919 = vsel %vm152, %v895, %v903
  %v920 = vsel %vm152, %v881, %v889
  %v921 = vsel %vm152, %v883, %v891
  %v922 = vsel %vm152, %v885, %v893
  %v923 = vsel %vm152, %v887, %v895
  %v924 = vsel %vm152, %v905, %v881
  %v925 = vsel %vm152, %v907, %v883
  %v926 = vsel %vm152, %v909, %v885
  %v927 = vsel %vm152, %v911, %v887
  %v928 = vld [vmem:[%s157] ss:$8 sm:$0xf]
  %v930 = vperm.slane %v928, 0
  %v931 = vperm.slane %v928, 1
  %v932 = vperm.slane %v928, 2
  %v933 = vperm.slane %v928, 3
  %v938 = vmul.f32 %v924, %v930
  %v939 = vmul.f32 %v920, %v931
  %v940 = vmul.f32 %v916, %v932
  %v941 = vmul.f32 %v912, %v933
  %v942 = vmul.f32 %v925, %v930
  %v943 = vmul.f32 %v921, %v931
  %v944 = vmul.f32 %v917, %v932
  %v945 = vmul.f32 %v913, %v933
  %v946 = vmul.f32 %v926, %v930
  %v947 = vmul.f32 %v922, %v931
  %v948 = vmul.f32 %v918, %v932
  %v949 = vmul.f32 %v914, %v933
  %v950 = vmul.f32 %v927, %v930
  %v951 = vmul.f32 %v923, %v931
  %v952 = vmul.f32 %v919, %v932
  %v953 = vmul.f32 %v915, %v933
  %954 = vst [vmem:[#allocation4 + $0x100] sm:$0xff] %v938
  %955 = vst [vmem:[#allocation4 + $0x108] sm:$0xff] %v939
  %956 = vst [vmem:[#allocation4 + $0x110] sm:$0xff] %v940
  %957 = vst [vmem:[#allocation4 + $0x118] sm:$0xff] %v941
  %958 = vst [vmem:[#allocation4 + $0x120] sm:$0xff] %v942
  %959 = vst [vmem:[#allocation4 + $0x128] sm:$0xff] %v943
  %960 = vst [vmem:[#allocation4 + $0x130] sm:$0xff] %v944
  %961 = vst [vmem:[#allocation4 + $0x138] sm:$0xff] %v945
  %962 = vst [vmem:[#allocation4 + $0x140] sm:$0xff] %v946
  %963 = vst [vmem:[#allocation4 + $0x148] sm:$0xff] %v947
  %964 = vst [vmem:[#allocation4 + $0x150] sm:$0xff] %v948
  %965 = vst [vmem:[#allocation4 + $0x158] sm:$0xff] %v949
  %966 = vst [vmem:[#allocation4 + $0x160] sm:$0xff] %v950
  %967 = vst [vmem:[#allocation4 + $0x168] sm:$0xff] %v951
  %968 = vst [vmem:[#allocation4 + $0x170] sm:$0xff] %v952
  %969 = vst [vmem:[#allocation4 + $0x178] sm:$0xff] %v953
  %v970 = vld [vmem:[#allocation2] sm:$0xff]
  %v971 = vld [vmem:[#allocation2 + $0x8] sm:$0xff]
  %v972 = vld [vmem:[#allocation2 + $0x10] sm:$0xff]
  %v973 = vld [vmem:[#allocation2 + $0x18] sm:$0xff]
  %v974 = vld [vmem:[#allocation2 + $0x20] sm:$0xff]
  %v975 = vld [vmem:[#allocation2 + $0x28] sm:$0xff]
  %v976 = vld [vmem:[#allocation2 + $0x30] sm:$0xff]
  %v977 = vld [vmem:[#allocation2 + $0x38] sm:$0xff]
  %v978 = vld [vmem:[#allocation2 + $0x40] sm:$0xff]
  %v979 = vld [vmem:[#allocation2 + $0x48] sm:$0xff]
  %v980 = vld [vmem:[#allocation2 + $0x50] sm:$0xff]
  %v981 = vld [vmem:[#allocation2 + $0x58] sm:$0xff]
  %v982 = vld [vmem:[#allocation2 + $0x60] sm:$0xff]
  %v983 = vld [vmem:[#allocation2 + $0x68] sm:$0xff]
  %v984 = vld [vmem:[#allocation2 + $0x70] sm:$0xff]
  %v985 = vld [vmem:[#allocation2 + $0x78] sm:$0xff]
  %986 = vrot.lane.b32.xlu0 %v970, 1
  %v987 = vpop.permute.xlu0 %986
  %988 = vrot.lane.b32.xlu0 %v974, 1
  %v989 = vpop.permute.xlu0 %988
  %990 = vrot.lane.b32.xlu0 %v978, 1
  %v991 = vpop.permute.xlu0 %990
  %992 = vrot.lane.b32.xlu0 %v982, 1
  %v993 = vpop.permute.xlu0 %992
  %994 = vrot.lane.b32.xlu0 %v971, 1
  %v995 = vpop.permute.xlu0 %994
  %996 = vrot.lane.b32.xlu0 %v975, 1
  %v997 = vpop.permute.xlu0 %996
  %998 = vrot.lane.b32.xlu0 %v979, 1
  %v999 = vpop.permute.xlu0 %998
  %1000 = vrot.lane.b32.xlu0 %v983, 1
  %v1001 = vpop.permute.xlu0 %1000
  %1002 = vrot.lane.b32.xlu0 %v972, 1
  %v1003 = vpop.permute.xlu0 %1002
  %1004 = vrot.lane.b32.xlu0 %v976, 1
  %v1005 = vpop.permute.xlu0 %1004
  %1006 = vrot.lane.b32.xlu0 %v980, 1
  %v1007 = vpop.permute.xlu0 %1006
  %1008 = vrot.lane.b32.xlu0 %v984, 1
  %v1009 = vpop.permute.xlu0 %1008
  %1010 = vrot.lane.b32.xlu0 %v973, 1
  %v1011 = vpop.permute.xlu0 %1010
  %1012 = vrot.lane.b32.xlu0 %v977, 1
  %v1013 = vpop.permute.xlu0 %1012
  %1014 = vrot.lane.b32.xlu0 %v981, 1
  %v1015 = vpop.permute.xlu0 %1014
  %1016 = vrot.lane.b32.xlu0 %v985, 1
  %v1017 = vpop.permute.xlu0 %1016
  %v1018 = vsel %vm194, %v1003, %v1011
  %v1019 = vsel %vm194, %v1005, %v1013
  %v1020 = vsel %vm194, %v1007, %v1015
  %v1021 = vsel %vm194, %v1009, %v1017
  %v1022 = vsel %vm194, %v995, %v1003
  %v1023 = vsel %vm194, %v997, %v1005
  %v1024 = vsel %vm194, %v999, %v1007
  %v1025 = vsel %vm194, %v1001, %v1009
  %v1026 = vsel %vm194, %v987, %v995
  %v1027 = vsel %vm194, %v989, %v997
  %v1028 = vsel %vm194, %v991, %v999
  %v1029 = vsel %vm194, %v993, %v1001
  %v1030 = vsel %vm194, %v1011, %v987
  %v1031 = vsel %vm194, %v1013, %v989
  %v1032 = vsel %vm194, %v1015, %v991
  %v1033 = vsel %vm194, %v1017, %v993
  %v1034 = vld [vmem:[%s199] ss:$8 sm:$0xf]
  %v1036 = vperm.slane %v1034, 0
  %v1037 = vperm.slane %v1034, 1
  %v1038 = vperm.slane %v1034, 2
  %v1039 = vperm.slane %v1034, 3
  %v1044 = vmul.f32 %v1030, %v1036
  %v1045 = vmul.f32 %v1026, %v1037
  %v1046 = vmul.f32 %v1022, %v1038
  %v1047 = vmul.f32 %v1018, %v1039
  %v1048 = vmul.f32 %v1031, %v1036
  %v1049 = vmul.f32 %v1027, %v1037
  %v1050 = vmul.f32 %v1023, %v1038
  %v1051 = vmul.f32 %v1019, %v1039
  %v1052 = vmul.f32 %v1032, %v1036
  %v1053 = vmul.f32 %v1028, %v1037
  %v1054 = vmul.f32 %v1024, %v1038
  %v1055 = vmul.f32 %v1020, %v1039
  %v1056 = vmul.f32 %v1033, %v1036
  %v1057 = vmul.f32 %v1029, %v1037
  %v1058 = vmul.f32 %v1025, %v1038
  %v1059 = vmul.f32 %v1021, %v1039
  %1060 = vst [vmem:[#allocation4 + $0x180] sm:$0xff] %v1044
  %1061 = vst [vmem:[#allocation4 + $0x188] sm:$0xff] %v1045
  %1062 = vst [vmem:[#allocation4 + $0x190] sm:$0xff] %v1046
  %1063 = vst [vmem:[#allocation4 + $0x198] sm:$0xff] %v1047
  %1064 = vst [vmem:[#allocation4 + $0x1a0] sm:$0xff] %v1048
  %1065 = vst [vmem:[#allocation4 + $0x1a8] sm:$0xff] %v1049
  %1066 = vst [vmem:[#allocation4 + $0x1b0] sm:$0xff] %v1050
  %1067 = vst [vmem:[#allocation4 + $0x1b8] sm:$0xff] %v1051
  %1068 = vst [vmem:[#allocation4 + $0x1c0] sm:$0xff] %v1052
  %1069 = vst [vmem:[#allocation4 + $0x1c8] sm:$0xff] %v1053
  %1070 = vst [vmem:[#allocation4 + $0x1d0] sm:$0xff] %v1054
  %1071 = vst [vmem:[#allocation4 + $0x1d8] sm:$0xff] %v1055
  %1072 = vst [vmem:[#allocation4 + $0x1e0] sm:$0xff] %v1056
  %1073 = vst [vmem:[#allocation4 + $0x1e8] sm:$0xff] %v1057
  %1074 = vst [vmem:[#allocation4 + $0x1f0] sm:$0xff] %v1058
  %1075 = vst [vmem:[#allocation4 + $0x1f8] sm:$0xff] %v1059
  %v1076 = vld [vmem:[#allocation2] sm:$0xff]
  %v1077 = vld [vmem:[#allocation2 + $0x8] sm:$0xff]
  %v1078 = vld [vmem:[#allocation2 + $0x10] sm:$0xff]
  %v1079 = vld [vmem:[#allocation2 + $0x18] sm:$0xff]
  %v1080 = vld [vmem:[#allocation2 + $0x20] sm:$0xff]
  %v1081 = vld [vmem:[#allocation2 + $0x28] sm:$0xff]
  %v1082 = vld [vmem:[#allocation2 + $0x30] sm:$0xff]
  %v1083 = vld [vmem:[#allocation2 + $0x38] sm:$0xff]
  %v1084 = vld [vmem:[#allocation2 + $0x40] sm:$0xff]
  %v1085 = vld [vmem:[#allocation2 + $0x48] sm:$0xff]
  %v1086 = vld [vmem:[#allocation2 + $0x50] sm:$0xff]
  %v1087 = vld [vmem:[#allocation2 + $0x58] sm:$0xff]
  %v1088 = vld [vmem:[#allocation2 + $0x60] sm:$0xff]
  %v1089 = vld [vmem:[#allocation2 + $0x68] sm:$0xff]
  %v1090 = vld [vmem:[#allocation2 + $0x70] sm:$0xff]
  %v1091 = vld [vmem:[#allocation2 + $0x78] sm:$0xff]
  %1092 = vst [vmem:[#allocation4 + $0x200] sm:$0xff] %v1076
  %1093 = vst [vmem:[#allocation4 + $0x208] sm:$0xff] %v1077
  %1094 = vst [vmem:[#allocation4 + $0x210] sm:$0xff] %v1078
  %1095 = vst [vmem:[#allocation4 + $0x218] sm:$0xff] %v1079
  %1096 = vst [vmem:[#allocation4 + $0x220] sm:$0xff] %v1080
  %1097 = vst [vmem:[#allocation4 + $0x228] sm:$0xff] %v1081
  %1098 = vst [vmem:[#allocation4 + $0x230] sm:$0xff] %v1082
  %1099 = vst [vmem:[#allocation4 + $0x238] sm:$0xff] %v1083
  %1100 = vst [vmem:[#allocation4 + $0x240] sm:$0xff] %v1084
  %1101 = vst [vmem:[#allocation4 + $0x248] sm:$0xff] %v1085
  %1102 = vst [vmem:[#allocation4 + $0x250] sm:$0xff] %v1086
  %1103 = vst [vmem:[#allocation4 + $0x258] sm:$0xff] %v1087
  %1104 = vst [vmem:[#allocation4 + $0x260] sm:$0xff] %v1088
  %1105 = vst [vmem:[#allocation4 + $0x268] sm:$0xff] %v1089
  %1106 = vst [vmem:[#allocation4 + $0x270] sm:$0xff] %v1090
  %1107 = vst [vmem:[#allocation4 + $0x278] sm:$0xff] %v1091
  %v1108 = vld [vmem:[#allocation2] sm:$0xff]
  %v1109 = vld [vmem:[#allocation2 + $0x8] sm:$0xff]
  %v1110 = vld [vmem:[#allocation2 + $0x10] sm:$0xff]
  %v1111 = vld [vmem:[#allocation2 + $0x18] sm:$0xff]
  %v1112 = vld [vmem:[#allocation2 + $0x20] sm:$0xff]
  %v1113 = vld [vmem:[#allocation2 + $0x28] sm:$0xff]
  %v1114 = vld [vmem:[#allocation2 + $0x30] sm:$0xff]
  %v1115 = vld [vmem:[#allocation2 + $0x38] sm:$0xff]
  %v1116 = vld [vmem:[#allocation2 + $0x40] sm:$0xff]
  %v1117 = vld [vmem:[#allocation2 + $0x48] sm:$0xff]
  %v1118 = vld [vmem:[#allocation2 + $0x50] sm:$0xff]
  %v1119 = vld [vmem:[#allocation2 + $0x58] sm:$0xff]
  %v1120 = vld [vmem:[#allocation2 + $0x60] sm:$0xff]
  %v1121 = vld [vmem:[#allocation2 + $0x68] sm:$0xff]
  %v1122 = vld [vmem:[#allocation2 + $0x70] sm:$0xff]
  %v1123 = vld [vmem:[#allocation2 + $0x78] sm:$0xff]
  %1124 = vrot.lane.b32.xlu0 %v1108, 127
  %v1125 = vpop.permute.xlu0 %1124
  %1126 = vrot.lane.b32.xlu0 %v1112, 127
  %v1127 = vpop.permute.xlu0 %1126
  %1128 = vrot.lane.b32.xlu0 %v1116, 127
  %v1129 = vpop.permute.xlu0 %1128
  %1130 = vrot.lane.b32.xlu0 %v1120, 127
  %v1131 = vpop.permute.xlu0 %1130
  %1132 = vrot.lane.b32.xlu0 %v1109, 127
  %v1133 = vpop.permute.xlu0 %1132
  %1134 = vrot.lane.b32.xlu0 %v1113, 127
  %v1135 = vpop.permute.xlu0 %1134
  %1136 = vrot.lane.b32.xlu0 %v1117, 127
  %v1137 = vpop.permute.xlu0 %1136
  %1138 = vrot.lane.b32.xlu0 %v1121, 127
  %v1139 = vpop.permute.xlu0 %1138
  %1140 = vrot.lane.b32.xlu0 %v1110, 127
  %v1141 = vpop.permute.xlu0 %1140
  %1142 = vrot.lane.b32.xlu0 %v1114, 127
  %v1143 = vpop.permute.xlu0 %1142
  %1144 = vrot.lane.b32.xlu0 %v1118, 127
  %v1145 = vpop.permute.xlu0 %1144
  %1146 = vrot.lane.b32.xlu0 %v1122, 127
  %v1147 = vpop.permute.xlu0 %1146
  %1148 = vrot.lane.b32.xlu0 %v1111, 127
  %v1149 = vpop.permute.xlu0 %1148
  %1150 = vrot.lane.b32.xlu0 %v1115, 127
  %v1151 = vpop.permute.xlu0 %1150
  %1152 = vrot.lane.b32.xlu0 %v1119, 127
  %v1153 = vpop.permute.xlu0 %1152
  %1154 = vrot.lane.b32.xlu0 %v1123, 127
  %v1155 = vpop.permute.xlu0 %1154
  %v1156 = vsel %vm239, %v1141, %v1149
  %v1157 = vsel %vm239, %v1143, %v1151
  %v1158 = vsel %vm239, %v1145, %v1153
  %v1159 = vsel %vm239, %v1147, %v1155
  %v1160 = vsel %vm239, %v1133, %v1141
  %v1161 = vsel %vm239, %v1135, %v1143
  %v1162 = vsel %vm239, %v1137, %v1145
  %v1163 = vsel %vm239, %v1139, %v1147
  %v1164 = vsel %vm239, %v1125, %v1133
  %v1165 = vsel %vm239, %v1127, %v1135
  %v1166 = vsel %vm239, %v1129, %v1137
  %v1167 = vsel %vm239, %v1131, %v1139
  %v1168 = vsel %vm239, %v1149, %v1125
  %v1169 = vsel %vm239, %v1151, %v1127
  %v1170 = vsel %vm239, %v1153, %v1129
  %v1171 = vsel %vm239, %v1155, %v1131
  %v1172 = vld [vmem:[%s244] ss:$8 sm:$0xf]
  %v1174 = vperm.slane %v1172, 0
  %v1175 = vperm.slane %v1172, 1
  %v1176 = vperm.slane %v1172, 2
  %v1177 = vperm.slane %v1172, 3
  %v1182 = vmul.f32 %v1164, %v1174
  %v1183 = vmul.f32 %v1160, %v1175
  %v1184 = vmul.f32 %v1156, %v1176
  %v1185 = vmul.f32 %v1168, %v1177
  %v1186 = vmul.f32 %v1165, %v1174
  %v1187 = vmul.f32 %v1161, %v1175
  %v1188 = vmul.f32 %v1157, %v1176
  %v1189 = vmul.f32 %v1169, %v1177
  %v1190 = vmul.f32 %v1166, %v1174
  %v1191 = vmul.f32 %v1162, %v1175
  %v1192 = vmul.f32 %v1158, %v1176
  %v1193 = vmul.f32 %v1170, %v1177
  %v1194 = vmul.f32 %v1167, %v1174
  %v1195 = vmul.f32 %v1163, %v1175
  %v1196 = vmul.f32 %v1159, %v1176
  %v1197 = vmul.f32 %v1171, %v1177
  %1198 = vst [vmem:[#allocation4 + $0x280] sm:$0xff] %v1182
  %1199 = vst [vmem:[#allocation4 + $0x288] sm:$0xff] %v1183
  %1200 = vst [vmem:[#allocation4 + $0x290] sm:$0xff] %v1184
  %1201 = vst [vmem:[#allocation4 + $0x298] sm:$0xff] %v1185
  %1202 = vst [vmem:[#allocation4 + $0x2a0] sm:$0xff] %v1186
  %1203 = vst [vmem:[#allocation4 + $0x2a8] sm:$0xff] %v1187
  %1204 = vst [vmem:[#allocation4 + $0x2b0] sm:$0xff] %v1188
  %1205 = vst [vmem:[#allocation4 + $0x2b8] sm:$0xff] %v1189
  %1206 = vst [vmem:[#allocation4 + $0x2c0] sm:$0xff] %v1190
  %1207 = vst [vmem:[#allocation4 + $0x2c8] sm:$0xff] %v1191
  %1208 = vst [vmem:[#allocation4 + $0x2d0] sm:$0xff] %v1192
  %1209 = vst [vmem:[#allocation4 + $0x2d8] sm:$0xff] %v1193
  %1210 = vst [vmem:[#allocation4 + $0x2e0] sm:$0xff] %v1194
  %1211 = vst [vmem:[#allocation4 + $0x2e8] sm:$0xff] %v1195
  %1212 = vst [vmem:[#allocation4 + $0x2f0] sm:$0xff] %v1196
  %1213 = vst [vmem:[#allocation4 + $0x2f8] sm:$0xff] %v1197
  %v1214 = vld [vmem:[#allocation2] sm:$0xff]
  %v1215 = vld [vmem:[#allocation2 + $0x8] sm:$0xff]
  %v1216 = vld [vmem:[#allocation2 + $0x10] sm:$0xff]
  %v1217 = vld [vmem:[#allocation2 + $0x18] sm:$0xff]
  %v1218 = vld [vmem:[#allocation2 + $0x20] sm:$0xff]
  %v1219 = vld [vmem:[#allocation2 + $0x28] sm:$0xff]
  %v1220 = vld [vmem:[#allocation2 + $0x30] sm:$0xff]
  %v1221 = vld [vmem:[#allocation2 + $0x38] sm:$0xff]
  %v1222 = vld [vmem:[#allocation2 + $0x40] sm:$0xff]
  %v1223 = vld [vmem:[#allocation2 + $0x48] sm:$0xff]
  %v1224 = vld [vmem:[#allocation2 + $0x50] sm:$0xff]
  %v1225 = vld [vmem:[#allocation2 + $0x58] sm:$0xff]
  %v1226 = vld [vmem:[#allocation2 + $0x60] sm:$0xff]
  %v1227 = vld [vmem:[#allocation2 + $0x68] sm:$0xff]
  %v1228 = vld [vmem:[#allocation2 + $0x70] sm:$0xff]
  %v1229 = vld [vmem:[#allocation2 + $0x78] sm:$0xff]
  %1230 = vrot.lane.b32.xlu0 %v1214, 113
  %v1231 = vpop.permute.xlu0 %1230
  %1232 = vrot.lane.b32.xlu0 %v1218, 113
  %v1233 = vpop.permute.xlu0 %1232
  %1234 = vrot.lane.b32.xlu0 %v1222, 113
  %v1235 = vpop.permute.xlu0 %1234
  %1236 = vrot.lane.b32.xlu0 %v1226, 113
  %v1237 = vpop.permute.xlu0 %1236
  %1238 = vrot.lane.b32.xlu0 %v1215, 113
  %v1239 = vpop.permute.xlu0 %1238
  %1240 = vrot.lane.b32.xlu0 %v1219, 113
  %v1241 = vpop.permute.xlu0 %1240
  %1242 = vrot.lane.b32.xlu0 %v1223, 113
  %v1243 = vpop.permute.xlu0 %1242
  %1244 = vrot.lane.b32.xlu0 %v1227, 113
  %v1245 = vpop.permute.xlu0 %1244
  %1246 = vrot.lane.b32.xlu0 %v1216, 113
  %v1247 = vpop.permute.xlu0 %1246
  %1248 = vrot.lane.b32.xlu0 %v1220, 113
  %v1249 = vpop.permute.xlu0 %1248
  %1250 = vrot.lane.b32.xlu0 %v1224, 113
  %v1251 = vpop.permute.xlu0 %1250
  %1252 = vrot.lane.b32.xlu0 %v1228, 113
  %v1253 = vpop.permute.xlu0 %1252
  %1254 = vrot.lane.b32.xlu0 %v1217, 113
  %v1255 = vpop.permute.xlu0 %1254
  %1256 = vrot.lane.b32.xlu0 %v1221, 113
  %v1257 = vpop.permute.xlu0 %1256
  %1258 = vrot.lane.b32.xlu0 %v1225, 113
  %v1259 = vpop.permute.xlu0 %1258
  %1260 = vrot.lane.b32.xlu0 %v1229, 113
  %v1261 = vpop.permute.xlu0 %1260
  %v1262 = vsel %vm281, %v1247, %v1255
  %v1263 = vsel %vm281, %v1249, %v1257
  %v1264 = vsel %vm281, %v1251, %v1259
  %v1265 = vsel %vm281, %v1253, %v1261
  %v1266 = vsel %vm281, %v1239, %v1247
  %v1267 = vsel %vm281, %v1241, %v1249
  %v1268 = vsel %vm281, %v1243, %v1251
  %v1269 = vsel %vm281, %v1245, %v1253
  %v1270 = vsel %vm281, %v1231, %v1239
  %v1271 = vsel %vm281, %v1233, %v1241
  %v1272 = vsel %vm281, %v1235, %v1243
  %v1273 = vsel %vm281, %v1237, %v1245
  %v1274 = vsel %vm281, %v1255, %v1231
  %v1275 = vsel %vm281, %v1257, %v1233
  %v1276 = vsel %vm281, %v1259, %v1235
  %v1277 = vsel %vm281, %v1261, %v1237
  %v1278 = vld [vmem:[%s286] ss:$8 sm:$0xf]
  %v1280 = vperm.slane %v1278, 0
  %v1281 = vperm.slane %v1278, 1
  %v1282 = vperm.slane %v1278, 2
  %v1283 = vperm.slane %v1278, 3
  %v1288 = vmul.f32 %v1270, %v1280
  %v1289 = vmul.f32 %v1266, %v1281
  %v1290 = vmul.f32 %v1262, %v1282
  %v1291 = vmul.f32 %v1274, %v1283
  %v1292 = vmul.f32 %v1271, %v1280
  %v1293 = vmul.f32 %v1267, %v1281
  %v1294 = vmul.f32 %v1263, %v1282
  %v1295 = vmul.f32 %v1275, %v1283
  %v1296 = vmul.f32 %v1272, %v1280
  %v1297 = vmul.f32 %v1268, %v1281
  %v1298 = vmul.f32 %v1264, %v1282
  %v1299 = vmul.f32 %v1276, %v1283
  %v1300 = vmul.f32 %v1273, %v1280
  %v1301 = vmul.f32 %v1269, %v1281
  %v1302 = vmul.f32 %v1265, %v1282
  %v1303 = vmul.f32 %v1277, %v1283
  %1304 = vst [vmem:[#allocation4 + $0x300] sm:$0xff] %v1288
  %1305 = vst [vmem:[#allocation4 + $0x308] sm:$0xff] %v1289
  %1306 = vst [vmem:[#allocation4 + $0x310] sm:$0xff] %v1290
  %1307 = vst [vmem:[#allocation4 + $0x318] sm:$0xff] %v1291
  %1308 = vst [vmem:[#allocation4 + $0x320] sm:$0xff] %v1292
  %1309 = vst [vmem:[#allocation4 + $0x328] sm:$0xff] %v1293
  %1310 = vst [vmem:[#allocation4 + $0x330] sm:$0xff] %v1294
  %1311 = vst [vmem:[#allocation4 + $0x338] sm:$0xff] %v1295
  %1312 = vst [vmem:[#allocation4 + $0x340] sm:$0xff] %v1296
  %1313 = vst [vmem:[#allocation4 + $0x348] sm:$0xff] %v1297
  %1314 = vst [vmem:[#allocation4 + $0x350] sm:$0xff] %v1298
  %1315 = vst [vmem:[#allocation4 + $0x358] sm:$0xff] %v1299
  %1316 = vst [vmem:[#allocation4 + $0x360] sm:$0xff] %v1300
  %1317 = vst [vmem:[#allocation4 + $0x368] sm:$0xff] %v1301
  %1318 = vst [vmem:[#allocation4 + $0x370] sm:$0xff] %v1302
  %1319 = vst [vmem:[#allocation4 + $0x378] sm:$0xff] %v1303
  %v1320 = vld [vmem:[#allocation2] sm:$0xff]
  %v1321 = vld [vmem:[#allocation2 + $0x8] sm:$0xff]
  %v1322 = vld [vmem:[#allocation2 + $0x10] sm:$0xff]
  %v1323 = vld [vmem:[#allocation2 + $0x18] sm:$0xff]
  %v1324 = vld [vmem:[#allocation2 + $0x20] sm:$0xff]
  %v1325 = vld [vmem:[#allocation2 + $0x28] sm:$0xff]
  %v1326 = vld [vmem:[#allocation2 + $0x30] sm:$0xff]
  %v1327 = vld [vmem:[#allocation2 + $0x38] sm:$0xff]
  %v1328 = vld [vmem:[#allocation2 + $0x40] sm:$0xff]
  %v1329 = vld [vmem:[#allocation2 + $0x48] sm:$0xff]
  %v1330 = vld [vmem:[#allocation2 + $0x50] sm:$0xff]
  %v1331 = vld [vmem:[#allocation2 + $0x58] sm:$0xff]
  %v1332 = vld [vmem:[#allocation2 + $0x60] sm:$0xff]
  %v1333 = vld [vmem:[#allocation2 + $0x68] sm:$0xff]
  %v1334 = vld [vmem:[#allocation2 + $0x70] sm:$0xff]
  %v1335 = vld [vmem:[#allocation2 + $0x78] sm:$0xff]
  %1336 = vrot.lane.b32.xlu0 %v1320, 112
  %v1337 = vpop.permute.xlu0 %1336
  %1338 = vrot.lane.b32.xlu0 %v1324, 112
  %v1339 = vpop.permute.xlu0 %1338
  %1340 = vrot.lane.b32.xlu0 %v1328, 112
  %v1341 = vpop.permute.xlu0 %1340
  %1342 = vrot.lane.b32.xlu0 %v1332, 112
  %v1343 = vpop.permute.xlu0 %1342
  %1344 = vrot.lane.b32.xlu0 %v1321, 112
  %v1345 = vpop.permute.xlu0 %1344
  %1346 = vrot.lane.b32.xlu0 %v1325, 112
  %v1347 = vpop.permute.xlu0 %1346
  %1348 = vrot.lane.b32.xlu0 %v1329, 112
  %v1349 = vpop.permute.xlu0 %1348
  %1350 = vrot.lane.b32.xlu0 %v1333, 112
  %v1351 = vpop.permute.xlu0 %1350
  %1352 = vrot.lane.b32.xlu0 %v1322, 112
  %v1353 = vpop.permute.xlu0 %1352
  %1354 = vrot.lane.b32.xlu0 %v1326, 112
  %v1355 = vpop.permute.xlu0 %1354
  %1356 = vrot.lane.b32.xlu0 %v1330, 112
  %v1357 = vpop.permute.xlu0 %1356
  %1358 = vrot.lane.b32.xlu0 %v1334, 112
  %v1359 = vpop.permute.xlu0 %1358
  %1360 = vrot.lane.b32.xlu0 %v1323, 112
  %v1361 = vpop.permute.xlu0 %1360
  %1362 = vrot.lane.b32.xlu0 %v1327, 112
  %v1363 = vpop.permute.xlu0 %1362
  %1364 = vrot.lane.b32.xlu0 %v1331, 112
  %v1365 = vpop.permute.xlu0 %1364
  %1366 = vrot.lane.b32.xlu0 %v1335, 112
  %v1367 = vpop.permute.xlu0 %1366
  %v1368 = vsel %vm323, %v1353, %v1361
  %v1369 = vsel %vm323, %v1355, %v1363
  %v1370 = vsel %vm323, %v1357, %v1365
  %v1371 = vsel %vm323, %v1359, %v1367
  %v1372 = vsel %vm323, %v1345, %v1353
  %v1373 = vsel %vm323, %v1347, %v1355
  %v1374 = vsel %vm323, %v1349, %v1357
  %v1375 = vsel %vm323, %v1351, %v1359
  %v1376 = vsel %vm323, %v1337, %v1345
  %v1377 = vsel %vm323, %v1339, %v1347
  %v1378 = vsel %vm323, %v1341, %v1349
  %v1379 = vsel %vm323, %v1343, %v1351
  %v1380 = vsel %vm323, %v1361, %v1337
  %v1381 = vsel %vm323, %v1363, %v1339
  %v1382 = vsel %vm323, %v1365, %v1341
  %v1383 = vsel %vm323, %v1367, %v1343
  %v1384 = vld [vmem:[%s328] ss:$8 sm:$0xf]
  %v1386 = vperm.slane %v1384, 0
  %v1387 = vperm.slane %v1384, 1
  %v1388 = vperm.slane %v1384, 2
  %v1389 = vperm.slane %v1384, 3
  %v1394 = vmul.f32 %v1376, %v1386
  %v1395 = vmul.f32 %v1372, %v1387
  %v1396 = vmul.f32 %v1368, %v1388
  %v1397 = vmul.f32 %v1380, %v1389
  %v1398 = vmul.f32 %v1377, %v1386
  %v1399 = vmul.f32 %v1373, %v1387
  %v1400 = vmul.f32 %v1369, %v1388
  %v1401 = vmul.f32 %v1381, %v1389
  %v1402 = vmul.f32 %v1378, %v1386
  %v1403 = vmul.f32 %v1374, %v1387
  %v1404 = vmul.f32 %v1370, %v1388
  %v1405 = vmul.f32 %v1382, %v1389
  %v1406 = vmul.f32 %v1379, %v1386
  %v1407 = vmul.f32 %v1375, %v1387
  %v1408 = vmul.f32 %v1371, %v1388
  %v1409 = vmul.f32 %v1383, %v1389
  %1410 = vst [vmem:[#allocation4 + $0x380] sm:$0xff] %v1394
  %1411 = vst [vmem:[#allocation4 + $0x388] sm:$0xff] %v1395
  %1412 = vst [vmem:[#allocation4 + $0x390] sm:$0xff] %v1396
  %1413 = vst [vmem:[#allocation4 + $0x398] sm:$0xff] %v1397
  %1414 = vst [vmem:[#allocation4 + $0x3a0] sm:$0xff] %v1398
  %1415 = vst [vmem:[#allocation4 + $0x3a8] sm:$0xff] %v1399
  %1416 = vst [vmem:[#allocation4 + $0x3b0] sm:$0xff] %v1400
  %1417 = vst [vmem:[#allocation4 + $0x3b8] sm:$0xff] %v1401
  %1418 = vst [vmem:[#allocation4 + $0x3c0] sm:$0xff] %v1402
  %1419 = vst [vmem:[#allocation4 + $0x3c8] sm:$0xff] %v1403
  %1420 = vst [vmem:[#allocation4 + $0x3d0] sm:$0xff] %v1404
  %1421 = vst [vmem:[#allocation4 + $0x3d8] sm:$0xff] %v1405
  %1422 = vst [vmem:[#allocation4 + $0x3e0] sm:$0xff] %v1406
  %1423 = vst [vmem:[#allocation4 + $0x3e8] sm:$0xff] %v1407
  %1424 = vst [vmem:[#allocation4 + $0x3f0] sm:$0xff] %v1408
  %1425 = vst [vmem:[#allocation4 + $0x3f8] sm:$0xff] %v1409
  %v1426 = vld [vmem:[#allocation2] sm:$0xff]
  %v1427 = vld [vmem:[#allocation2 + $0x8] sm:$0xff]
  %v1428 = vld [vmem:[#allocation2 + $0x10] sm:$0xff]
  %v1429 = vld [vmem:[#allocation2 + $0x18] sm:$0xff]
  %v1430 = vld [vmem:[#allocation2 + $0x20] sm:$0xff]
  %v1431 = vld [vmem:[#allocation2 + $0x28] sm:$0xff]
  %v1432 = vld [vmem:[#allocation2 + $0x30] sm:$0xff]
  %v1433 = vld [vmem:[#allocation2 + $0x38] sm:$0xff]
  %v1434 = vld [vmem:[#allocation2 + $0x40] sm:$0xff]
  %v1435 = vld [vmem:[#allocation2 + $0x48] sm:$0xff]
  %v1436 = vld [vmem:[#allocation2 + $0x50] sm:$0xff]
  %v1437 = vld [vmem:[#allocation2 + $0x58] sm:$0xff]
  %v1438 = vld [vmem:[#allocation2 + $0x60] sm:$0xff]
  %v1439 = vld [vmem:[#allocation2 + $0x68] sm:$0xff]
  %v1440 = vld [vmem:[#allocation2 + $0x70] sm:$0xff]
  %v1441 = vld [vmem:[#allocation2 + $0x78] sm:$0xff]
  %1442 = vrot.lane.b32.xlu0 %v1426, 111
  %v1443 = vpop.permute.xlu0 %1442
  %1444 = vrot.lane.b32.xlu0 %v1430, 111
  %v1445 = vpop.permute.xlu0 %1444
  %1446 = vrot.lane.b32.xlu0 %v1434, 111
  %v1447 = vpop.permute.xlu0 %1446
  %1448 = vrot.lane.b32.xlu0 %v1438, 111
  %v1449 = vpop.permute.xlu0 %1448
  %1450 = vrot.lane.b32.xlu0 %v1427, 111
  %v1451 = vpop.permute.xlu0 %1450
  %1452 = vrot.lane.b32.xlu0 %v1431, 111
  %v1453 = vpop.permute.xlu0 %1452
  %1454 = vrot.lane.b32.xlu0 %v1435, 111
  %v1455 = vpop.permute.xlu0 %1454
  %1456 = vrot.lane.b32.xlu0 %v1439, 111
  %v1457 = vpop.permute.xlu0 %1456
  %1458 = vrot.lane.b32.xlu0 %v1428, 111
  %v1459 = vpop.permute.xlu0 %1458
  %1460 = vrot.lane.b32.xlu0 %v1432, 111
  %v1461 = vpop.permute.xlu0 %1460
  %1462 = vrot.lane.b32.xlu0 %v1436, 111
  %v1463 = vpop.permute.xlu0 %1462
  %1464 = vrot.lane.b32.xlu0 %v1440, 111
  %v1465 = vpop.permute.xlu0 %1464
  %1466 = vrot.lane.b32.xlu0 %v1429, 111
  %v1467 = vpop.permute.xlu0 %1466
  %1468 = vrot.lane.b32.xlu0 %v1433, 111
  %v1469 = vpop.permute.xlu0 %1468
  %1470 = vrot.lane.b32.xlu0 %v1437, 111
  %v1471 = vpop.permute.xlu0 %1470
  %1472 = vrot.lane.b32.xlu0 %v1441, 111
  %v1473 = vpop.permute.xlu0 %1472
  %v1474 = vsel %vm365, %v1459, %v1467
  %v1475 = vsel %vm365, %v1461, %v1469
  %v1476 = vsel %vm365, %v1463, %v1471
  %v1477 = vsel %vm365, %v1465, %v1473
  %v1478 = vsel %vm365, %v1451, %v1459
  %v1479 = vsel %vm365, %v1453, %v1461
  %v1480 = vsel %vm365, %v1455, %v1463
  %v1481 = vsel %vm365, %v1457, %v1465
  %v1482 = vsel %vm365, %v1443, %v1451
  %v1483 = vsel %vm365, %v1445, %v1453
  %v1484 = vsel %vm365, %v1447, %v1455
  %v1485 = vsel %vm365, %v1449, %v1457
  %v1486 = vsel %vm365, %v1467, %v1443
  %v1487 = vsel %vm365, %v1469, %v1445
  %v1488 = vsel %vm365, %v1471, %v1447
  %v1489 = vsel %vm365, %v1473, %v1449
  %v1490 = vld [vmem:[%s370] ss:$8 sm:$0xf]
  %v1492 = vperm.slane %v1490, 0
  %v1493 = vperm.slane %v1490, 1
  %v1494 = vperm.slane %v1490, 2
  %v1495 = vperm.slane %v1490, 3
  %v1500 = vmul.f32 %v1482, %v1492
  %v1501 = vmul.f32 %v1478, %v1493
  %v1502 = vmul.f32 %v1474, %v1494
  %v1503 = vmul.f32 %v1486, %v1495
  %v1504 = vmul.f32 %v1483, %v1492
  %v1505 = vmul.f32 %v1479, %v1493
  %v1506 = vmul.f32 %v1475, %v1494
  %v1507 = vmul.f32 %v1487, %v1495
  %v1508 = vmul.f32 %v1484, %v1492
  %v1509 = vmul.f32 %v1480, %v1493
  %v1510 = vmul.f32 %v1476, %v1494
  %v1511 = vmul.f32 %v1488, %v1495
  %v1512 = vmul.f32 %v1485, %v1492
  %v1513 = vmul.f32 %v1481, %v1493
  %v1514 = vmul.f32 %v1477, %v1494
  %v1515 = vmul.f32 %v1489, %v1495
  %1516 = vst [vmem:[#allocation4 + $0x400] sm:$0xff] %v1500
  %1517 = vst [vmem:[#allocation4 + $0x408] sm:$0xff] %v1501
  %1518 = vst [vmem:[#allocation4 + $0x410] sm:$0xff] %v1502
  %1519 = vst [vmem:[#allocation4 + $0x418] sm:$0xff] %v1503
  %1520 = vst [vmem:[#allocation4 + $0x420] sm:$0xff] %v1504
  %1521 = vst [vmem:[#allocation4 + $0x428] sm:$0xff] %v1505
  %1522 = vst [vmem:[#allocation4 + $0x430] sm:$0xff] %v1506
  %1523 = vst [vmem:[#allocation4 + $0x438] sm:$0xff] %v1507
  %1524 = vst [vmem:[#allocation4 + $0x440] sm:$0xff] %v1508
  %1525 = vst [vmem:[#allocation4 + $0x448] sm:$0xff] %v1509
  %1526 = vst [vmem:[#allocation4 + $0x450] sm:$0xff] %v1510
  %1527 = vst [vmem:[#allocation4 + $0x458] sm:$0xff] %v1511
  %1528 = vst [vmem:[#allocation4 + $0x460] sm:$0xff] %v1512
  %1529 = vst [vmem:[#allocation4 + $0x468] sm:$0xff] %v1513
  %1530 = vst [vmem:[#allocation4 + $0x470] sm:$0xff] %v1514
  %1531 = vst [vmem:[#allocation4 + $0x478] sm:$0xff] %v1515
  %v1532 = vld [vmem:[%s5] sm:$0xff]
  %v1533 = vld [vmem:[%s5 + $0x8] sm:$0xff]
  %v1534 = vld [vmem:[%s5 + $0x10] sm:$0xff]
  %v1535 = vld [vmem:[%s5 + $0x18] sm:$0xff]
  %v1536 = vld [vmem:[%s5 + $0x20] sm:$0xff]
  %v1537 = vld [vmem:[%s5 + $0x28] sm:$0xff]
  %v1538 = vld [vmem:[%s5 + $0x30] sm:$0xff]
  %v1539 = vld [vmem:[%s5 + $0x38] sm:$0xff]
  %v1540 = vld [vmem:[%s5 + $0x40] sm:$0xff]
  %v1541 = vld [vmem:[%s5 + $0x48] sm:$0xff]
  %v1542 = vld [vmem:[%s5 + $0x50] sm:$0xff]
  %v1543 = vld [vmem:[%s5 + $0x58] sm:$0xff]
  %v1544 = vld [vmem:[#allocation4] sm:$0xff]
  %v1545 = vld [vmem:[#allocation4 + $0x8] sm:$0xff]
  %v1546 = vld [vmem:[#allocation4 + $0x10] sm:$0xff]
  %v1547 = vld [vmem:[#allocation4 + $0x18] sm:$0xff]
  %v1548 = vld [vmem:[#allocation4 + $0x20] sm:$0xff]
  %v1549 = vld [vmem:[#allocation4 + $0x28] sm:$0xff]
  %v1550 = vld [vmem:[#allocation4 + $0x30] sm:$0xff]
  %v1551 = vld [vmem:[#allocation4 + $0x38] sm:$0xff]
  %v1552 = vld [vmem:[#allocation4 + $0x40] sm:$0xff]
  %v1553 = vld [vmem:[#allocation4 + $0x48] sm:$0xff]
  %v1554 = vld [vmem:[#allocation4 + $0x50] sm:$0xff]
  %v1555 = vld [vmem:[#allocation4 + $0x58] sm:$0xff]
  %v1556 = vld [vmem:[#allocation4 + $0x60] sm:$0xff]
  %v1557 = vld [vmem:[#allocation4 + $0x68] sm:$0xff]
  %v1558 = vld [vmem:[#allocation4 + $0x70] sm:$0xff]
  %v1559 = vld [vmem:[#allocation4 + $0x78] sm:$0xff]
  %v1560 = vld [vmem:[#allocation4 + $0x80] sm:$0xff]
  %v1561 = vld [vmem:[#allocation4 + $0x88] sm:$0xff]
  %v1562 = vld [vmem:[#allocation4 + $0x90] sm:$0xff]
  %v1563 = vld [vmem:[#allocation4 + $0x98] sm:$0xff]
  %v1564 = vld [vmem:[#allocation4 + $0xa0] sm:$0xff]
  %v1565 = vld [vmem:[#allocation4 + $0xa8] sm:$0xff]
  %v1566 = vld [vmem:[#allocation4 + $0xb0] sm:$0xff]
  %v1567 = vld [vmem:[#allocation4 + $0xb8] sm:$0xff]
  %v1568 = vld [vmem:[#allocation4 + $0xc0] sm:$0xff]
  %v1569 = vld [vmem:[#allocation4 + $0xc8] sm:$0xff]
  %v1570 = vld [vmem:[#allocation4 + $0xd0] sm:$0xff]
  %v1571 = vld [vmem:[#allocation4 + $0xd8] sm:$0xff]
  %v1572 = vld [vmem:[#allocation4 + $0xe0] sm:$0xff]
  %v1573 = vld [vmem:[#allocation4 + $0xe8] sm:$0xff]
  %v1574 = vld [vmem:[#allocation4 + $0xf0] sm:$0xff]
  %v1575 = vld [vmem:[#allocation4 + $0xf8] sm:$0xff]
  %v1576 = vld [vmem:[#allocation4 + $0x100] sm:$0xff]
  %v1577 = vld [vmem:[#allocation4 + $0x108] sm:$0xff]
  %v1578 = vld [vmem:[#allocation4 + $0x110] sm:$0xff]
  %v1579 = vld [vmem:[#allocation4 + $0x118] sm:$0xff]
  %v1580 = vld [vmem:[#allocation4 + $0x120] sm:$0xff]
  %v1581 = vld [vmem:[#allocation4 + $0x128] sm:$0xff]
  %v1582 = vld [vmem:[#allocation4 + $0x130] sm:$0xff]
  %v1583 = vld [vmem:[#allocation4 + $0x138] sm:$0xff]
  %v1584 = vld [vmem:[#allocation4 + $0x140] sm:$0xff]
  %v1585 = vld [vmem:[#allocation4 + $0x148] sm:$0xff]
  %v1586 = vld [vmem:[#allocation4 + $0x150] sm:$0xff]
  %v1587 = vld [vmem:[#allocation4 + $0x158] sm:$0xff]
  %v1588 = vld [vmem:[#allocation4 + $0x160] sm:$0xff]
  %v1589 = vld [vmem:[#allocation4 + $0x168] sm:$0xff]
  %v1590 = vld [vmem:[#allocation4 + $0x170] sm:$0xff]
  %v1591 = vld [vmem:[#allocation4 + $0x178] sm:$0xff]
  %v1592 = vld [vmem:[#allocation4 + $0x180] sm:$0xff]
  %v1593 = vld [vmem:[#allocation4 + $0x188] sm:$0xff]
  %v1594 = vld [vmem:[#allocation4 + $0x190] sm:$0xff]
  %v1595 = vld [vmem:[#allocation4 + $0x198] sm:$0xff]
  %v1596 = vld [vmem:[#allocation4 + $0x1a0] sm:$0xff]
  %v1597 = vld [vmem:[#allocation4 + $0x1a8] sm:$0xff]
  %v1598 = vld [vmem:[#allocation4 + $0x1b0] sm:$0xff]
  %v1599 = vld [vmem:[#allocation4 + $0x1b8] sm:$0xff]
  %v1600 = vld [vmem:[#allocation4 + $0x1c0] sm:$0xff]
  %v1601 = vld [vmem:[#allocation4 + $0x1c8] sm:$0xff]
  %v1602 = vld [vmem:[#allocation4 + $0x1d0] sm:$0xff]
  %v1603 = vld [vmem:[#allocation4 + $0x1d8] sm:$0xff]
  %v1604 = vld [vmem:[#allocation4 + $0x1e0] sm:$0xff]
  %v1605 = vld [vmem:[#allocation4 + $0x1e8] sm:$0xff]
  %v1606 = vld [vmem:[#allocation4 + $0x1f0] sm:$0xff]
  %v1607 = vld [vmem:[#allocation4 + $0x1f8] sm:$0xff]
  %v1608 = vld [vmem:[#allocation4 + $0x200] sm:$0xff]
  %v1609 = vld [vmem:[#allocation4 + $0x208] sm:$0xff]
  %v1610 = vld [vmem:[#allocation4 + $0x210] sm:$0xff]
  %v1611 = vld [vmem:[#allocation4 + $0x218] sm:$0xff]
  %v1612 = vld [vmem:[#allocation4 + $0x220] sm:$0xff]
  %v1613 = vld [vmem:[#allocation4 + $0x228] sm:$0xff]
  %v1614 = vld [vmem:[#allocation4 + $0x230] sm:$0xff]
  %v1615 = vld [vmem:[#allocation4 + $0x238] sm:$0xff]
  %v1616 = vld [vmem:[#allocation4 + $0x240] sm:$0xff]
  %v1617 = vld [vmem:[#allocation4 + $0x248] sm:$0xff]
  %v1618 = vld [vmem:[#allocation4 + $0x250] sm:$0xff]
  %v1619 = vld [vmem:[#allocation4 + $0x258] sm:$0xff]
  %v1620 = vld [vmem:[#allocation4 + $0x260] sm:$0xff]
  %v1621 = vld [vmem:[#allocation4 + $0x268] sm:$0xff]
  %v1622 = vld [vmem:[#allocation4 + $0x270] sm:$0xff]
  %v1623 = vld [vmem:[#allocation4 + $0x278] sm:$0xff]
  %v1624 = vld [vmem:[#allocation4 + $0x280] sm:$0xff]
  %v1625 = vld [vmem:[#allocation4 + $0x288] sm:$0xff]
  %v1626 = vld [vmem:[#allocation4 + $0x290] sm:$0xff]
  %v1627 = vld [vmem:[#allocation4 + $0x298] sm:$0xff]
  %v1628 = vld [vmem:[#allocation4 + $0x2a0] sm:$0xff]
  %v1629 = vld [vmem:[#allocation4 + $0x2a8] sm:$0xff]
  %v1630 = vld [vmem:[#allocation4 + $0x2b0] sm:$0xff]
  %v1631 = vld [vmem:[#allocation4 + $0x2b8] sm:$0xff]
  %v1632 = vld [vmem:[#allocation4 + $0x2c0] sm:$0xff]
  %v1633 = vld [vmem:[#allocation4 + $0x2c8] sm:$0xff]
  %v1634 = vld [vmem:[#allocation4 + $0x2d0] sm:$0xff]
  %v1635 = vld [vmem:[#allocation4 + $0x2d8] sm:$0xff]
  %v1636 = vld [vmem:[#allocation4 + $0x2e0] sm:$0xff]
  %v1637 = vld [vmem:[#allocation4 + $0x2e8] sm:$0xff]
  %v1638 = vld [vmem:[#allocation4 + $0x2f0] sm:$0xff]
  %v1639 = vld [vmem:[#allocation4 + $0x2f8] sm:$0xff]
  %v1640 = vld [vmem:[#allocation4 + $0x300] sm:$0xff]
  %v1641 = vld [vmem:[#allocation4 + $0x308] sm:$0xff]
  %v1642 = vld [vmem:[#allocation4 + $0x310] sm:$0xff]
  %v1643 = vld [vmem:[#allocation4 + $0x318] sm:$0xff]
  %v1644 = vld [vmem:[#allocation4 + $0x320] sm:$0xff]
  %v1645 = vld [vmem:[#allocation4 + $0x328] sm:$0xff]
  %v1646 = vld [vmem:[#allocation4 + $0x330] sm:$0xff]
  %v1647 = vld [vmem:[#allocation4 + $0x338] sm:$0xff]
  %v1648 = vld [vmem:[#allocation4 + $0x340] sm:$0xff]
  %v1649 = vld [vmem:[#allocation4 + $0x348] sm:$0xff]
  %v1650 = vld [vmem:[#allocation4 + $0x350] sm:$0xff]
  %v1651 = vld [vmem:[#allocation4 + $0x358] sm:$0xff]
  %v1652 = vld [vmem:[#allocation4 + $0x360] sm:$0xff]
  %v1653 = vld [vmem:[#allocation4 + $0x368] sm:$0xff]
  %v1654 = vld [vmem:[#allocation4 + $0x370] sm:$0xff]
  %v1655 = vld [vmem:[#allocation4 + $0x378] sm:$0xff]
  %v1656 = vld [vmem:[#allocation4 + $0x380] sm:$0xff]
  %v1657 = vld [vmem:[#allocation4 + $0x388] sm:$0xff]
  %v1658 = vld [vmem:[#allocation4 + $0x390] sm:$0xff]
  %v1659 = vld [vmem:[#allocation4 + $0x398] sm:$0xff]
  %v1660 = vld [vmem:[#allocation4 + $0x3a0] sm:$0xff]
  %v1661 = vld [vmem:[#allocation4 + $0x3a8] sm:$0xff]
  %v1662 = vld [vmem:[#allocation4 + $0x3b0] sm:$0xff]
  %v1663 = vld [vmem:[#allocation4 + $0x3b8] sm:$0xff]
  %v1664 = vld [vmem:[#allocation4 + $0x3c0] sm:$0xff]
  %v1665 = vld [vmem:[#allocation4 + $0x3c8] sm:$0xff]
  %v1666 = vld [vmem:[#allocation4 + $0x3d0] sm:$0xff]
  %v1667 = vld [vmem:[#allocation4 + $0x3d8] sm:$0xff]
  %v1668 = vld [vmem:[#allocation4 + $0x3e0] sm:$0xff]
  %v1669 = vld [vmem:[#allocation4 + $0x3e8] sm:$0xff]
  %v1670 = vld [vmem:[#allocation4 + $0x3f0] sm:$0xff]
  %v1671 = vld [vmem:[#allocation4 + $0x3f8] sm:$0xff]
  %v1672 = vld [vmem:[#allocation4 + $0x400] sm:$0xff]
  %v1673 = vld [vmem:[#allocation4 + $0x408] sm:$0xff]
  %v1674 = vld [vmem:[#allocation4 + $0x410] sm:$0xff]
  %v1675 = vld [vmem:[#allocation4 + $0x418] sm:$0xff]
  %v1676 = vld [vmem:[#allocation4 + $0x420] sm:$0xff]
  %v1677 = vld [vmem:[#allocation4 + $0x428] sm:$0xff]
  %v1678 = vld [vmem:[#allocation4 + $0x430] sm:$0xff]
  %v1679 = vld [vmem:[#allocation4 + $0x438] sm:$0xff]
  %v1680 = vld [vmem:[#allocation4 + $0x440] sm:$0xff]
  %v1681 = vld [vmem:[#allocation4 + $0x448] sm:$0xff]
  %v1682 = vld [vmem:[#allocation4 + $0x450] sm:$0xff]
  %v1683 = vld [vmem:[#allocation4 + $0x458] sm:$0xff]
  %v1684 = vld [vmem:[#allocation4 + $0x460] sm:$0xff]
  %v1685 = vld [vmem:[#allocation4 + $0x468] sm:$0xff]
  %v1686 = vld [vmem:[#allocation4 + $0x470] sm:$0xff]
  %v1687 = vld [vmem:[#allocation4 + $0x478] sm:$0xff]
  %v1688 = vld [vmem:[%s6] sm:$0xff]
  %v1689 = vld [vmem:[%s6 + $0x8] sm:$0xff]
  %v1690 = vld [vmem:[%s6 + $0x10] sm:$0xff]
  %v1691 = vld [vmem:[%s6 + $0x18] sm:$0xff]
  %1693 = vset.pattern.permute.xlu0 0
  %1694 = vperm.xlu0 %1693, %v1688
  %v1695 = vpop.permute.xlu0 %1694
  %1698 = vset.pattern.permute.xlu0 0
  %1699 = vperm.xlu0 %1698, %v1689
  %v1700 = vpop.permute.xlu0 %1699
  %1703 = vset.pattern.permute.xlu0 0
  %1704 = vperm.xlu0 %1703, %v1690
  %v1705 = vpop.permute.xlu0 %1704
  %1708 = vset.pattern.permute.xlu0 0
  %1709 = vperm.xlu0 %1708, %v1691
  %v1710 = vpop.permute.xlu0 %1709
  %vm1712 = vcmask 261120
  %v1714 = vsel %vm1712, %v1534, 0
  %v1717 = vsel %vm1712, %v1537, 0
  %v1720 = vsel %vm1712, %v1540, 0
  %v1723 = vsel %vm1712, %v1543, 0
  %1725 = vmatpush.msra.mxu0 %v1604
  %1726 = vmatpush.msra.mxu0 %v1600
  %1727 = vmatpush.msra.mxu0 %v1596
  %1728 = vmatpush.msra.mxu0 %v1592
  %1729 = vmatpush.msra.mxu0 %v1588
  %1730 = vmatpush.msra.mxu0 %v1584
  %1731 = vmatpush.msra.mxu0 %v1580
  %1732 = vmatpush.msra.mxu0 %v1576
  %1733 = vmatpush.msra.mxu0 %v1572
  %1734 = vmatpush.msra.mxu0 %v1568
  %1735 = vmatpush.msra.mxu0 %v1564
  %1736 = vmatpush.msra.mxu0 %v1560
  %1737 = vmatpush.msra.mxu0 %v1556
  %1738 = vmatpush.msra.mxu0 %v1552
  %1739 = vmatpush.msra.mxu0 %v1548
  %1740 = vmatpush.msra.mxu0 %v1544
  %1741 = vmatmul.f32.gmra.mxu0 %v1532
  %v1742 = vpop.f32.mrf.mxu0
  %v1743 = vadd.f32 %v1695, %v1742
  %1744 = vmatmul.f32.gmra.mxu0 %v1535
  %v1745 = vpop.f32.mrf.mxu0
  %v1746 = vadd.f32 %v1700, %v1745
  %1747 = vmatmul.f32.gmra.mxu0 %v1538
  %v1748 = vpop.f32.mrf.mxu0
  %v1749 = vadd.f32 %v1705, %v1748
  %1750 = vmatmul.f32.gmra.mxu0 %v1541
  %v1751 = vpop.f32.mrf.mxu0
  %v1752 = vadd.f32 %v1710, %v1751
  %1753 = vdwg.mxu0
  %1754 = vmatpush.msra.mxu0 %v1668
  %1755 = vmatpush.msra.mxu0 %v1664
  %1756 = vmatpush.msra.mxu0 %v1660
  %1757 = vmatpush.msra.mxu0 %v1656
  %1758 = vmatpush.msra.mxu0 %v1652
  %1759 = vmatpush.msra.mxu0 %v1648
  %1760 = vmatpush.msra.mxu0 %v1644
  %1761 = vmatpush.msra.mxu0 %v1640
  %1762 = vmatpush.msra.mxu0 %v1636
  %1763 = vmatpush.msra.mxu0 %v1632
  %1764 = vmatpush.msra.mxu0 %v1628
  %1765 = vmatpush.msra.mxu0 %v1624
  %1766 = vmatpush.msra.mxu0 %v1620
  %1767 = vmatpush.msra.mxu0 %v1616
  %1768 = vmatpush.msra.mxu0 %v1612
  %1769 = vmatpush.msra.mxu0 %v1608
  %1770 = vmatmul.f32.gmra.mxu0 %v1533
  %v1771 = vpop.f32.mrf.mxu0
  %v1772 = vadd.f32 %v1743, %v1771
  %1773 = vmatmul.f32.gmra.mxu0 %v1536
  %v1774 = vpop.f32.mrf.mxu0
  %v1775 = vadd.f32 %v1746, %v1774
  %1776 = vmatmul.f32.gmra.mxu0 %v1539
  %v1777 = vpop.f32.mrf.mxu0
  %v1778 = vadd.f32 %v1749, %v1777
  %1779 = vmatmul.f32.gmra.mxu0 %v1542
  %v1780 = vpop.f32.mrf.mxu0
  %v1781 = vadd.f32 %v1752, %v1780
  %1782 = vdwg.mxu0
  %1783 = vmatpush.msra.mxu0 0.0
  %1784 = vmatpush.msra.mxu0 0.0
  %1785 = vmatpush.msra.mxu0 0.0
  %1786 = vmatpush.msra.mxu0 0.0
  %1787 = vmatpush.msra.mxu0 0.0
  %1788 = vmatpush.msra.mxu0 0.0
  %1789 = vmatpush.msra.mxu0 0.0
  %1790 = vmatpush.msra.mxu0 0.0
  %1791 = vmatpush.msra.mxu0 0.0
  %1792 = vmatpush.msra.mxu0 0.0
  %1793 = vmatpush.msra.mxu0 0.0
  %1794 = vmatpush.msra.mxu0 0.0
  %1795 = vmatpush.msra.mxu0 %v1684
  %1796 = vmatpush.msra.mxu0 %v1680
  %1797 = vmatpush.msra.mxu0 %v1676
  %1798 = vmatpush.msra.mxu0 %v1672
  %1799 = vmatmul.f32.gmra.mxu0 %v1714
  %v1800 = vpop.f32.mrf.mxu0
  %v1801 = vadd.f32 %v1772, %v1800
  %1802 = vmatmul.f32.gmra.mxu0 %v1717
  %v1803 = vpop.f32.mrf.mxu0
  %v1804 = vadd.f32 %v1775, %v1803
  %1805 = vmatmul.f32.gmra.mxu0 %v1720
  %v1806 = vpop.f32.mrf.mxu0
  %v1807 = vadd.f32 %v1778, %v1806
  %1808 = vmatmul.f32.gmra.mxu0 %v1723
  %v1809 = vpop.f32.mrf.mxu0
  %v1810 = vadd.f32 %v1781, %v1809
  %1811 = vdwg.mxu0
  %1812 = vmatpush.msra.mxu0 %v1605
  %1813 = vmatpush.msra.mxu0 %v1601
  %1814 = vmatpush.msra.mxu0 %v1597
  %1815 = vmatpush.msra.mxu0 %v1593
  %1816 = vmatpush.msra.mxu0 %v1589
  %1817 = vmatpush.msra.mxu0 %v1585
  %1818 = vmatpush.msra.mxu0 %v1581
  %1819 = vmatpush.msra.mxu0 %v1577
  %1820 = vmatpush.msra.mxu0 %v1573
  %1821 = vmatpush.msra.mxu0 %v1569
  %1822 = vmatpush.msra.mxu0 %v1565
  %1823 = vmatpush.msra.mxu0 %v1561
  %1824 = vmatpush.msra.mxu0 %v1557
  %1825 = vmatpush.msra.mxu0 %v1553
  %1826 = vmatpush.msra.mxu0 %v1549
  %1827 = vmatpush.msra.mxu0 %v1545
  %1828 = vmatmul.f32.gmra.mxu0 %v1532
  %v1829 = vpop.f32.mrf.mxu0
  %v1830 = vadd.f32 %v1695, %v1829
  %1831 = vmatmul.f32.gmra.mxu0 %v1535
  %v1832 = vpop.f32.mrf.mxu0
  %v1833 = vadd.f32 %v1700, %v1832
  %1834 = vmatmul.f32.gmra.mxu0 %v1538
  %v1835 = vpop.f32.mrf.mxu0
  %v1836 = vadd.f32 %v1705, %v1835
  %1837 = vmatmul.f32.gmra.mxu0 %v1541
  %v1838 = vpop.f32.mrf.mxu0
  %v1839 = vadd.f32 %v1710, %v1838
  %1840 = vdwg.mxu0
  %1841 = vmatpush.msra.mxu0 %v1669
  %1842 = vmatpush.msra.mxu0 %v1665
  %1843 = vmatpush.msra.mxu0 %v1661
  %1844 = vmatpush.msra.mxu0 %v1657
  %1845 = vmatpush.msra.mxu0 %v1653
  %1846 = vmatpush.msra.mxu0 %v1649
  %1847 = vmatpush.msra.mxu0 %v1645
  %1848 = vmatpush.msra.mxu0 %v1641
  %1849 = vmatpush.msra.mxu0 %v1637
  %1850 = vmatpush.msra.mxu0 %v1633
  %1851 = vmatpush.msra.mxu0 %v1629
  %1852 = vmatpush.msra.mxu0 %v1625
  %1853 = vmatpush.msra.mxu0 %v1621
  %1854 = vmatpush.msra.mxu0 %v1617
  %1855 = vmatpush.msra.mxu0 %v1613
  %1856 = vmatpush.msra.mxu0 %v1609
  %1857 = vmatmul.f32.gmra.mxu0 %v1533
  %v1858 = vpop.f32.mrf.mxu0
  %v1859 = vadd.f32 %v1830, %v1858
  %1860 = vmatmul.f32.gmra.mxu0 %v1536
  %v1861 = vpop.f32.mrf.mxu0
  %v1862 = vadd.f32 %v1833, %v1861
  %1863 = vmatmul.f32.gmra.mxu0 %v1539
  %v1864 = vpop.f32.mrf.mxu0
  %v1865 = vadd.f32 %v1836, %v1864
  %1866 = vmatmul.f32.gmra.mxu0 %v1542
  %v1867 = vpop.f32.mrf.mxu0
  %v1868 = vadd.f32 %v1839, %v1867
  %1869 = vdwg.mxu0
  %1870 = vmatpush.msra.mxu0 0.0
  %1871 = vmatpush.msra.mxu0 0.0
  %1872 = vmatpush.msra.mxu0 0.0
  %1873 = vmatpush.msra.mxu0 0.0
  %1874 = vmatpush.msra.mxu0 0.0
  %1875 = vmatpush.msra.mxu0 0.0
  %1876 = vmatpush.msra.mxu0 0.0
  %1877 = vmatpush.msra.mxu0 0.0
  %1878 = vmatpush.msra.mxu0 0.0
  %1879 = vmatpush.msra.mxu0 0.0
  %1880 = vmatpush.msra.mxu0 0.0
  %1881 = vmatpush.msra.mxu0 0.0
  %1882 = vmatpush.msra.mxu0 %v1685
  %1883 = vmatpush.msra.mxu0 %v1681
  %1884 = vmatpush.msra.mxu0 %v1677
  %1885 = vmatpush.msra.mxu0 %v1673
  %1886 = vmatmul.f32.gmra.mxu0 %v1714
  %v1887 = vpop.f32.mrf.mxu0
  %v1888 = vadd.f32 %v1859, %v1887
  %1889 = vmatmul.f32.gmra.mxu0 %v1717
  %v1890 = vpop.f32.mrf.mxu0
  %v1891 = vadd.f32 %v1862, %v1890
  %1892 = vmatmul.f32.gmra.mxu0 %v1720
  %v1893 = vpop.f32.mrf.mxu0
  %v1894 = vadd.f32 %v1865, %v1893
  %1895 = vmatmul.f32.gmra.mxu0 %v1723
  %v1896 = vpop.f32.mrf.mxu0
  %v1897 = vadd.f32 %v1868, %v1896
  %1898 = vdwg.mxu0
  %1899 = vmatpush.msra.mxu0 %v1606
  %1900 = vmatpush.msra.mxu0 %v1602
  %1901 = vmatpush.msra.mxu0 %v1598
  %1902 = vmatpush.msra.mxu0 %v1594
  %1903 = vmatpush.msra.mxu0 %v1590
  %1904 = vmatpush.msra.mxu0 %v1586
  %1905 = vmatpush.msra.mxu0 %v1582
  %1906 = vmatpush.msra.mxu0 %v1578
  %1907 = vmatpush.msra.mxu0 %v1574
  %1908 = vmatpush.msra.mxu0 %v1570
  %1909 = vmatpush.msra.mxu0 %v1566
  %1910 = vmatpush.msra.mxu0 %v1562
  %1911 = vmatpush.msra.mxu0 %v1558
  %1912 = vmatpush.msra.mxu0 %v1554
  %1913 = vmatpush.msra.mxu0 %v1550
  %1914 = vmatpush.msra.mxu0 %v1546
  %1915 = vmatmul.f32.gmra.mxu0 %v1532
  %v1916 = vpop.f32.mrf.mxu0
  %v1917 = vadd.f32 %v1695, %v1916
  %1918 = vmatmul.f32.gmra.mxu0 %v1535
  %v1919 = vpop.f32.mrf.mxu0
  %v1920 = vadd.f32 %v1700, %v1919
  %1921 = vmatmul.f32.gmra.mxu0 %v1538
  %v1922 = vpop.f32.mrf.mxu0
  %v1923 = vadd.f32 %v1705, %v1922
  %1924 = vmatmul.f32.gmra.mxu0 %v1541
  %v1925 = vpop.f32.mrf.mxu0
  %v1926 = vadd.f32 %v1710, %v1925
  %1927 = vdwg.mxu0
  %1928 = vmatpush.msra.mxu0 %v1670
  %1929 = vmatpush.msra.mxu0 %v1666
  %1930 = vmatpush.msra.mxu0 %v1662
  %1931 = vmatpush.msra.mxu0 %v1658
  %1932 = vmatpush.msra.mxu0 %v1654
  %1933 = vmatpush.msra.mxu0 %v1650
  %1934 = vmatpush.msra.mxu0 %v1646
  %1935 = vmatpush.msra.mxu0 %v1642
  %1936 = vmatpush.msra.mxu0 %v1638
  %1937 = vmatpush.msra.mxu0 %v1634
  %1938 = vmatpush.msra.mxu0 %v1630
  %1939 = vmatpush.msra.mxu0 %v1626
  %1940 = vmatpush.msra.mxu0 %v1622
  %1941 = vmatpush.msra.mxu0 %v1618
  %1942 = vmatpush.msra.mxu0 %v1614
  %1943 = vmatpush.msra.mxu0 %v1610
  %1944 = vmatmul.f32.gmra.mxu0 %v1533
  %v1945 = vpop.f32.mrf.mxu0
  %v1946 = vadd.f32 %v1917, %v1945
  %1947 = vmatmul.f32.gmra.mxu0 %v1536
  %v1948 = vpop.f32.mrf.mxu0
  %v1949 = vadd.f32 %v1920, %v1948
  %1950 = vmatmul.f32.gmra.mxu0 %v1539
  %v1951 = vpop.f32.mrf.mxu0
  %v1952 = vadd.f32 %v1923, %v1951
  %1953 = vmatmul.f32.gmra.mxu0 %v1542
  %v1954 = vpop.f32.mrf.mxu0
  %v1955 = vadd.f32 %v1926, %v1954
  %1956 = vdwg.mxu0
  %1957 = vmatpush.msra.mxu0 0.0
  %1958 = vmatpush.msra.mxu0 0.0
  %1959 = vmatpush.msra.mxu0 0.0
  %1960 = vmatpush.msra.mxu0 0.0
  %1961 = vmatpush.msra.mxu0 0.0
  %1962 = vmatpush.msra.mxu0 0.0
  %1963 = vmatpush.msra.mxu0 0.0
  %1964 = vmatpush.msra.mxu0 0.0
  %1965 = vmatpush.msra.mxu0 0.0
  %1966 = vmatpush.msra.mxu0 0.0
  %1967 = vmatpush.msra.mxu0 0.0
  %1968 = vmatpush.msra.mxu0 0.0
  %1969 = vmatpush.msra.mxu0 %v1686
  %1970 = vmatpush.msra.mxu0 %v1682
  %1971 = vmatpush.msra.mxu0 %v1678
  %1972 = vmatpush.msra.mxu0 %v1674
  %1973 = vmatmul.f32.gmra.mxu0 %v1714
  %v1974 = vpop.f32.mrf.mxu0
  %v1975 = vadd.f32 %v1946, %v1974
  %1976 = vmatmul.f32.gmra.mxu0 %v1717
  %v1977 = vpop.f32.mrf.mxu0
  %v1978 = vadd.f32 %v1949, %v1977
  %1979 = vmatmul.f32.gmra.mxu0 %v1720
  %v1980 = vpop.f32.mrf.mxu0
  %v1981 = vadd.f32 %v1952, %v1980
  %1982 = vmatmul.f32.gmra.mxu0 %v1723
  %v1983 = vpop.f32.mrf.mxu0
  %v1984 = vadd.f32 %v1955, %v1983
  %1985 = vdwg.mxu0
  %1986 = vmatpush.msra.mxu0 %v1607
  %1987 = vmatpush.msra.mxu0 %v1603
  %1988 = vmatpush.msra.mxu0 %v1599
  %1989 = vmatpush.msra.mxu0 %v1595
  %1990 = vmatpush.msra.mxu0 %v1591
  %1991 = vmatpush.msra.mxu0 %v1587
  %1992 = vmatpush.msra.mxu0 %v1583
  %1993 = vmatpush.msra.mxu0 %v1579
  %1994 = vmatpush.msra.mxu0 %v1575
  %1995 = vmatpush.msra.mxu0 %v1571
  %1996 = vmatpush.msra.mxu0 %v1567
  %1997 = vmatpush.msra.mxu0 %v1563
  %1998 = vmatpush.msra.mxu0 %v1559
  %1999 = vmatpush.msra.mxu0 %v1555
  %2000 = vmatpush.msra.mxu0 %v1551
  %2001 = vmatpush.msra.mxu0 %v1547
  %2002 = vmatmul.f32.gmra.mxu0 %v1532
  %v2003 = vpop.f32.mrf.mxu0
  %v2004 = vadd.f32 %v1695, %v2003
  %2005 = vmatmul.f32.gmra.mxu0 %v1535
  %v2006 = vpop.f32.mrf.mxu0
  %v2007 = vadd.f32 %v1700, %v2006
  %2008 = vmatmul.f32.gmra.mxu0 %v1538
  %v2009 = vpop.f32.mrf.mxu0
  %v2010 = vadd.f32 %v1705, %v2009
  %2011 = vmatmul.f32.gmra.mxu0 %v1541
  %v2012 = vpop.f32.mrf.mxu0
  %v2013 = vadd.f32 %v1710, %v2012
  %2014 = vdwg.mxu0
  %2015 = vmatpush.msra.mxu0 %v1671
  %2016 = vmatpush.msra.mxu0 %v1667
  %2017 = vmatpush.msra.mxu0 %v1663
  %2018 = vmatpush.msra.mxu0 %v1659
  %2019 = vmatpush.msra.mxu0 %v1655
  %2020 = vmatpush.msra.mxu0 %v1651
  %2021 = vmatpush.msra.mxu0 %v1647
  %2022 = vmatpush.msra.mxu0 %v1643
  %2023 = vmatpush.msra.mxu0 %v1639
  %2024 = vmatpush.msra.mxu0 %v1635
  %2025 = vmatpush.msra.mxu0 %v1631
  %2026 = vmatpush.msra.mxu0 %v1627
  %2027 = vmatpush.msra.mxu0 %v1623
  %2028 = vmatpush.msra.mxu0 %v1619
  %2029 = vmatpush.msra.mxu0 %v1615
  %2030 = vmatpush.msra.mxu0 %v1611
  %2031 = vmatmul.f32.gmra.mxu0 %v1533
  %v2032 = vpop.f32.mrf.mxu0
  %v2033 = vadd.f32 %v2004, %v2032
  %2034 = vmatmul.f32.gmra.mxu0 %v1536
  %v2035 = vpop.f32.mrf.mxu0
  %v2036 = vadd.f32 %v2007, %v2035
  %2037 = vmatmul.f32.gmra.mxu0 %v1539
  %v2038 = vpop.f32.mrf.mxu0
  %v2039 = vadd.f32 %v2010, %v2038
  %2040 = vmatmul.f32.gmra.mxu0 %v1542
  %v2041 = vpop.f32.mrf.mxu0
  %v2042 = vadd.f32 %v2013, %v2041
  %2043 = vdwg.mxu0
  %2044 = vmatpush.msra.mxu0 0.0
  %2045 = vmatpush.msra.mxu0 0.0
  %2046 = vmatpush.msra.mxu0 0.0
  %2047 = vmatpush.msra.mxu0 0.0
  %2048 = vmatpush.msra.mxu0 0.0
  %2049 = vmatpush.msra.mxu0 0.0
  %2050 = vmatpush.msra.mxu0 0.0
  %2051 = vmatpush.msra.mxu0 0.0
  %2052 = vmatpush.msra.mxu0 0.0
  %2053 = vmatpush.msra.mxu0 0.0
  %2054 = vmatpush.msra.mxu0 0.0
  %2055 = vmatpush.msra.mxu0 0.0
  %2056 = vmatpush.msra.mxu0 %v1687
  %2057 = vmatpush.msra.mxu0 %v1683
  %2058 = vmatpush.msra.mxu0 %v1679
  %2059 = vmatpush.msra.mxu0 %v1675
  %2060 = vmatmul.f32.gmra.mxu0 %v1714
  %v2061 = vpop.f32.mrf.mxu0
  %v2062 = vadd.f32 %v2033, %v2061
  %2063 = vmatmul.f32.gmra.mxu0 %v1717
  %v2064 = vpop.f32.mrf.mxu0
  %v2065 = vadd.f32 %v2036, %v2064
  %2066 = vmatmul.f32.gmra.mxu0 %v1720
  %v2067 = vpop.f32.mrf.mxu0
  %v2068 = vadd.f32 %v2039, %v2067
  %2069 = vmatmul.f32.gmra.mxu0 %v1723
  %v2070 = vpop.f32.mrf.mxu0
  %v2071 = vadd.f32 %v2042, %v2070
  %2072 = vdwg.mxu0
  %v2073 = vld [vmem:[%s7] sm:$0xff]
  %v2074 = vld [vmem:[%s7 + $0x8] sm:$0xff]
  %v2075 = vld [vmem:[%s7 + $0x10] sm:$0xff]
  %v2076 = vld [vmem:[%s7 + $0x18] sm:$0xff]
  %vm2077 = vcmp.gt.f32.partialorder %v1801, 0.0
  %vm2078 = vcmp.gt.f32.partialorder %v1888, 0.0
  %vm2079 = vcmp.gt.f32.partialorder %v1975, 0.0
  %vm2080 = vcmp.gt.f32.partialorder %v2062, 0.0
  %vm2081 = vcmp.gt.f32.partialorder %v1804, 0.0
  %vm2082 = vcmp.gt.f32.partialorder %v1891, 0.0
  %vm2083 = vcmp.gt.f32.partialorder %v1978, 0.0
  %vm2084 = vcmp.gt.f32.partialorder %v2065, 0.0
  %vm2085 = vcmp.gt.f32.partialorder %v1807, 0.0
  %vm2086 = vcmp.gt.f32.partialorder %v1894, 0.0
  %vm2087 = vcmp.gt.f32.partialorder %v1981, 0.0
  %vm2088 = vcmp.gt.f32.partialorder %v2068, 0.0
  %vm2089 = vcmp.gt.f32.partialorder %v1810, 0.0
  %vm2090 = vcmp.gt.f32.partialorder %v1897, 0.0
  %vm2091 = vcmp.gt.f32.partialorder %v1984, 0.0
  %vm2092 = vcmp.gt.f32.partialorder %v2071, 0.0
  %2094 = vset.pattern.permute.xlu0 0
  %2095 = vperm.xlu0 %2094, %v2073
  %v2096 = vpop.permute.xlu0 %2095
  %2099 = vset.pattern.permute.xlu0 0
  %2100 = vperm.xlu0 %2099, %v2074
  %v2101 = vpop.permute.xlu0 %2100
  %2104 = vset.pattern.permute.xlu0 0
  %2105 = vperm.xlu0 %2104, %v2075
  %v2106 = vpop.permute.xlu0 %2105
  %2109 = vset.pattern.permute.xlu0 0
  %2110 = vperm.xlu0 %2109, %v2076
  %v2111 = vpop.permute.xlu0 %2110
  %v2113 = vmul.f32 %v2096, %v1801
  %v2114 = vmul.f32 %v2096, %v1888
  %v2115 = vmul.f32 %v2096, %v1975
  %v2116 = vmul.f32 %v2096, %v2062
  %v2117 = vmul.f32 %v2101, %v1804
  %v2118 = vmul.f32 %v2101, %v1891
  %v2119 = vmul.f32 %v2101, %v1978
  %v2120 = vmul.f32 %v2101, %v2065
  %v2121 = vmul.f32 %v2106, %v1807
  %v2122 = vmul.f32 %v2106, %v1894
  %v2123 = vmul.f32 %v2106, %v1981
  %v2124 = vmul.f32 %v2106, %v2068
  %v2125 = vmul.f32 %v2111, %v1810
  %v2126 = vmul.f32 %v2111, %v1897
  %v2127 = vmul.f32 %v2111, %v1984
  %v2128 = vmul.f32 %v2111, %v2071
  %v2129 = vsel %vm2077, %v1801, %v2113
  %v2130 = vsel %vm2078, %v1888, %v2114
  %v2131 = vsel %vm2079, %v1975, %v2115
  %v2132 = vsel %vm2080, %v2062, %v2116
  %v2133 = vsel %vm2081, %v1804, %v2117
  %v2134 = vsel %vm2082, %v1891, %v2118
  %v2135 = vsel %vm2083, %v1978, %v2119
  %v2136 = vsel %vm2084, %v2065, %v2120
  %v2137 = vsel %vm2085, %v1807, %v2121
  %v2138 = vsel %vm2086, %v1894, %v2122
  %v2139 = vsel %vm2087, %v1981, %v2123
  %v2140 = vsel %vm2088, %v2068, %v2124
  %v2141 = vsel %vm2089, %v1810, %v2125
  %v2142 = vsel %vm2090, %v1897, %v2126
  %v2143 = vsel %vm2091, %v1984, %v2127
  %v2144 = vsel %vm2092, %v2071, %v2128
  %2145 = vst [vmem:[#allocation2] sm:$0xff] %v2129
  %2146 = vst [vmem:[#allocation2 + $0x8] sm:$0xff] %v2130
  %2147 = vst [vmem:[#allocation2 + $0x10] sm:$0xff] %v2131
  %2148 = vst [vmem:[#allocation2 + $0x18] sm:$0xff] %v2132
  %2149 = vst [vmem:[#allocation2 + $0x20] sm:$0xff] %v2133
  %2150 = vst [vmem:[#allocation2 + $0x28] sm:$0xff] %v2134
  %2151 = vst [vmem:[#allocation2 + $0x30] sm:$0xff] %v2135
  %2152 = vst [vmem:[#allocation2 + $0x38] sm:$0xff] %v2136
  %2153 = vst [vmem:[#allocation2 + $0x40] sm:$0xff] %v2137
  %2154 = vst [vmem:[#allocation2 + $0x48] sm:$0xff] %v2138
  %2155 = vst [vmem:[#allocation2 + $0x50] sm:$0xff] %v2139
  %2156 = vst [vmem:[#allocation2 + $0x58] sm:$0xff] %v2140
  %2157 = vst [vmem:[#allocation2 + $0x60] sm:$0xff] %v2141
  %2158 = vst [vmem:[#allocation2 + $0x68] sm:$0xff] %v2142
  %2159 = vst [vmem:[#allocation2 + $0x70] sm:$0xff] %v2143
  %2160 = vst [vmem:[#allocation2 + $0x78] sm:$0xff] %v2144
  %v2161 = vld [vmem:[%s8] sm:$0xff]
  %v2162 = vld [vmem:[#allocation2] sm:$0xff]
  %v2163 = vld [vmem:[#allocation2 + $0x8] sm:$0xff]
  %v2164 = vld [vmem:[#allocation2 + $0x10] sm:$0xff]
  %v2165 = vld [vmem:[#allocation2 + $0x18] sm:$0xff]
  %v2166 = vld [vmem:[#allocation2 + $0x20] sm:$0xff]
  %v2167 = vld [vmem:[#allocation2 + $0x28] sm:$0xff]
  %v2168 = vld [vmem:[#allocation2 + $0x30] sm:$0xff]
  %v2169 = vld [vmem:[#allocation2 + $0x38] sm:$0xff]
  %v2170 = vld [vmem:[#allocation2 + $0x40] sm:$0xff]
  %v2171 = vld [vmem:[#allocation2 + $0x48] sm:$0xff]
  %v2172 = vld [vmem:[#allocation2 + $0x50] sm:$0xff]
  %v2173 = vld [vmem:[#allocation2 + $0x58] sm:$0xff]
  %v2174 = vld [vmem:[#allocation2 + $0x60] sm:$0xff]
  %v2175 = vld [vmem:[#allocation2 + $0x68] sm:$0xff]
  %v2176 = vld [vmem:[#allocation2 + $0x70] sm:$0xff]
  %v2177 = vld [vmem:[#allocation2 + $0x78] sm:$0xff]
  %2178 = vrot.lane.b32.xlu0 %v2162, 17
  %v2179 = vpop.permute.xlu0 %2178
  %2180 = vrot.lane.b32.xlu0 %v2166, 17
  %v2181 = vpop.permute.xlu0 %2180
  %2182 = vrot.lane.b32.xlu0 %v2170, 17
  %v2183 = vpop.permute.xlu0 %2182
  %2184 = vrot.lane.b32.xlu0 %v2174, 17
  %v2185 = vpop.permute.xlu0 %2184
  %2186 = vrot.lane.b32.xlu0 %v2163, 17
  %v2187 = vpop.permute.xlu0 %2186
  %2188 = vrot.lane.b32.xlu0 %v2167, 17
  %v2189 = vpop.permute.xlu0 %2188
  %2190 = vrot.lane.b32.xlu0 %v2171, 17
  %v2191 = vpop.permute.xlu0 %2190
  %2192 = vrot.lane.b32.xlu0 %v2175, 17
  %v2193 = vpop.permute.xlu0 %2192
  %2194 = vrot.lane.b32.xlu0 %v2164, 17
  %v2195 = vpop.permute.xlu0 %2194
  %2196 = vrot.lane.b32.xlu0 %v2168, 17
  %v2197 = vpop.permute.xlu0 %2196
  %2198 = vrot.lane.b32.xlu0 %v2172, 17
  %v2199 = vpop.permute.xlu0 %2198
  %2200 = vrot.lane.b32.xlu0 %v2176, 17
  %v2201 = vpop.permute.xlu0 %2200
  %2202 = vrot.lane.b32.xlu0 %v2165, 17
  %v2203 = vpop.permute.xlu0 %2202
  %2204 = vrot.lane.b32.xlu0 %v2169, 17
  %v2205 = vpop.permute.xlu0 %2204
  %2206 = vrot.lane.b32.xlu0 %v2173, 17
  %v2207 = vpop.permute.xlu0 %2206
  %2208 = vrot.lane.b32.xlu0 %v2177, 17
  %v2209 = vpop.permute.xlu0 %2208
  %v2210 = vsel %vm63, %v2195, %v2203
  %v2211 = vsel %vm63, %v2197, %v2205
  %v2212 = vsel %vm63, %v2199, %v2207
  %v2213 = vsel %vm63, %v2201, %v2209
  %v2214 = vsel %vm63, %v2187, %v2195
  %v2215 = vsel %vm63, %v2189, %v2197
  %v2216 = vsel %vm63, %v2191, %v2199
  %v2217 = vsel %vm63, %v2193, %v2201
  %v2218 = vsel %vm63, %v2179, %v2187
  %v2219 = vsel %vm63, %v2181, %v2189
  %v2220 = vsel %vm63, %v2183, %v2191
  %v2221 = vsel %vm63, %v2185, %v2193
  %v2222 = vsel %vm63, %v2203, %v2179
  %v2223 = vsel %vm63, %v2205, %v2181
  %v2224 = vsel %vm63, %v2207, %v2183
  %v2225 = vsel %vm63, %v2209, %v2185
  %v2226 = vld [vmem:[%s0] ss:$8 sm:$0xf]
  %v2228 = vperm.slane %v2226, 0
  %v2229 = vperm.slane %v2226, 1
  %v2230 = vperm.slane %v2226, 2
  %v2231 = vperm.slane %v2226, 3
  %v2236 = vmul.f32 %v2222, %v2228
  %v2237 = vmul.f32 %v2218, %v2229
  %v2238 = vmul.f32 %v2214, %v2230
  %v2239 = vmul.f32 %v2210, %v2231
  %v2240 = vmul.f32 %v2223, %v2228
  %v2241 = vmul.f32 %v2219, %v2229
  %v2242 = vmul.f32 %v2215, %v2230
  %v2243 = vmul.f32 %v2211, %v2231
  %v2244 = vmul.f32 %v2224, %v2228
  %v2245 = vmul.f32 %v2220, %v2229
  %v2246 = vmul.f32 %v2216, %v2230
  %v2247 = vmul.f32 %v2212, %v2231
  %v2248 = vmul.f32 %v2225, %v2228
  %v2249 = vmul.f32 %v2221, %v2229
  %v2250 = vmul.f32 %v2217, %v2230
  %v2251 = vmul.f32 %v2213, %v2231
  %s2252 = scalar_lea.vmem %s8, 8
  %v2253 = vld [vmem:[%s2252] sm:$0xff]
  %2254 = vrot.lane.b32.xlu0 %v2162, 16
  %v2255 = vpop.permute.xlu0 %2254
  %2256 = vrot.lane.b32.xlu0 %v2166, 16
  %v2257 = vpop.permute.xlu0 %2256
  %2258 = vrot.lane.b32.xlu0 %v2170, 16
  %v2259 = vpop.permute.xlu0 %2258
  %2260 = vrot.lane.b32.xlu0 %v2174, 16
  %v2261 = vpop.permute.xlu0 %2260
  %2262 = vrot.lane.b32.xlu0 %v2163, 16
  %v2263 = vpop.permute.xlu0 %2262
  %2264 = vrot.lane.b32.xlu0 %v2167, 16
  %v2265 = vpop.permute.xlu0 %2264
  %2266 = vrot.lane.b32.xlu0 %v2171, 16
  %v2267 = vpop.permute.xlu0 %2266
  %2268 = vrot.lane.b32.xlu0 %v2175, 16
  %v2269 = vpop.permute.xlu0 %2268
  %2270 = vrot.lane.b32.xlu0 %v2164, 16
  %v2271 = vpop.permute.xlu0 %2270
  %2272 = vrot.lane.b32.xlu0 %v2168, 16
  %v2273 = vpop.permute.xlu0 %2272
  %2274 = vrot.lane.b32.xlu0 %v2172, 16
  %v2275 = vpop.permute.xlu0 %2274
  %2276 = vrot.lane.b32.xlu0 %v2176, 16
  %v2277 = vpop.permute.xlu0 %2276
  %2278 = vrot.lane.b32.xlu0 %v2165, 16
  %v2279 = vpop.permute.xlu0 %2278
  %2280 = vrot.lane.b32.xlu0 %v2169, 16
  %v2281 = vpop.permute.xlu0 %2280
  %2282 = vrot.lane.b32.xlu0 %v2173, 16
  %v2283 = vpop.permute.xlu0 %2282
  %2284 = vrot.lane.b32.xlu0 %v2177, 16
  %v2285 = vpop.permute.xlu0 %2284
  %v2286 = vsel %vm110, %v2271, %v2279
  %v2287 = vsel %vm110, %v2273, %v2281
  %v2288 = vsel %vm110, %v2275, %v2283
  %v2289 = vsel %vm110, %v2277, %v2285
  %v2290 = vsel %vm110, %v2263, %v2271
  %v2291 = vsel %vm110, %v2265, %v2273
  %v2292 = vsel %vm110, %v2267, %v2275
  %v2293 = vsel %vm110, %v2269, %v2277
  %v2294 = vsel %vm110, %v2255, %v2263
  %v2295 = vsel %vm110, %v2257, %v2265
  %v2296 = vsel %vm110, %v2259, %v2267
  %v2297 = vsel %vm110, %v2261, %v2269
  %v2298 = vsel %vm110, %v2279, %v2255
  %v2299 = vsel %vm110, %v2281, %v2257
  %v2300 = vsel %vm110, %v2283, %v2259
  %v2301 = vsel %vm110, %v2285, %v2261
  %v2302 = vld [vmem:[%s115] ss:$8 sm:$0xf]
  %v2304 = vperm.slane %v2302, 0
  %v2305 = vperm.slane %v2302, 1
  %v2306 = vperm.slane %v2302, 2
  %v2307 = vperm.slane %v2302, 3
  %v2312 = vmul.f32 %v2298, %v2304
  %v2313 = vmul.f32 %v2294, %v2305
  %v2314 = vmul.f32 %v2290, %v2306
  %v2315 = vmul.f32 %v2286, %v2307
  %v2316 = vmul.f32 %v2299, %v2304
  %v2317 = vmul.f32 %v2295, %v2305
  %v2318 = vmul.f32 %v2291, %v2306
  %v2319 = vmul.f32 %v2287, %v2307
  %v2320 = vmul.f32 %v2300, %v2304
  %v2321 = vmul.f32 %v2296, %v2305
  %v2322 = vmul.f32 %v2292, %v2306
  %v2323 = vmul.f32 %v2288, %v2307
  %v2324 = vmul.f32 %v2301, %v2304
  %v2325 = vmul.f32 %v2297, %v2305
  %v2326 = vmul.f32 %v2293, %v2306
  %v2327 = vmul.f32 %v2289, %v2307
  %v2329 = vsel %vm1712, %v2253, 0
  %2331 = vmatpush.msra.mxu0 0.0
  %2332 = vmatpush.msra.mxu0 0.0
  %2333 = vmatpush.msra.mxu0 0.0
  %2334 = vmatpush.msra.mxu0 0.0
  %2335 = vmatpush.msra.mxu0 0.0
  %2336 = vmatpush.msra.mxu0 0.0
  %2337 = vmatpush.msra.mxu0 0.0
  %2338 = vmatpush.msra.mxu0 0.0
  %2339 = vmatpush.msra.mxu0 0.0
  %2340 = vmatpush.msra.mxu0 0.0
  %2341 = vmatpush.msra.mxu0 0.0
  %2342 = vmatpush.msra.mxu0 0.0
  %2343 = vmatpush.msra.mxu0 %v2324
  %2344 = vmatpush.msra.mxu0 %v2320
  %2345 = vmatpush.msra.mxu0 %v2316
  %2346 = vmatpush.msra.mxu0 %v2312
  %2347 = vmatmul.f32.gmra.mxu0 %v2329
  %v2348 = vpop.f32.mrf.mxu0
  %v2349 = vadd.f32 0.0, %v2348
  %2350 = vdwg.mxu0
  %2351 = vmatpush.msra.mxu0 0.0
  %2352 = vmatpush.msra.mxu0 0.0
  %2353 = vmatpush.msra.mxu0 0.0
  %2354 = vmatpush.msra.mxu0 0.0
  %2355 = vmatpush.msra.mxu0 0.0
  %2356 = vmatpush.msra.mxu0 0.0
  %2357 = vmatpush.msra.mxu0 0.0
  %2358 = vmatpush.msra.mxu0 0.0
  %2359 = vmatpush.msra.mxu0 0.0
  %2360 = vmatpush.msra.mxu0 0.0
  %2361 = vmatpush.msra.mxu0 0.0
  %2362 = vmatpush.msra.mxu0 0.0
  %2363 = vmatpush.msra.mxu0 %v2325
  %2364 = vmatpush.msra.mxu0 %v2321
  %2365 = vmatpush.msra.mxu0 %v2317
  %2366 = vmatpush.msra.mxu0 %v2313
  %2367 = vmatmul.f32.gmra.mxu0 %v2329
  %v2368 = vpop.f32.mrf.mxu0
  %v2369 = vadd.f32 0.0, %v2368
  %2370 = vdwg.mxu0
  %2371 = vmatpush.msra.mxu0 0.0
  %2372 = vmatpush.msra.mxu0 0.0
  %2373 = vmatpush.msra.mxu0 0.0
  %2374 = vmatpush.msra.mxu0 0.0
  %2375 = vmatpush.msra.mxu0 0.0
  %2376 = vmatpush.msra.mxu0 0.0
  %2377 = vmatpush.msra.mxu0 0.0
  %2378 = vmatpush.msra.mxu0 0.0
  %2379 = vmatpush.msra.mxu0 0.0
  %2380 = vmatpush.msra.mxu0 0.0
  %2381 = vmatpush.msra.mxu0 0.0
  %2382 = vmatpush.msra.mxu0 0.0
  %2383 = vmatpush.msra.mxu0 %v2326
  %2384 = vmatpush.msra.mxu0 %v2322
  %2385 = vmatpush.msra.mxu0 %v2318
  %2386 = vmatpush.msra.mxu0 %v2314
  %2387 = vmatmul.f32.gmra.mxu0 %v2329
  %v2388 = vpop.f32.mrf.mxu0
  %v2389 = vadd.f32 0.0, %v2388
  %2390 = vdwg.mxu0
  %2391 = vmatpush.msra.mxu0 0.0
  %2392 = vmatpush.msra.mxu0 0.0
  %2393 = vmatpush.msra.mxu0 0.0
  %2394 = vmatpush.msra.mxu0 0.0
  %2395 = vmatpush.msra.mxu0 0.0
  %2396 = vmatpush.msra.mxu0 0.0
  %2397 = vmatpush.msra.mxu0 0.0
  %2398 = vmatpush.msra.mxu0 0.0
  %2399 = vmatpush.msra.mxu0 0.0
  %2400 = vmatpush.msra.mxu0 0.0
  %2401 = vmatpush.msra.mxu0 0.0
  %2402 = vmatpush.msra.mxu0 0.0
  %2403 = vmatpush.msra.mxu0 %v2327
  %2404 = vmatpush.msra.mxu0 %v2323
  %2405 = vmatpush.msra.mxu0 %v2319
  %2406 = vmatpush.msra.mxu0 %v2315
  %2407 = vmatmul.f32.gmra.mxu0 %v2329
  %v2408 = vpop.f32.mrf.mxu0
  %v2409 = vadd.f32 0.0, %v2408
  %2410 = vdwg.mxu0
  %v2412 = vsel %vm1712, %v2161, 0
  %2414 = vmatpush.msra.mxu0 0.0
  %2415 = vmatpush.msra.mxu0 0.0
  %2416 = vmatpush.msra.mxu0 0.0
  %2417 = vmatpush.msra.mxu0 0.0
  %2418 = vmatpush.msra.mxu0 0.0
  %2419 = vmatpush.msra.mxu0 0.0
  %2420 = vmatpush.msra.mxu0 0.0
  %2421 = vmatpush.msra.mxu0 0.0
  %2422 = vmatpush.msra.mxu0 0.0
  %2423 = vmatpush.msra.mxu0 0.0
  %2424 = vmatpush.msra.mxu0 0.0
  %2425 = vmatpush.msra.mxu0 0.0
  %2426 = vmatpush.msra.mxu0 %v2248
  %2427 = vmatpush.msra.mxu0 %v2244
  %2428 = vmatpush.msra.mxu0 %v2240
  %2429 = vmatpush.msra.mxu0 %v2236
  %2430 = vmatmul.f32.gmra.mxu0 %v2412
  %v2431 = vpop.f32.mrf.mxu0
  %v2432 = vadd.f32 %v2349, %v2431
  %2433 = vdwg.mxu0
  %2434 = vmatpush.msra.mxu0 0.0
  %2435 = vmatpush.msra.mxu0 0.0
  %2436 = vmatpush.msra.mxu0 0.0
  %2437 = vmatpush.msra.mxu0 0.0
  %2438 = vmatpush.msra.mxu0 0.0
  %2439 = vmatpush.msra.mxu0 0.0
  %2440 = vmatpush.msra.mxu0 0.0
  %2441 = vmatpush.msra.mxu0 0.0
  %2442 = vmatpush.msra.mxu0 0.0
  %2443 = vmatpush.msra.mxu0 0.0
  %2444 = vmatpush.msra.mxu0 0.0
  %2445 = vmatpush.msra.mxu0 0.0
  %2446 = vmatpush.msra.mxu0 %v2249
  %2447 = vmatpush.msra.mxu0 %v2245
  %2448 = vmatpush.msra.mxu0 %v2241
  %2449 = vmatpush.msra.mxu0 %v2237
  %2450 = vmatmul.f32.gmra.mxu0 %v2412
  %v2451 = vpop.f32.mrf.mxu0
  %v2452 = vadd.f32 %v2369, %v2451
  %2453 = vdwg.mxu0
  %2454 = vmatpush.msra.mxu0 0.0
  %2455 = vmatpush.msra.mxu0 0.0
  %2456 = vmatpush.msra.mxu0 0.0
  %2457 = vmatpush.msra.mxu0 0.0
  %2458 = vmatpush.msra.mxu0 0.0
  %2459 = vmatpush.msra.mxu0 0.0
  %2460 = vmatpush.msra.mxu0 0.0
  %2461 = vmatpush.msra.mxu0 0.0
  %2462 = vmatpush.msra.mxu0 0.0
  %2463 = vmatpush.msra.mxu0 0.0
  %2464 = vmatpush.msra.mxu0 0.0
  %2465 = vmatpush.msra.mxu0 0.0
  %2466 = vmatpush.msra.mxu0 %v2250
  %2467 = vmatpush.msra.mxu0 %v2246
  %2468 = vmatpush.msra.mxu0 %v2242
  %2469 = vmatpush.msra.mxu0 %v2238
  %2470 = vmatmul.f32.gmra.mxu0 %v2412
  %v2471 = vpop.f32.mrf.mxu0
  %v2472 = vadd.f32 %v2389, %v2471
  %2473 = vdwg.mxu0
  %2474 = vmatpush.msra.mxu0 0.0
  %2475 = vmatpush.msra.mxu0 0.0
  %2476 = vmatpush.msra.mxu0 0.0
  %2477 = vmatpush.msra.mxu0 0.0
  %2478 = vmatpush.msra.mxu0 0.0
  %2479 = vmatpush.msra.mxu0 0.0
  %2480 = vmatpush.msra.mxu0 0.0
  %2481 = vmatpush.msra.mxu0 0.0
  %2482 = vmatpush.msra.mxu0 0.0
  %2483 = vmatpush.msra.mxu0 0.0
  %2484 = vmatpush.msra.mxu0 0.0
  %2485 = vmatpush.msra.mxu0 0.0
  %2486 = vmatpush.msra.mxu0 %v2251
  %2487 = vmatpush.msra.mxu0 %v2247
  %2488 = vmatpush.msra.mxu0 %v2243
  %2489 = vmatpush.msra.mxu0 %v2239
  %2490 = vmatmul.f32.gmra.mxu0 %v2412
  %v2491 = vpop.f32.mrf.mxu0
  %v2492 = vadd.f32 %v2409, %v2491
  %2493 = vdwg.mxu0
  %s2494 = scalar_lea.vmem %s8, 16
  %v2495 = vld [vmem:[%s2494] sm:$0xff]
  %2496 = vrot.lane.b32.xlu0 %v2162, 15
  %v2497 = vpop.permute.xlu0 %2496
  %2498 = vrot.lane.b32.xlu0 %v2166, 15
  %v2499 = vpop.permute.xlu0 %2498
  %2500 = vrot.lane.b32.xlu0 %v2170, 15
  %v2501 = vpop.permute.xlu0 %2500
  %2502 = vrot.lane.b32.xlu0 %v2174, 15
  %v2503 = vpop.permute.xlu0 %2502
  %2504 = vrot.lane.b32.xlu0 %v2163, 15
  %v2505 = vpop.permute.xlu0 %2504
  %2506 = vrot.lane.b32.xlu0 %v2167, 15
  %v2507 = vpop.permute.xlu0 %2506
  %2508 = vrot.lane.b32.xlu0 %v2171, 15
  %v2509 = vpop.permute.xlu0 %2508
  %2510 = vrot.lane.b32.xlu0 %v2175, 15
  %v2511 = vpop.permute.xlu0 %2510
  %2512 = vrot.lane.b32.xlu0 %v2164, 15
  %v2513 = vpop.permute.xlu0 %2512
  %2514 = vrot.lane.b32.xlu0 %v2168, 15
  %v2515 = vpop.permute.xlu0 %2514
  %2516 = vrot.lane.b32.xlu0 %v2172, 15
  %v2517 = vpop.permute.xlu0 %2516
  %2518 = vrot.lane.b32.xlu0 %v2176, 15
  %v2519 = vpop.permute.xlu0 %2518
  %2520 = vrot.lane.b32.xlu0 %v2165, 15
  %v2521 = vpop.permute.xlu0 %2520
  %2522 = vrot.lane.b32.xlu0 %v2169, 15
  %v2523 = vpop.permute.xlu0 %2522
  %2524 = vrot.lane.b32.xlu0 %v2173, 15
  %v2525 = vpop.permute.xlu0 %2524
  %2526 = vrot.lane.b32.xlu0 %v2177, 15
  %v2527 = vpop.permute.xlu0 %2526
  %v2528 = vsel %vm152, %v2513, %v2521
  %v2529 = vsel %vm152, %v2515, %v2523
  %v2530 = vsel %vm152, %v2517, %v2525
  %v2531 = vsel %vm152, %v2519, %v2527
  %v2532 = vsel %vm152, %v2505, %v2513
  %v2533 = vsel %vm152, %v2507, %v2515
  %v2534 = vsel %vm152, %v2509, %v2517
  %v2535 = vsel %vm152, %v2511, %v2519
  %v2536 = vsel %vm152, %v2497, %v2505
  %v2537 = vsel %vm152, %v2499, %v2507
  %v2538 = vsel %vm152, %v2501, %v2509
  %v2539 = vsel %vm152, %v2503, %v2511
  %v2540 = vsel %vm152, %v2521, %v2497
  %v2541 = vsel %vm152, %v2523, %v2499
  %v2542 = vsel %vm152, %v2525, %v2501
  %v2543 = vsel %vm152, %v2527, %v2503
  %v2544 = vld [vmem:[%s157] ss:$8 sm:$0xf]
  %v2546 = vperm.slane %v2544, 0
  %v2547 = vperm.slane %v2544, 1
  %v2548 = vperm.slane %v2544, 2
  %v2549 = vperm.slane %v2544, 3
  %v2554 = vmul.f32 %v2540, %v2546
  %v2555 = vmul.f32 %v2536, %v2547
  %v2556 = vmul.f32 %v2532, %v2548
  %v2557 = vmul.f32 %v2528, %v2549
  %v2558 = vmul.f32 %v2541, %v2546
  %v2559 = vmul.f32 %v2537, %v2547
  %v2560 = vmul.f32 %v2533, %v2548
  %v2561 = vmul.f32 %v2529, %v2549
  %v2562 = vmul.f32 %v2542, %v2546
  %v2563 = vmul.f32 %v2538, %v2547
  %v2564 = vmul.f32 %v2534, %v2548
  %v2565 = vmul.f32 %v2530, %v2549
  %v2566 = vmul.f32 %v2543, %v2546
  %v2567 = vmul.f32 %v2539, %v2547
  %v2568 = vmul.f32 %v2535, %v2548
  %v2569 = vmul.f32 %v2531, %v2549
  %v2571 = vsel %vm1712, %v2495, 0
  %2573 = vmatpush.msra.mxu0 0.0
  %2574 = vmatpush.msra.mxu0 0.0
  %2575 = vmatpush.msra.mxu0 0.0
  %2576 = vmatpush.msra.mxu0 0.0
  %2577 = vmatpush.msra.mxu0 0.0
  %2578 = vmatpush.msra.mxu0 0.0
  %2579 = vmatpush.msra.mxu0 0.0
  %2580 = vmatpush.msra.mxu0 0.0
  %2581 = vmatpush.msra.mxu0 0.0
  %2582 = vmatpush.msra.mxu0 0.0
  %2583 = vmatpush.msra.mxu0 0.0
  %2584 = vmatpush.msra.mxu0 0.0
  %2585 = vmatpush.msra.mxu0 %v2566
  %2586 = vmatpush.msra.mxu0 %v2562
  %2587 = vmatpush.msra.mxu0 %v2558
  %2588 = vmatpush.msra.mxu0 %v2554
  %2589 = vmatmul.f32.gmra.mxu0 %v2571
  %v2590 = vpop.f32.mrf.mxu0
  %v2591 = vadd.f32 0.0, %v2590
  %2592 = vdwg.mxu0
  %2593 = vmatpush.msra.mxu0 0.0
  %2594 = vmatpush.msra.mxu0 0.0
  %2595 = vmatpush.msra.mxu0 0.0
  %2596 = vmatpush.msra.mxu0 0.0
  %2597 = vmatpush.msra.mxu0 0.0
  %2598 = vmatpush.msra.mxu0 0.0
  %2599 = vmatpush.msra.mxu0 0.0
  %2600 = vmatpush.msra.mxu0 0.0
  %2601 = vmatpush.msra.mxu0 0.0
  %2602 = vmatpush.msra.mxu0 0.0
  %2603 = vmatpush.msra.mxu0 0.0
  %2604 = vmatpush.msra.mxu0 0.0
  %2605 = vmatpush.msra.mxu0 %v2567
  %2606 = vmatpush.msra.mxu0 %v2563
  %2607 = vmatpush.msra.mxu0 %v2559
  %2608 = vmatpush.msra.mxu0 %v2555
  %2609 = vmatmul.f32.gmra.mxu0 %v2571
  %v2610 = vpop.f32.mrf.mxu0
  %v2611 = vadd.f32 0.0, %v2610
  %2612 = vdwg.mxu0
  %2613 = vmatpush.msra.mxu0 0.0
  %2614 = vmatpush.msra.mxu0 0.0
  %2615 = vmatpush.msra.mxu0 0.0
  %2616 = vmatpush.msra.mxu0 0.0
  %2617 = vmatpush.msra.mxu0 0.0
  %2618 = vmatpush.msra.mxu0 0.0
  %2619 = vmatpush.msra.mxu0 0.0
  %2620 = vmatpush.msra.mxu0 0.0
  %2621 = vmatpush.msra.mxu0 0.0
  %2622 = vmatpush.msra.mxu0 0.0
  %2623 = vmatpush.msra.mxu0 0.0
  %2624 = vmatpush.msra.mxu0 0.0
  %2625 = vmatpush.msra.mxu0 %v2568
  %2626 = vmatpush.msra.mxu0 %v2564
  %2627 = vmatpush.msra.mxu0 %v2560
  %2628 = vmatpush.msra.mxu0 %v2556
  %2629 = vmatmul.f32.gmra.mxu0 %v2571
  %v2630 = vpop.f32.mrf.mxu0
  %v2631 = vadd.f32 0.0, %v2630
  %2632 = vdwg.mxu0
  %2633 = vmatpush.msra.mxu0 0.0
  %2634 = vmatpush.msra.mxu0 0.0
  %2635 = vmatpush.msra.mxu0 0.0
  %2636 = vmatpush.msra.mxu0 0.0
  %2637 = vmatpush.msra.mxu0 0.0
  %2638 = vmatpush.msra.mxu0 0.0
  %2639 = vmatpush.msra.mxu0 0.0
  %2640 = vmatpush.msra.mxu0 0.0
  %2641 = vmatpush.msra.mxu0 0.0
  %2642 = vmatpush.msra.mxu0 0.0
  %2643 = vmatpush.msra.mxu0 0.0
  %2644 = vmatpush.msra.mxu0 0.0
  %2645 = vmatpush.msra.mxu0 %v2569
  %2646 = vmatpush.msra.mxu0 %v2565
  %2647 = vmatpush.msra.mxu0 %v2561
  %2648 = vmatpush.msra.mxu0 %v2557
  %2649 = vmatmul.f32.gmra.mxu0 %v2571
  %v2650 = vpop.f32.mrf.mxu0
  %v2651 = vadd.f32 0.0, %v2650
  %2652 = vdwg.mxu0
  %v2653 = vadd.f32 %v2432, %v2591
  %v2654 = vadd.f32 %v2452, %v2611
  %v2655 = vadd.f32 %v2472, %v2631
  %v2656 = vadd.f32 %v2492, %v2651
  %s2657 = scalar_lea.vmem %s8, 24
  %v2658 = vld [vmem:[%s2657] sm:$0xff]
  %2659 = vrot.lane.b32.xlu0 %v2162, 1
  %v2660 = vpop.permute.xlu0 %2659
  %2661 = vrot.lane.b32.xlu0 %v2166, 1
  %v2662 = vpop.permute.xlu0 %2661
  %2663 = vrot.lane.b32.xlu0 %v2170, 1
  %v2664 = vpop.permute.xlu0 %2663
  %2665 = vrot.lane.b32.xlu0 %v2174, 1
  %v2666 = vpop.permute.xlu0 %2665
  %2667 = vrot.lane.b32.xlu0 %v2163, 1
  %v2668 = vpop.permute.xlu0 %2667
  %2669 = vrot.lane.b32.xlu0 %v2167, 1
  %v2670 = vpop.permute.xlu0 %2669
  %2671 = vrot.lane.b32.xlu0 %v2171, 1
  %v2672 = vpop.permute.xlu0 %2671
  %2673 = vrot.lane.b32.xlu0 %v2175, 1
  %v2674 = vpop.permute.xlu0 %2673
  %2675 = vrot.lane.b32.xlu0 %v2164, 1
  %v2676 = vpop.permute.xlu0 %2675
  %2677 = vrot.lane.b32.xlu0 %v2168, 1
  %v2678 = vpop.permute.xlu0 %2677
  %2679 = vrot.lane.b32.xlu0 %v2172, 1
  %v2680 = vpop.permute.xlu0 %2679
  %2681 = vrot.lane.b32.xlu0 %v2176, 1
  %v2682 = vpop.permute.xlu0 %2681
  %2683 = vrot.lane.b32.xlu0 %v2165, 1
  %v2684 = vpop.permute.xlu0 %2683
  %2685 = vrot.lane.b32.xlu0 %v2169, 1
  %v2686 = vpop.permute.xlu0 %2685
  %2687 = vrot.lane.b32.xlu0 %v2173, 1
  %v2688 = vpop.permute.xlu0 %2687
  %2689 = vrot.lane.b32.xlu0 %v2177, 1
  %v2690 = vpop.permute.xlu0 %2689
  %v2691 = vsel %vm194, %v2676, %v2684
  %v2692 = vsel %vm194, %v2678, %v2686
  %v2693 = vsel %vm194, %v2680, %v2688
  %v2694 = vsel %vm194, %v2682, %v2690
  %v2695 = vsel %vm194, %v2668, %v2676
  %v2696 = vsel %vm194, %v2670, %v2678
  %v2697 = vsel %vm194, %v2672, %v2680
  %v2698 = vsel %vm194, %v2674, %v2682
  %v2699 = vsel %vm194, %v2660, %v2668
  %v2700 = vsel %vm194, %v2662, %v2670
  %v2701 = vsel %vm194, %v2664, %v2672
  %v2702 = vsel %vm194, %v2666, %v2674
  %v2703 = vsel %vm194, %v2684, %v2660
  %v2704 = vsel %vm194, %v2686, %v2662
  %v2705 = vsel %vm194, %v2688, %v2664
  %v2706 = vsel %vm194, %v2690, %v2666
  %v2707 = vld [vmem:[%s199] ss:$8 sm:$0xf]
  %v2709 = vperm.slane %v2707, 0
  %v2710 = vperm.slane %v2707, 1
  %v2711 = vperm.slane %v2707, 2
  %v2712 = vperm.slane %v2707, 3
  %v2717 = vmul.f32 %v2703, %v2709
  %v2718 = vmul.f32 %v2699, %v2710
  %v2719 = vmul.f32 %v2695, %v2711
  %v2720 = vmul.f32 %v2691, %v2712
  %v2721 = vmul.f32 %v2704, %v2709
  %v2722 = vmul.f32 %v2700, %v2710
  %v2723 = vmul.f32 %v2696, %v2711
  %v2724 = vmul.f32 %v2692, %v2712
  %v2725 = vmul.f32 %v2705, %v2709
  %v2726 = vmul.f32 %v2701, %v2710
  %v2727 = vmul.f32 %v2697, %v2711
  %v2728 = vmul.f32 %v2693, %v2712
  %v2729 = vmul.f32 %v2706, %v2709
  %v2730 = vmul.f32 %v2702, %v2710
  %v2731 = vmul.f32 %v2698, %v2711
  %v2732 = vmul.f32 %v2694, %v2712
  %v2734 = vsel %vm1712, %v2658, 0
  %2736 = vmatpush.msra.mxu0 0.0
  %2737 = vmatpush.msra.mxu0 0.0
  %2738 = vmatpush.msra.mxu0 0.0
  %2739 = vmatpush.msra.mxu0 0.0
  %2740 = vmatpush.msra.mxu0 0.0
  %2741 = vmatpush.msra.mxu0 0.0
  %2742 = vmatpush.msra.mxu0 0.0
  %2743 = vmatpush.msra.mxu0 0.0
  %2744 = vmatpush.msra.mxu0 0.0
  %2745 = vmatpush.msra.mxu0 0.0
  %2746 = vmatpush.msra.mxu0 0.0
  %2747 = vmatpush.msra.mxu0 0.0
  %2748 = vmatpush.msra.mxu0 %v2729
  %2749 = vmatpush.msra.mxu0 %v2725
  %2750 = vmatpush.msra.mxu0 %v2721
  %2751 = vmatpush.msra.mxu0 %v2717
  %2752 = vmatmul.f32.gmra.mxu0 %v2734
  %v2753 = vpop.f32.mrf.mxu0
  %v2754 = vadd.f32 0.0, %v2753
  %2755 = vdwg.mxu0
  %2756 = vmatpush.msra.mxu0 0.0
  %2757 = vmatpush.msra.mxu0 0.0
  %2758 = vmatpush.msra.mxu0 0.0
  %2759 = vmatpush.msra.mxu0 0.0
  %2760 = vmatpush.msra.mxu0 0.0
  %2761 = vmatpush.msra.mxu0 0.0
  %2762 = vmatpush.msra.mxu0 0.0
  %2763 = vmatpush.msra.mxu0 0.0
  %2764 = vmatpush.msra.mxu0 0.0
  %2765 = vmatpush.msra.mxu0 0.0
  %2766 = vmatpush.msra.mxu0 0.0
  %2767 = vmatpush.msra.mxu0 0.0
  %2768 = vmatpush.msra.mxu0 %v2730
  %2769 = vmatpush.msra.mxu0 %v2726
  %2770 = vmatpush.msra.mxu0 %v2722
  %2771 = vmatpush.msra.mxu0 %v2718
  %2772 = vmatmul.f32.gmra.mxu0 %v2734
  %v2773 = vpop.f32.mrf.mxu0
  %v2774 = vadd.f32 0.0, %v2773
  %2775 = vdwg.mxu0
  %2776 = vmatpush.msra.mxu0 0.0
  %2777 = vmatpush.msra.mxu0 0.0
  %2778 = vmatpush.msra.mxu0 0.0
  %2779 = vmatpush.msra.mxu0 0.0
  %2780 = vmatpush.msra.mxu0 0.0
  %2781 = vmatpush.msra.mxu0 0.0
  %2782 = vmatpush.msra.mxu0 0.0
  %2783 = vmatpush.msra.mxu0 0.0
  %2784 = vmatpush.msra.mxu0 0.0
  %2785 = vmatpush.msra.mxu0 0.0
  %2786 = vmatpush.msra.mxu0 0.0
  %2787 = vmatpush.msra.mxu0 0.0
  %2788 = vmatpush.msra.mxu0 %v2731
  %2789 = vmatpush.msra.mxu0 %v2727
  %2790 = vmatpush.msra.mxu0 %v2723
  %2791 = vmatpush.msra.mxu0 %v2719
  %2792 = vmatmul.f32.gmra.mxu0 %v2734
  %v2793 = vpop.f32.mrf.mxu0
  %v2794 = vadd.f32 0.0, %v2793
  %2795 = vdwg.mxu0
  %2796 = vmatpush.msra.mxu0 0.0
  %2797 = vmatpush.msra.mxu0 0.0
  %2798 = vmatpush.msra.mxu0 0.0
  %2799 = vmatpush.msra.mxu0 0.0
  %2800 = vmatpush.msra.mxu0 0.0
  %2801 = vmatpush.msra.mxu0 0.0
  %2802 = vmatpush.msra.mxu0 0.0
  %2803 = vmatpush.msra.mxu0 0.0
  %2804 = vmatpush.msra.mxu0 0.0
  %2805 = vmatpush.msra.mxu0 0.0
  %2806 = vmatpush.msra.mxu0 0.0
  %2807 = vmatpush.msra.mxu0 0.0
  %2808 = vmatpush.msra.mxu0 %v2732
  %2809 = vmatpush.msra.mxu0 %v2728
  %2810 = vmatpush.msra.mxu0 %v2724
  %2811 = vmatpush.msra.mxu0 %v2720
  %2812 = vmatmul.f32.gmra.mxu0 %v2734
  %v2813 = vpop.f32.mrf.mxu0
  %v2814 = vadd.f32 0.0, %v2813
  %2815 = vdwg.mxu0
  %v2816 = vadd.f32 %v2653, %v2754
  %v2817 = vadd.f32 %v2654, %v2774
  %v2818 = vadd.f32 %v2655, %v2794
  %v2819 = vadd.f32 %v2656, %v2814
  %s2820 = scalar_lea.vmem %s8, 32
  %v2821 = vld [vmem:[%s2820] sm:$0xff]
  %v2823 = vsel %vm1712, %v2821, 0
  %2825 = vmatpush.msra.mxu0 0.0
  %2826 = vmatpush.msra.mxu0 0.0
  %2827 = vmatpush.msra.mxu0 0.0
  %2828 = vmatpush.msra.mxu0 0.0
  %2829 = vmatpush.msra.mxu0 0.0
  %2830 = vmatpush.msra.mxu0 0.0
  %2831 = vmatpush.msra.mxu0 0.0
  %2832 = vmatpush.msra.mxu0 0.0
  %2833 = vmatpush.msra.mxu0 0.0
  %2834 = vmatpush.msra.mxu0 0.0
  %2835 = vmatpush.msra.mxu0 0.0
  %2836 = vmatpush.msra.mxu0 0.0
  %2837 = vmatpush.msra.mxu0 %v2174
  %2838 = vmatpush.msra.mxu0 %v2170
  %2839 = vmatpush.msra.mxu0 %v2166
  %2840 = vmatpush.msra.mxu0 %v2162
  %2841 = vmatmul.f32.gmra.mxu0 %v2823
  %v2842 = vpop.f32.mrf.mxu0
  %v2843 = vadd.f32 0.0, %v2842
  %2844 = vdwg.mxu0
  %2845 = vmatpush.msra.mxu0 0.0
  %2846 = vmatpush.msra.mxu0 0.0
  %2847 = vmatpush.msra.mxu0 0.0
  %2848 = vmatpush.msra.mxu0 0.0
  %2849 = vmatpush.msra.mxu0 0.0
  %2850 = vmatpush.msra.mxu0 0.0
  %2851 = vmatpush.msra.mxu0 0.0
  %2852 = vmatpush.msra.mxu0 0.0
  %2853 = vmatpush.msra.mxu0 0.0
  %2854 = vmatpush.msra.mxu0 0.0
  %2855 = vmatpush.msra.mxu0 0.0
  %2856 = vmatpush.msra.mxu0 0.0
  %2857 = vmatpush.msra.mxu0 %v2175
  %2858 = vmatpush.msra.mxu0 %v2171
  %2859 = vmatpush.msra.mxu0 %v2167
  %2860 = vmatpush.msra.mxu0 %v2163
  %2861 = vmatmul.f32.gmra.mxu0 %v2823
  %v2862 = vpop.f32.mrf.mxu0
  %v2863 = vadd.f32 0.0, %v2862
  %2864 = vdwg.mxu0
  %2865 = vmatpush.msra.mxu0 0.0
  %2866 = vmatpush.msra.mxu0 0.0
  %2867 = vmatpush.msra.mxu0 0.0
  %2868 = vmatpush.msra.mxu0 0.0
  %2869 = vmatpush.msra.mxu0 0.0
  %2870 = vmatpush.msra.mxu0 0.0
  %2871 = vmatpush.msra.mxu0 0.0
  %2872 = vmatpush.msra.mxu0 0.0
  %2873 = vmatpush.msra.mxu0 0.0
  %2874 = vmatpush.msra.mxu0 0.0
  %2875 = vmatpush.msra.mxu0 0.0
  %2876 = vmatpush.msra.mxu0 0.0
  %2877 = vmatpush.msra.mxu0 %v2176
  %2878 = vmatpush.msra.mxu0 %v2172
  %2879 = vmatpush.msra.mxu0 %v2168
  %2880 = vmatpush.msra.mxu0 %v2164
  %2881 = vmatmul.f32.gmra.mxu0 %v2823
  %v2882 = vpop.f32.mrf.mxu0
  %v2883 = vadd.f32 0.0, %v2882
  %2884 = vdwg.mxu0
  %2885 = vmatpush.msra.mxu0 0.0
  %2886 = vmatpush.msra.mxu0 0.0
  %2887 = vmatpush.msra.mxu0 0.0
  %2888 = vmatpush.msra.mxu0 0.0
  %2889 = vmatpush.msra.mxu0 0.0
  %2890 = vmatpush.msra.mxu0 0.0
  %2891 = vmatpush.msra.mxu0 0.0
  %2892 = vmatpush.msra.mxu0 0.0
  %2893 = vmatpush.msra.mxu0 0.0
  %2894 = vmatpush.msra.mxu0 0.0
  %2895 = vmatpush.msra.mxu0 0.0
  %2896 = vmatpush.msra.mxu0 0.0
  %2897 = vmatpush.msra.mxu0 %v2177
  %2898 = vmatpush.msra.mxu0 %v2173
  %2899 = vmatpush.msra.mxu0 %v2169
  %2900 = vmatpush.msra.mxu0 %v2165
  %2901 = vmatmul.f32.gmra.mxu0 %v2823
  %v2902 = vpop.f32.mrf.mxu0
  %v2903 = vadd.f32 0.0, %v2902
  %2904 = vdwg.mxu0
  %v2905 = vadd.f32 %v2816, %v2843
  %v2906 = vadd.f32 %v2817, %v2863
  %v2907 = vadd.f32 %v2818, %v2883
  %v2908 = vadd.f32 %v2819, %v2903
  %s2909 = scalar_lea.vmem %s8, 40
  %v2910 = vld [vmem:[%s2909] sm:$0xff]
  %2911 = vrot.lane.b32.xlu0 %v2162, 127
  %v2912 = vpop.permute.xlu0 %2911
  %2913 = vrot.lane.b32.xlu0 %v2166, 127
  %v2914 = vpop.permute.xlu0 %2913
  %2915 = vrot.lane.b32.xlu0 %v2170, 127
  %v2916 = vpop.permute.xlu0 %2915
  %2917 = vrot.lane.b32.xlu0 %v2174, 127
  %v2918 = vpop.permute.xlu0 %2917
  %2919 = vrot.lane.b32.xlu0 %v2163, 127
  %v2920 = vpop.permute.xlu0 %2919
  %2921 = vrot.lane.b32.xlu0 %v2167, 127
  %v2922 = vpop.permute.xlu0 %2921
  %2923 = vrot.lane.b32.xlu0 %v2171, 127
  %v2924 = vpop.permute.xlu0 %2923
  %2925 = vrot.lane.b32.xlu0 %v2175, 127
  %v2926 = vpop.permute.xlu0 %2925
  %2927 = vrot.lane.b32.xlu0 %v2164, 127
  %v2928 = vpop.permute.xlu0 %2927
  %2929 = vrot.lane.b32.xlu0 %v2168, 127
  %v2930 = vpop.permute.xlu0 %2929
  %2931 = vrot.lane.b32.xlu0 %v2172, 127
  %v2932 = vpop.permute.xlu0 %2931
  %2933 = vrot.lane.b32.xlu0 %v2176, 127
  %v2934 = vpop.permute.xlu0 %2933
  %2935 = vrot.lane.b32.xlu0 %v2165, 127
  %v2936 = vpop.permute.xlu0 %2935
  %2937 = vrot.lane.b32.xlu0 %v2169, 127
  %v2938 = vpop.permute.xlu0 %2937
  %2939 = vrot.lane.b32.xlu0 %v2173, 127
  %v2940 = vpop.permute.xlu0 %2939
  %2941 = vrot.lane.b32.xlu0 %v2177, 127
  %v2942 = vpop.permute.xlu0 %2941
  %v2943 = vsel %vm239, %v2928, %v2936
  %v2944 = vsel %vm239, %v2930, %v2938
  %v2945 = vsel %vm239, %v2932, %v2940
  %v2946 = vsel %vm239, %v2934, %v2942
  %v2947 = vsel %vm239, %v2920, %v2928
  %v2948 = vsel %vm239, %v2922, %v2930
  %v2949 = vsel %vm239, %v2924, %v2932
  %v2950 = vsel %vm239, %v2926, %v2934
  %v2951 = vsel %vm239, %v2912, %v2920
  %v2952 = vsel %vm239, %v2914, %v2922
  %v2953 = vsel %vm239, %v2916, %v2924
  %v2954 = vsel %vm239, %v2918, %v2926
  %v2955 = vsel %vm239, %v2936, %v2912
  %v2956 = vsel %vm239, %v2938, %v2914
  %v2957 = vsel %vm239, %v2940, %v2916
  %v2958 = vsel %vm239, %v2942, %v2918
  %v2959 = vld [vmem:[%s244] ss:$8 sm:$0xf]
  %v2961 = vperm.slane %v2959, 0
  %v2962 = vperm.slane %v2959, 1
  %v2963 = vperm.slane %v2959, 2
  %v2964 = vperm.slane %v2959, 3
  %v2969 = vmul.f32 %v2951, %v2961
  %v2970 = vmul.f32 %v2947, %v2962
  %v2971 = vmul.f32 %v2943, %v2963
  %v2972 = vmul.f32 %v2955, %v2964
  %v2973 = vmul.f32 %v2952, %v2961
  %v2974 = vmul.f32 %v2948, %v2962
  %v2975 = vmul.f32 %v2944, %v2963
  %v2976 = vmul.f32 %v2956, %v2964
  %v2977 = vmul.f32 %v2953, %v2961
  %v2978 = vmul.f32 %v2949, %v2962
  %v2979 = vmul.f32 %v2945, %v2963
  %v2980 = vmul.f32 %v2957, %v2964
  %v2981 = vmul.f32 %v2954, %v2961
  %v2982 = vmul.f32 %v2950, %v2962
  %v2983 = vmul.f32 %v2946, %v2963
  %v2984 = vmul.f32 %v2958, %v2964
  %v2986 = vsel %vm1712, %v2910, 0
  %2988 = vmatpush.msra.mxu0 0.0
  %2989 = vmatpush.msra.mxu0 0.0
  %2990 = vmatpush.msra.mxu0 0.0
  %2991 = vmatpush.msra.mxu0 0.0
  %2992 = vmatpush.msra.mxu0 0.0
  %2993 = vmatpush.msra.mxu0 0.0
  %2994 = vmatpush.msra.mxu0 0.0
  %2995 = vmatpush.msra.mxu0 0.0
  %2996 = vmatpush.msra.mxu0 0.0
  %2997 = vmatpush.msra.mxu0 0.0
  %2998 = vmatpush.msra.mxu0 0.0
  %2999 = vmatpush.msra.mxu0 0.0
  %3000 = vmatpush.msra.mxu0 %v2981
  %3001 = vmatpush.msra.mxu0 %v2977
  %3002 = vmatpush.msra.mxu0 %v2973
  %3003 = vmatpush.msra.mxu0 %v2969
  %3004 = vmatmul.f32.gmra.mxu0 %v2986
  %v3005 = vpop.f32.mrf.mxu0
  %v3006 = vadd.f32 0.0, %v3005
  %3007 = vdwg.mxu0
  %3008 = vmatpush.msra.mxu0 0.0
  %3009 = vmatpush.msra.mxu0 0.0
  %3010 = vmatpush.msra.mxu0 0.0
  %3011 = vmatpush.msra.mxu0 0.0
  %3012 = vmatpush.msra.mxu0 0.0
  %3013 = vmatpush.msra.mxu0 0.0
  %3014 = vmatpush.msra.mxu0 0.0
  %3015 = vmatpush.msra.mxu0 0.0
  %3016 = vmatpush.msra.mxu0 0.0
  %3017 = vmatpush.msra.mxu0 0.0
  %3018 = vmatpush.msra.mxu0 0.0
  %3019 = vmatpush.msra.mxu0 0.0
  %3020 = vmatpush.msra.mxu0 %v2982
  %3021 = vmatpush.msra.mxu0 %v2978
  %3022 = vmatpush.msra.mxu0 %v2974
  %3023 = vmatpush.msra.mxu0 %v2970
  %3024 = vmatmul.f32.gmra.mxu0 %v2986
  %v3025 = vpop.f32.mrf.mxu0
  %v3026 = vadd.f32 0.0, %v3025
  %3027 = vdwg.mxu0
  %3028 = vmatpush.msra.mxu0 0.0
  %3029 = vmatpush.msra.mxu0 0.0
  %3030 = vmatpush.msra.mxu0 0.0
  %3031 = vmatpush.msra.mxu0 0.0
  %3032 = vmatpush.msra.mxu0 0.0
  %3033 = vmatpush.msra.mxu0 0.0
  %3034 = vmatpush.msra.mxu0 0.0
  %3035 = vmatpush.msra.mxu0 0.0
  %3036 = vmatpush.msra.mxu0 0.0
  %3037 = vmatpush.msra.mxu0 0.0
  %3038 = vmatpush.msra.mxu0 0.0
  %3039 = vmatpush.msra.mxu0 0.0
  %3040 = vmatpush.msra.mxu0 %v2983
  %3041 = vmatpush.msra.mxu0 %v2979
  %3042 = vmatpush.msra.mxu0 %v2975
  %3043 = vmatpush.msra.mxu0 %v2971
  %3044 = vmatmul.f32.gmra.mxu0 %v2986
  %v3045 = vpop.f32.mrf.mxu0
  %v3046 = vadd.f32 0.0, %v3045
  %3047 = vdwg.mxu0
  %3048 = vmatpush.msra.mxu0 0.0
  %3049 = vmatpush.msra.mxu0 0.0
  %3050 = vmatpush.msra.mxu0 0.0
  %3051 = vmatpush.msra.mxu0 0.0
  %3052 = vmatpush.msra.mxu0 0.0
  %3053 = vmatpush.msra.mxu0 0.0
  %3054 = vmatpush.msra.mxu0 0.0
  %3055 = vmatpush.msra.mxu0 0.0
  %3056 = vmatpush.msra.mxu0 0.0
  %3057 = vmatpush.msra.mxu0 0.0
  %3058 = vmatpush.msra.mxu0 0.0
  %3059 = vmatpush.msra.mxu0 0.0
  %3060 = vmatpush.msra.mxu0 %v2984
  %3061 = vmatpush.msra.mxu0 %v2980
  %3062 = vmatpush.msra.mxu0 %v2976
  %3063 = vmatpush.msra.mxu0 %v2972
  %3064 = vmatmul.f32.gmra.mxu0 %v2986
  %v3065 = vpop.f32.mrf.mxu0
  %v3066 = vadd.f32 0.0, %v3065
  %3067 = vdwg.mxu0
  %v3068 = vadd.f32 %v2905, %v3006
  %v3069 = vadd.f32 %v2906, %v3026
  %v3070 = vadd.f32 %v2907, %v3046
  %v3071 = vadd.f32 %v2908, %v3066
  %s3072 = scalar_lea.vmem %s8, 48
  %v3073 = vld [vmem:[%s3072] sm:$0xff]
  %3074 = vrot.lane.b32.xlu0 %v2162, 113
  %v3075 = vpop.permute.xlu0 %3074
  %3076 = vrot.lane.b32.xlu0 %v2166, 113
  %v3077 = vpop.permute.xlu0 %3076
  %3078 = vrot.lane.b32.xlu0 %v2170, 113
  %v3079 = vpop.permute.xlu0 %3078
  %3080 = vrot.lane.b32.xlu0 %v2174, 113
  %v3081 = vpop.permute.xlu0 %3080
  %3082 = vrot.lane.b32.xlu0 %v2163, 113
  %v3083 = vpop.permute.xlu0 %3082
  %3084 = vrot.lane.b32.xlu0 %v2167, 113
  %v3085 = vpop.permute.xlu0 %3084
  %3086 = vrot.lane.b32.xlu0 %v2171, 113
  %v3087 = vpop.permute.xlu0 %3086
  %3088 = vrot.lane.b32.xlu0 %v2175, 113
  %v3089 = vpop.permute.xlu0 %3088
  %3090 = vrot.lane.b32.xlu0 %v2164, 113
  %v3091 = vpop.permute.xlu0 %3090
  %3092 = vrot.lane.b32.xlu0 %v2168, 113
  %v3093 = vpop.permute.xlu0 %3092
  %3094 = vrot.lane.b32.xlu0 %v2172, 113
  %v3095 = vpop.permute.xlu0 %3094
  %3096 = vrot.lane.b32.xlu0 %v2176, 113
  %v3097 = vpop.permute.xlu0 %3096
  %3098 = vrot.lane.b32.xlu0 %v2165, 113
  %v3099 = vpop.permute.xlu0 %3098
  %3100 = vrot.lane.b32.xlu0 %v2169, 113
  %v3101 = vpop.permute.xlu0 %3100
  %3102 = vrot.lane.b32.xlu0 %v2173, 113
  %v3103 = vpop.permute.xlu0 %3102
  %3104 = vrot.lane.b32.xlu0 %v2177, 113
  %v3105 = vpop.permute.xlu0 %3104
  %v3106 = vsel %vm281, %v3091, %v3099
  %v3107 = vsel %vm281, %v3093, %v3101
  %v3108 = vsel %vm281, %v3095, %v3103
  %v3109 = vsel %vm281, %v3097, %v3105
  %v3110 = vsel %vm281, %v3083, %v3091
  %v3111 = vsel %vm281, %v3085, %v3093
  %v3112 = vsel %vm281, %v3087, %v3095
  %v3113 = vsel %vm281, %v3089, %v3097
  %v3114 = vsel %vm281, %v3075, %v3083
  %v3115 = vsel %vm281, %v3077, %v3085
  %v3116 = vsel %vm281, %v3079, %v3087
  %v3117 = vsel %vm281, %v3081, %v3089
  %v3118 = vsel %vm281, %v3099, %v3075
  %v3119 = vsel %vm281, %v3101, %v3077
  %v3120 = vsel %vm281, %v3103, %v3079
  %v3121 = vsel %vm281, %v3105, %v3081
  %v3122 = vld [vmem:[%s286] ss:$8 sm:$0xf]
  %v3124 = vperm.slane %v3122, 0
  %v3125 = vperm.slane %v3122, 1
  %v3126 = vperm.slane %v3122, 2
  %v3127 = vperm.slane %v3122, 3
  %v3132 = vmul.f32 %v3114, %v3124
  %v3133 = vmul.f32 %v3110, %v3125
  %v3134 = vmul.f32 %v3106, %v3126
  %v3135 = vmul.f32 %v3118, %v3127
  %v3136 = vmul.f32 %v3115, %v3124
  %v3137 = vmul.f32 %v3111, %v3125
  %v3138 = vmul.f32 %v3107, %v3126
  %v3139 = vmul.f32 %v3119, %v3127
  %v3140 = vmul.f32 %v3116, %v3124
  %v3141 = vmul.f32 %v3112, %v3125
  %v3142 = vmul.f32 %v3108, %v3126
  %v3143 = vmul.f32 %v3120, %v3127
  %v3144 = vmul.f32 %v3117, %v3124
  %v3145 = vmul.f32 %v3113, %v3125
  %v3146 = vmul.f32 %v3109, %v3126
  %v3147 = vmul.f32 %v3121, %v3127
  %v3149 = vsel %vm1712, %v3073, 0
  %3151 = vmatpush.msra.mxu0 0.0
  %3152 = vmatpush.msra.mxu0 0.0
  %3153 = vmatpush.msra.mxu0 0.0
  %3154 = vmatpush.msra.mxu0 0.0
  %3155 = vmatpush.msra.mxu0 0.0
  %3156 = vmatpush.msra.mxu0 0.0
  %3157 = vmatpush.msra.mxu0 0.0
  %3158 = vmatpush.msra.mxu0 0.0
  %3159 = vmatpush.msra.mxu0 0.0
  %3160 = vmatpush.msra.mxu0 0.0
  %3161 = vmatpush.msra.mxu0 0.0
  %3162 = vmatpush.msra.mxu0 0.0
  %3163 = vmatpush.msra.mxu0 %v3144
  %3164 = vmatpush.msra.mxu0 %v3140
  %3165 = vmatpush.msra.mxu0 %v3136
  %3166 = vmatpush.msra.mxu0 %v3132
  %3167 = vmatmul.f32.gmra.mxu0 %v3149
  %v3168 = vpop.f32.mrf.mxu0
  %v3169 = vadd.f32 0.0, %v3168
  %3170 = vdwg.mxu0
  %3171 = vmatpush.msra.mxu0 0.0
  %3172 = vmatpush.msra.mxu0 0.0
  %3173 = vmatpush.msra.mxu0 0.0
  %3174 = vmatpush.msra.mxu0 0.0
  %3175 = vmatpush.msra.mxu0 0.0
  %3176 = vmatpush.msra.mxu0 0.0
  %3177 = vmatpush.msra.mxu0 0.0
  %3178 = vmatpush.msra.mxu0 0.0
  %3179 = vmatpush.msra.mxu0 0.0
  %3180 = vmatpush.msra.mxu0 0.0
  %3181 = vmatpush.msra.mxu0 0.0
  %3182 = vmatpush.msra.mxu0 0.0
  %3183 = vmatpush.msra.mxu0 %v3145
  %3184 = vmatpush.msra.mxu0 %v3141
  %3185 = vmatpush.msra.mxu0 %v3137
  %3186 = vmatpush.msra.mxu0 %v3133
  %3187 = vmatmul.f32.gmra.mxu0 %v3149
  %v3188 = vpop.f32.mrf.mxu0
  %v3189 = vadd.f32 0.0, %v3188
  %3190 = vdwg.mxu0
  %3191 = vmatpush.msra.mxu0 0.0
  %3192 = vmatpush.msra.mxu0 0.0
  %3193 = vmatpush.msra.mxu0 0.0
  %3194 = vmatpush.msra.mxu0 0.0
  %3195 = vmatpush.msra.mxu0 0.0
  %3196 = vmatpush.msra.mxu0 0.0
  %3197 = vmatpush.msra.mxu0 0.0
  %3198 = vmatpush.msra.mxu0 0.0
  %3199 = vmatpush.msra.mxu0 0.0
  %3200 = vmatpush.msra.mxu0 0.0
  %3201 = vmatpush.msra.mxu0 0.0
  %3202 = vmatpush.msra.mxu0 0.0
  %3203 = vmatpush.msra.mxu0 %v3146
  %3204 = vmatpush.msra.mxu0 %v3142
  %3205 = vmatpush.msra.mxu0 %v3138
  %3206 = vmatpush.msra.mxu0 %v3134
  %3207 = vmatmul.f32.gmra.mxu0 %v3149
  %v3208 = vpop.f32.mrf.mxu0
  %v3209 = vadd.f32 0.0, %v3208
  %3210 = vdwg.mxu0
  %3211 = vmatpush.msra.mxu0 0.0
  %3212 = vmatpush.msra.mxu0 0.0
  %3213 = vmatpush.msra.mxu0 0.0
  %3214 = vmatpush.msra.mxu0 0.0
  %3215 = vmatpush.msra.mxu0 0.0
  %3216 = vmatpush.msra.mxu0 0.0
  %3217 = vmatpush.msra.mxu0 0.0
  %3218 = vmatpush.msra.mxu0 0.0
  %3219 = vmatpush.msra.mxu0 0.0
  %3220 = vmatpush.msra.mxu0 0.0
  %3221 = vmatpush.msra.mxu0 0.0
  %3222 = vmatpush.msra.mxu0 0.0
  %3223 = vmatpush.msra.mxu0 %v3147
  %3224 = vmatpush.msra.mxu0 %v3143
  %3225 = vmatpush.msra.mxu0 %v3139
  %3226 = vmatpush.msra.mxu0 %v3135
  %3227 = vmatmul.f32.gmra.mxu0 %v3149
  %v3228 = vpop.f32.mrf.mxu0
  %v3229 = vadd.f32 0.0, %v3228
  %3230 = vdwg.mxu0
  %v3231 = vadd.f32 %v3068, %v3169
  %v3232 = vadd.f32 %v3069, %v3189
  %v3233 = vadd.f32 %v3070, %v3209
  %v3234 = vadd.f32 %v3071, %v3229
  %s3235 = scalar_lea.vmem %s8, 56
  %v3236 = vld [vmem:[%s3235] sm:$0xff]
  %3237 = vrot.lane.b32.xlu0 %v2162, 112
  %v3238 = vpop.permute.xlu0 %3237
  %3239 = vrot.lane.b32.xlu0 %v2166, 112
  %v3240 = vpop.permute.xlu0 %3239
  %3241 = vrot.lane.b32.xlu0 %v2170, 112
  %v3242 = vpop.permute.xlu0 %3241
  %3243 = vrot.lane.b32.xlu0 %v2174, 112
  %v3244 = vpop.permute.xlu0 %3243
  %3245 = vrot.lane.b32.xlu0 %v2163, 112
  %v3246 = vpop.permute.xlu0 %3245
  %3247 = vrot.lane.b32.xlu0 %v2167, 112
  %v3248 = vpop.permute.xlu0 %3247
  %3249 = vrot.lane.b32.xlu0 %v2171, 112
  %v3250 = vpop.permute.xlu0 %3249
  %3251 = vrot.lane.b32.xlu0 %v2175, 112
  %v3252 = vpop.permute.xlu0 %3251
  %3253 = vrot.lane.b32.xlu0 %v2164, 112
  %v3254 = vpop.permute.xlu0 %3253
  %3255 = vrot.lane.b32.xlu0 %v2168, 112
  %v3256 = vpop.permute.xlu0 %3255
  %3257 = vrot.lane.b32.xlu0 %v2172, 112
  %v3258 = vpop.permute.xlu0 %3257
  %3259 = vrot.lane.b32.xlu0 %v2176, 112
  %v3260 = vpop.permute.xlu0 %3259
  %3261 = vrot.lane.b32.xlu0 %v2165, 112
  %v3262 = vpop.permute.xlu0 %3261
  %3263 = vrot.lane.b32.xlu0 %v2169, 112
  %v3264 = vpop.permute.xlu0 %3263
  %3265 = vrot.lane.b32.xlu0 %v2173, 112
  %v3266 = vpop.permute.xlu0 %3265
  %3267 = vrot.lane.b32.xlu0 %v2177, 112
  %v3268 = vpop.permute.xlu0 %3267
  %v3269 = vsel %vm323, %v3254, %v3262
  %v3270 = vsel %vm323, %v3256, %v3264
  %v3271 = vsel %vm323, %v3258, %v3266
  %v3272 = vsel %vm323, %v3260, %v3268
  %v3273 = vsel %vm323, %v3246, %v3254
  %v3274 = vsel %vm323, %v3248, %v3256
  %v3275 = vsel %vm323, %v3250, %v3258
  %v3276 = vsel %vm323, %v3252, %v3260
  %v3277 = vsel %vm323, %v3238, %v3246
  %v3278 = vsel %vm323, %v3240, %v3248
  %v3279 = vsel %vm323, %v3242, %v3250
  %v3280 = vsel %vm323, %v3244, %v3252
  %v3281 = vsel %vm323, %v3262, %v3238
  %v3282 = vsel %vm323, %v3264, %v3240
  %v3283 = vsel %vm323, %v3266, %v3242
  %v3284 = vsel %vm323, %v3268, %v3244
  %v3285 = vld [vmem:[%s328] ss:$8 sm:$0xf]
  %v3287 = vperm.slane %v3285, 0
  %v3288 = vperm.slane %v3285, 1
  %v3289 = vperm.slane %v3285, 2
  %v3290 = vperm.slane %v3285, 3
  %v3295 = vmul.f32 %v3277, %v3287
  %v3296 = vmul.f32 %v3273, %v3288
  %v3297 = vmul.f32 %v3269, %v3289
  %v3298 = vmul.f32 %v3281, %v3290
  %v3299 = vmul.f32 %v3278, %v3287
  %v3300 = vmul.f32 %v3274, %v3288
  %v3301 = vmul.f32 %v3270, %v3289
  %v3302 = vmul.f32 %v3282, %v3290
  %v3303 = vmul.f32 %v3279, %v3287
  %v3304 = vmul.f32 %v3275, %v3288
  %v3305 = vmul.f32 %v3271, %v3289
  %v3306 = vmul.f32 %v3283, %v3290
  %v3307 = vmul.f32 %v3280, %v3287
  %v3308 = vmul.f32 %v3276, %v3288
  %v3309 = vmul.f32 %v3272, %v3289
  %v3310 = vmul.f32 %v3284, %v3290
  %v3312 = vsel %vm1712, %v3236, 0
  %3314 = vmatpush.msra.mxu0 0.0
  %3315 = vmatpush.msra.mxu0 0.0
  %3316 = vmatpush.msra.mxu0 0.0
  %3317 = vmatpush.msra.mxu0 0.0
  %3318 = vmatpush.msra.mxu0 0.0
  %3319 = vmatpush.msra.mxu0 0.0
  %3320 = vmatpush.msra.mxu0 0.0
  %3321 = vmatpush.msra.mxu0 0.0
  %3322 = vmatpush.msra.mxu0 0.0
  %3323 = vmatpush.msra.mxu0 0.0
  %3324 = vmatpush.msra.mxu0 0.0
  %3325 = vmatpush.msra.mxu0 0.0
  %3326 = vmatpush.msra.mxu0 %v3307
  %3327 = vmatpush.msra.mxu0 %v3303
  %3328 = vmatpush.msra.mxu0 %v3299
  %3329 = vmatpush.msra.mxu0 %v3295
  %3330 = vmatmul.f32.gmra.mxu0 %v3312
  %v3331 = vpop.f32.mrf.mxu0
  %v3332 = vadd.f32 0.0, %v3331
  %3333 = vdwg.mxu0
  %3334 = vmatpush.msra.mxu0 0.0
  %3335 = vmatpush.msra.mxu0 0.0
  %3336 = vmatpush.msra.mxu0 0.0
  %3337 = vmatpush.msra.mxu0 0.0
  %3338 = vmatpush.msra.mxu0 0.0
  %3339 = vmatpush.msra.mxu0 0.0
  %3340 = vmatpush.msra.mxu0 0.0
  %3341 = vmatpush.msra.mxu0 0.0
  %3342 = vmatpush.msra.mxu0 0.0
  %3343 = vmatpush.msra.mxu0 0.0
  %3344 = vmatpush.msra.mxu0 0.0
  %3345 = vmatpush.msra.mxu0 0.0
  %3346 = vmatpush.msra.mxu0 %v3308
  %3347 = vmatpush.msra.mxu0 %v3304
  %3348 = vmatpush.msra.mxu0 %v3300
  %3349 = vmatpush.msra.mxu0 %v3296
  %3350 = vmatmul.f32.gmra.mxu0 %v3312
  %v3351 = vpop.f32.mrf.mxu0
  %v3352 = vadd.f32 0.0, %v3351
  %3353 = vdwg.mxu0
  %3354 = vmatpush.msra.mxu0 0.0
  %3355 = vmatpush.msra.mxu0 0.0
  %3356 = vmatpush.msra.mxu0 0.0
  %3357 = vmatpush.msra.mxu0 0.0
  %3358 = vmatpush.msra.mxu0 0.0
  %3359 = vmatpush.msra.mxu0 0.0
  %3360 = vmatpush.msra.mxu0 0.0
  %3361 = vmatpush.msra.mxu0 0.0
  %3362 = vmatpush.msra.mxu0 0.0
  %3363 = vmatpush.msra.mxu0 0.0
  %3364 = vmatpush.msra.mxu0 0.0
  %3365 = vmatpush.msra.mxu0 0.0
  %3366 = vmatpush.msra.mxu0 %v3309
  %3367 = vmatpush.msra.mxu0 %v3305
  %3368 = vmatpush.msra.mxu0 %v3301
  %3369 = vmatpush.msra.mxu0 %v3297
  %3370 = vmatmul.f32.gmra.mxu0 %v3312
  %v3371 = vpop.f32.mrf.mxu0
  %v3372 = vadd.f32 0.0, %v3371
  %3373 = vdwg.mxu0
  %3374 = vmatpush.msra.mxu0 0.0
  %3375 = vmatpush.msra.mxu0 0.0
  %3376 = vmatpush.msra.mxu0 0.0
  %3377 = vmatpush.msra.mxu0 0.0
  %3378 = vmatpush.msra.mxu0 0.0
  %3379 = vmatpush.msra.mxu0 0.0
  %3380 = vmatpush.msra.mxu0 0.0
  %3381 = vmatpush.msra.mxu0 0.0
  %3382 = vmatpush.msra.mxu0 0.0
  %3383 = vmatpush.msra.mxu0 0.0
  %3384 = vmatpush.msra.mxu0 0.0
  %3385 = vmatpush.msra.mxu0 0.0
  %3386 = vmatpush.msra.mxu0 %v3310
  %3387 = vmatpush.msra.mxu0 %v3306
  %3388 = vmatpush.msra.mxu0 %v3302
  %3389 = vmatpush.msra.mxu0 %v3298
  %3390 = vmatmul.f32.gmra.mxu0 %v3312
  %v3391 = vpop.f32.mrf.mxu0
  %v3392 = vadd.f32 0.0, %v3391
  %3393 = vdwg.mxu0
  %v3394 = vadd.f32 %v3231, %v3332
  %v3395 = vadd.f32 %v3232, %v3352
  %v3396 = vadd.f32 %v3233, %v3372
  %v3397 = vadd.f32 %v3234, %v3392
  %s3398 = scalar_lea.vmem %s8, 64
  %v3399 = vld [vmem:[%s3398] sm:$0xff]
  %3400 = vrot.lane.b32.xlu0 %v2162, 111
  %v3401 = vpop.permute.xlu0 %3400
  %3402 = vrot.lane.b32.xlu0 %v2166, 111
  %v3403 = vpop.permute.xlu0 %3402
  %3404 = vrot.lane.b32.xlu0 %v2170, 111
  %v3405 = vpop.permute.xlu0 %3404
  %3406 = vrot.lane.b32.xlu0 %v2174, 111
  %v3407 = vpop.permute.xlu0 %3406
  %3408 = vrot.lane.b32.xlu0 %v2163, 111
  %v3409 = vpop.permute.xlu0 %3408
  %3410 = vrot.lane.b32.xlu0 %v2167, 111
  %v3411 = vpop.permute.xlu0 %3410
  %3412 = vrot.lane.b32.xlu0 %v2171, 111
  %v3413 = vpop.permute.xlu0 %3412
  %3414 = vrot.lane.b32.xlu0 %v2175, 111
  %v3415 = vpop.permute.xlu0 %3414
  %3416 = vrot.lane.b32.xlu0 %v2164, 111
  %v3417 = vpop.permute.xlu0 %3416
  %3418 = vrot.lane.b32.xlu0 %v2168, 111
  %v3419 = vpop.permute.xlu0 %3418
  %3420 = vrot.lane.b32.xlu0 %v2172, 111
  %v3421 = vpop.permute.xlu0 %3420
  %3422 = vrot.lane.b32.xlu0 %v2176, 111
  %v3423 = vpop.permute.xlu0 %3422
  %3424 = vrot.lane.b32.xlu0 %v2165, 111
  %v3425 = vpop.permute.xlu0 %3424
  %3426 = vrot.lane.b32.xlu0 %v2169, 111
  %v3427 = vpop.permute.xlu0 %3426
  %3428 = vrot.lane.b32.xlu0 %v2173, 111
  %v3429 = vpop.permute.xlu0 %3428
  %3430 = vrot.lane.b32.xlu0 %v2177, 111
  %v3431 = vpop.permute.xlu0 %3430
  %v3432 = vsel %vm365, %v3417, %v3425
  %v3433 = vsel %vm365, %v3419, %v3427
  %v3434 = vsel %vm365, %v3421, %v3429
  %v3435 = vsel %vm365, %v3423, %v3431
  %v3436 = vsel %vm365, %v3409, %v3417
  %v3437 = vsel %vm365, %v3411, %v3419
  %v3438 = vsel %vm365, %v3413, %v3421
  %v3439 = vsel %vm365, %v3415, %v3423
  %v3440 = vsel %vm365, %v3401, %v3409
  %v3441 = vsel %vm365, %v3403, %v3411
  %v3442 = vsel %vm365, %v3405, %v3413
  %v3443 = vsel %vm365, %v3407, %v3415
  %v3444 = vsel %vm365, %v3425, %v3401
  %v3445 = vsel %vm365, %v3427, %v3403
  %v3446 = vsel %vm365, %v3429, %v3405
  %v3447 = vsel %vm365, %v3431, %v3407
  %v3448 = vld [vmem:[%s370] ss:$8 sm:$0xf]
  %v3450 = vperm.slane %v3448, 0
  %v3451 = vperm.slane %v3448, 1
  %v3452 = vperm.slane %v3448, 2
  %v3453 = vperm.slane %v3448, 3
  %v3458 = vmul.f32 %v3440, %v3450
  %v3459 = vmul.f32 %v3436, %v3451
  %v3460 = vmul.f32 %v3432, %v3452
  %v3461 = vmul.f32 %v3444, %v3453
  %v3462 = vmul.f32 %v3441, %v3450
  %v3463 = vmul.f32 %v3437, %v3451
  %v3464 = vmul.f32 %v3433, %v3452
  %v3465 = vmul.f32 %v3445, %v3453
  %v3466 = vmul.f32 %v3442, %v3450
  %v3467 = vmul.f32 %v3438, %v3451
  %v3468 = vmul.f32 %v3434, %v3452
  %v3469 = vmul.f32 %v3446, %v3453
  %v3470 = vmul.f32 %v3443, %v3450
  %v3471 = vmul.f32 %v3439, %v3451
  %v3472 = vmul.f32 %v3435, %v3452
  %v3473 = vmul.f32 %v3447, %v3453
  %v3475 = vsel %vm1712, %v3399, 0
  %3477 = vmatpush.msra.mxu0 0.0
  %3478 = vmatpush.msra.mxu0 0.0
  %3479 = vmatpush.msra.mxu0 0.0
  %3480 = vmatpush.msra.mxu0 0.0
  %3481 = vmatpush.msra.mxu0 0.0
  %3482 = vmatpush.msra.mxu0 0.0
  %3483 = vmatpush.msra.mxu0 0.0
  %3484 = vmatpush.msra.mxu0 0.0
  %3485 = vmatpush.msra.mxu0 0.0
  %3486 = vmatpush.msra.mxu0 0.0
  %3487 = vmatpush.msra.mxu0 0.0
  %3488 = vmatpush.msra.mxu0 0.0
  %3489 = vmatpush.msra.mxu0 %v3470
  %3490 = vmatpush.msra.mxu0 %v3466
  %3491 = vmatpush.msra.mxu0 %v3462
  %3492 = vmatpush.msra.mxu0 %v3458
  %3493 = vmatmul.f32.gmra.mxu0 %v3475
  %v3494 = vpop.f32.mrf.mxu0
  %v3495 = vadd.f32 0.0, %v3494
  %3496 = vdwg.mxu0
  %3497 = vmatpush.msra.mxu0 0.0
  %3498 = vmatpush.msra.mxu0 0.0
  %3499 = vmatpush.msra.mxu0 0.0
  %3500 = vmatpush.msra.mxu0 0.0
  %3501 = vmatpush.msra.mxu0 0.0
  %3502 = vmatpush.msra.mxu0 0.0
  %3503 = vmatpush.msra.mxu0 0.0
  %3504 = vmatpush.msra.mxu0 0.0
  %3505 = vmatpush.msra.mxu0 0.0
  %3506 = vmatpush.msra.mxu0 0.0
  %3507 = vmatpush.msra.mxu0 0.0
  %3508 = vmatpush.msra.mxu0 0.0
  %3509 = vmatpush.msra.mxu0 %v3471
  %3510 = vmatpush.msra.mxu0 %v3467
  %3511 = vmatpush.msra.mxu0 %v3463
  %3512 = vmatpush.msra.mxu0 %v3459
  %3513 = vmatmul.f32.gmra.mxu0 %v3475
  %v3514 = vpop.f32.mrf.mxu0
  %v3515 = vadd.f32 0.0, %v3514
  %3516 = vdwg.mxu0
  %3517 = vmatpush.msra.mxu0 0.0
  %3518 = vmatpush.msra.mxu0 0.0
  %3519 = vmatpush.msra.mxu0 0.0
  %3520 = vmatpush.msra.mxu0 0.0
  %3521 = vmatpush.msra.mxu0 0.0
  %3522 = vmatpush.msra.mxu0 0.0
  %3523 = vmatpush.msra.mxu0 0.0
  %3524 = vmatpush.msra.mxu0 0.0
  %3525 = vmatpush.msra.mxu0 0.0
  %3526 = vmatpush.msra.mxu0 0.0
  %3527 = vmatpush.msra.mxu0 0.0
  %3528 = vmatpush.msra.mxu0 0.0
  %3529 = vmatpush.msra.mxu0 %v3472
  %3530 = vmatpush.msra.mxu0 %v3468
  %3531 = vmatpush.msra.mxu0 %v3464
  %3532 = vmatpush.msra.mxu0 %v3460
  %3533 = vmatmul.f32.gmra.mxu0 %v3475
  %v3534 = vpop.f32.mrf.mxu0
  %v3535 = vadd.f32 0.0, %v3534
  %3536 = vdwg.mxu0
  %3537 = vmatpush.msra.mxu0 0.0
  %3538 = vmatpush.msra.mxu0 0.0
  %3539 = vmatpush.msra.mxu0 0.0
  %3540 = vmatpush.msra.mxu0 0.0
  %3541 = vmatpush.msra.mxu0 0.0
  %3542 = vmatpush.msra.mxu0 0.0
  %3543 = vmatpush.msra.mxu0 0.0
  %3544 = vmatpush.msra.mxu0 0.0
  %3545 = vmatpush.msra.mxu0 0.0
  %3546 = vmatpush.msra.mxu0 0.0
  %3547 = vmatpush.msra.mxu0 0.0
  %3548 = vmatpush.msra.mxu0 0.0
  %3549 = vmatpush.msra.mxu0 %v3473
  %3550 = vmatpush.msra.mxu0 %v3469
  %3551 = vmatpush.msra.mxu0 %v3465
  %3552 = vmatpush.msra.mxu0 %v3461
  %3553 = vmatmul.f32.gmra.mxu0 %v3475
  %v3554 = vpop.f32.mrf.mxu0
  %v3555 = vadd.f32 0.0, %v3554
  %3556 = vdwg.mxu0
  %v3557 = vadd.f32 %v3394, %v3495
  %v3558 = vadd.f32 %v3395, %v3515
  %v3559 = vadd.f32 %v3396, %v3535
  %v3560 = vadd.f32 %v3397, %v3555
  %v3561 = vld [vmem:[#allocation5] sm:$0x1]
  %3563 = vset.pattern.permute.xlu0 0
  %3564 = vperm.xlu0 %3563, %v3561
  %v3565 = vpop.permute.xlu0 %3564
  %v3567 = vperm.slane %v3565, 0
  %v3568 = vadd.f32 %v3557, %v3567
  %v3569 = vadd.f32 %v3558, %v3567
  %v3570 = vadd.f32 %v3559, %v3567
  %v3571 = vadd.f32 %v3560, %v3567
  %v3576 = vrot.slane %v3569, 7
  %v3577 = vrot.slane %v3570, 6
  %v3578 = vrot.slane %v3571, 5
  %v3579 = vsel %vm89, %v3568, %v3576
  %v3580 = vsel %vm91, %v3577, %v3578
  %v3581 = vsel %vm93, %v3579, %v3580
  %3583 = vst.msk [vmem:[%s11] sm:$0xf] %vm99, %v3581
  %v3584 = vadd.f32 %v43, %v3581
  %3585 = vst.msk [vmem:[%s10] sm:$0xf] %vm99, %v3584
  // Predicated region
  $region42: #{primal_net_forward.1} parent=0 // pred_check
    _
  $region43: #{primal_net_forward.1} parent=0 // pred_check_branch
    %3587 = sbr.rel (0) target = $region45
  $region44: #{primal_net_forward.1} parent=0 // pred_region
    _
  $region45: #{primal_net_forward.1} parent=0 // pred_fallthru
    _
  // Predicated region
  $region46: #{primal_net_forward.1} parent=0 // pred_check
    _
  $region47: #{primal_net_forward.1} parent=0 // pred_check_branch
    %3589 = sbr.rel (0) target = $region49
  $region48: #{primal_net_forward.1} parent=0 // pred_region
    _
  $region49: #{primal_net_forward.1} parent=0 // pred_fallthru
    _
  // Predicated region
  $region50: #{primal_net_forward.1} parent=0 // pred_check
    _
  $region51: #{primal_net_forward.1} parent=0 // pred_check_branch
    %3591 = sbr.rel (0) target = $region53
  $region52: #{primal_net_forward.1} parent=0 // pred_region
    _
  $region53: #{primal_net_forward.1} parent=0 // pred_fallthru
    _
  // Predicated region
  $region54: #{primal_net_forward.1} parent=0 // pred_check
    _
  $region55: #{primal_net_forward.1} parent=0 // pred_check_branch
    %3593 = sbr.rel (0) target = $region57
  $region56: #{primal_net_forward.1} parent=0 // pred_region
    _
  $region57: #{primal_net_forward.1} parent=0 // pred_fallthru
    _

</llo_original>
